<compile_context>
chip_gen: v7x
topology: tpu7x:2x2x1
jax: 0.10.0
libtpu: 0.0.40
codegen_flags: <defaults>
</compile_context>

<pallas_src>
import jax
import jax.numpy as jnp
from jax import lax
from jax.experimental import pallas as pl
from jax.experimental.pallas import tpu as pltpu


# ---------------------------------------------------------------------------
# Pallas kernel: tiled 1x1 conv (per-pixel matmul)
# ---------------------------------------------------------------------------
def _proj_kernel(x_ref, w_ref, b_ref, o_ref):
    o_ref[...] = (jnp.dot(x_ref[...], w_ref[...],
                          preferred_element_type=jnp.float32)
                  + b_ref[...]).astype(o_ref.dtype)


def conv1x1(x, w, b, *, tile_m=1024, out_dtype=None):
    """x: (M, Cin), w: (Cin, Cout), b: (Cout,) -> (M, Cout). Tiled over M."""
    M, Cin = x.shape
    Cout = w.shape[1]
    out_dtype = out_dtype if out_dtype is not None else x.dtype
    tm = M if M <= tile_m else tile_m
    grid = (pl.cdiv(M, tm),)
    isz = jnp.dtype(x.dtype).itemsize
    cost = pl.CostEstimate(
        flops=int(2 * M * Cin * Cout),
        transcendentals=0,
        bytes_accessed=int((M * Cin + Cin * Cout + Cout) * isz
                           + M * Cout * jnp.dtype(out_dtype).itemsize))
    return pl.pallas_call(
        _proj_kernel,
        out_shape=jax.ShapeDtypeStruct((M, Cout), out_dtype),
        grid=grid,
        in_specs=[pl.BlockSpec((tm, Cin), lambda i: (i, 0)),
                  pl.BlockSpec((Cin, Cout), lambda i: (0, 0)),   # VMEM-resident
                  pl.BlockSpec((1, Cout), lambda i: (0, 0))],
        out_specs=pl.BlockSpec((tm, Cout), lambda i: (i, 0)),
        compiler_params=pltpu.CompilerParams(
            dimension_semantics=("parallel",),
            vmem_limit_bytes=64 * 1024 * 1024),
        cost_estimate=cost,
    )(x, w, b.reshape(1, Cout))


# ---------------------------------------------------------------------------
# Pallas kernel: multi-view attention + fused f_out / fuse_layer / residual
# ---------------------------------------------------------------------------
def _make_mv_attn_kernel(sm_scale, n_adj, emit_map, approx_recip):
    def kernel(tbl_ref, q_ref, k_ref, v_ref, ref_ref,
               wo_ref, bo_ref, wfr_ref, wfm_ref, bf_ref, *outs):
        out_ref = outs[0]
        attn_ref = outs[1] if emit_map else None

        v_idx = pl.program_id(1)                 # which ref-view row of the table
        q = q_ref[...]                           # (tq, kc), compute dtype
        cdt = q.dtype
        tq = q.shape[0]
        kc = v_ref.shape[-1]

        acc = jnp.zeros((tq, kc), jnp.float32)
        for j in range(n_adj):                   # unrolled, n_adj == 2
            a_id = tbl_ref[v_idx, 1 + j]         # adjacent view id (SMEM scalar)
            k = k_ref[a_id]                      # (HW, kc)  dynamic leading index
            vv = v_ref[a_id]                     # (HW, kc)

            sim = lax.dot_general(q, k, (((1,), (1,)), ((), ())),
                                  preferred_element_type=jnp.float32) * sm_scale
            sim = sim - jnp.max(sim, axis=-1, keepdims=True)
            p = jnp.exp(sim)
            p = p * pl.reciprocal(jnp.sum(p, axis=-1, keepdims=True),
                                  approx=approx_recip)
            if attn_ref is not None:
                attn_ref[j] = p.astype(attn_ref.dtype)

            acc = acc + jnp.dot(p.astype(cdt), vv,
                                preferred_element_type=jnp.float32)

        # matching = (sum_a attn_a @ v_a) @ w_out + n_adj * b_out   (f_out fused)
        matching = (jnp.dot(acc.astype(cdt), wo_ref[...],
                            preferred_element_type=jnp.float32)
                    + n_adj * bo_ref[...].astype(jnp.float32))

        # fuse_layer + residual fused:
        #   out = ref + cat(ref, matching) @ w_fuse + b_fuse
        #       = ref + ref @ w_fuse[:C] + matching @ w_fuse[C:] + b_fuse
        ref = ref_ref[...].astype(jnp.float32)   # (tq, C)
        fused = (ref
                 + jnp.dot(ref.astype(cdt), wfr_ref[...],
                           preferred_element_type=jnp.float32)
                 + jnp.dot(matching.astype(cdt), wfm_ref[...],
                           preferred_element_type=jnp.float32)
                 + bf_ref[...].astype(jnp.float32))
        out_ref[...] = fused.astype(out_ref.dtype)

    return kernel


def _pick_query_tile(hw, cap=512):
    if hw <= cap:
        return hw
    for t in range(cap, 0, -8):          # largest multiple of 8 that divides HW
        if hw % t == 0:
            return t
    # TODO(synk): add a padded / partial-tile path for awkward H*W instead of
    #             falling back to the full query dim.
    return hw


def multi_view_attention(view_tbl, keys, values, xf, w_out, b_out,
                         w_fuse_ref, w_fuse_match, b_fuse, *,
                         sm_scale, emit_map, out_dtype, approx_recip):
    """view_tbl: (num_v, 1+n_adj) int32  [ref_id, adj0, adj1] per processed view.
       keys/values: (B, V, HW, kc) (compute dtype); xf: (B, V, HW, C) f32.
       Returns out: (B, num_v, HW, C); if emit_map also attn: (B, n_adj, HW, HW)."""
    B, V, HW, kc = keys.shape
    C = xf.shape[-1]
    out_ch = w_out.shape[1]
    num_v, width = view_tbl.shape
    n_adj = width - 1
    tq = _pick_query_tile(HW)
    nq = HW // tq
    grid = (B, num_v, nq)

    # q and ref views are selected in the index_map via the prefetched table;
    # K/V blocks hold ALL views for a batch (constant block index across v, qi
    # -> single HBM fetch per batch).
    q_spec = pl.BlockSpec((None, None, tq, kc),
                          lambda b, v, qi, tbl: (b, tbl[v, 0], qi, 0))
    k_spec = pl.BlockSpec((None, V, HW, kc), lambda b, v, qi, tbl: (b, 0, 0, 0))
    v_spec = pl.BlockSpec((None, V, HW, kc), lambda b, v, qi, tbl: (b, 0, 0, 0))
    ref_spec = pl.BlockSpec((None, None, tq, C),
                            lambda b, v, qi, tbl: (b, tbl[v, 0], qi, 0))

    def const_spec(shape):
        return pl.BlockSpec(shape, lambda b, v, qi, tbl: (0, 0))

    in_specs = [q_spec, k_spec, v_spec, ref_spec,
                const_spec((kc, out_ch)), const_spec((1, out_ch)),
                const_spec((C, out_ch)), const_spec((out_ch, out_ch)),
                const_spec((1, out_ch))]

    out_spec = pl.BlockSpec((None, None, tq, C), lambda b, v, qi, tbl: (b, v, qi, 0))
    out_shape = jax.ShapeDtypeStruct((B, num_v, HW, C), out_dtype)

    if emit_map:
        # NOTE: attn last dim is HW -- lane-dense (>=128) for realistic shapes.
        attn_spec = pl.BlockSpec((None, n_adj, tq, HW),
                                 lambda b, v, qi, tbl: (b, 0, qi, 0))
        out_shapes = (out_shape, jax.ShapeDtypeStruct((B, n_adj, HW, HW), out_dtype))
        out_specs = (out_spec, attn_spec)
    else:
        out_shapes = out_shape
        out_specs = out_spec

    isz_kv = jnp.dtype(keys.dtype).itemsize
    isz_x = jnp.dtype(xf.dtype).itemsize
    isz_o = jnp.dtype(out_dtype).itemsize
    flops = num_v * B * (n_adj * 4 * HW * HW * kc
                         + 2 * HW * kc * out_ch
                         + 2 * HW * C * out_ch
                         + 2 * HW * out_ch * out_ch)
    bytes_accessed = (2 * B * V * HW * kc * isz_kv          # K and V, once per batch
                      + num_v * B * HW * kc * isz_kv        # q stream
                      + num_v * B * HW * C * isz_x          # ref stream
                      + num_v * B * HW * C * isz_o          # fused output
                      + (B * n_adj * HW * HW * isz_o if emit_map else 0))
    cost = pl.CostEstimate(flops=int(flops),
                           transcendentals=int(num_v * B * n_adj * HW * HW),
                           bytes_accessed=int(bytes_accessed))

    grid_spec = pltpu.PrefetchScalarGridSpec(
        num_scalar_prefetch=1, grid=grid,
        in_specs=in_specs, out_specs=out_specs)

    outs = pl.pallas_call(
        _make_mv_attn_kernel(sm_scale, n_adj, emit_map, approx_recip),
        out_shape=out_shapes,
        grid_spec=grid_spec,
        compiler_params=pltpu.CompilerParams(
            dimension_semantics=("parallel", "parallel", "parallel"),
            vmem_limit_bytes=64 * 1024 * 1024),
        cost_estimate=cost,
    )(view_tbl, keys, keys, values, xf,
      w_out, b_out.reshape(1, out_ch),
      w_fuse_ref, w_fuse_match, b_fuse.reshape(1, out_ch))

    if emit_map:
        return outs[0], outs[1]
    return outs, None


# ---------------------------------------------------------------------------
# Parameter init (deterministic, eval-mode BN folded into f_key)
# ---------------------------------------------------------------------------
def init_params(key, in_ch, out_ch, scale=2, dtype=jnp.float32):
    kc = in_ch // scale
    ks = jax.random.split(key, 12)

    def w(k, shape, fan_in):
        return (jax.random.normal(k, shape, dtype) / jnp.sqrt(fan_in)).astype(dtype)

    # f_key / f_query : Conv2d(in_ch -> kc, 1x1) + BatchNorm2d(kc) (folded, eval)
    w_key = w(ks[0], (in_ch, kc), in_ch)
    b_key = 0.1 * jax.random.normal(ks[1], (kc,), dtype)
    gamma = 1.0 + 0.1 * jax.random.normal(ks[2], (kc,), dtype)
    beta = 0.1 * jax.random.normal(ks[3], (kc,), dtype)
    run_mean = 0.05 * jax.random.normal(ks[4], (kc,), dtype)
    run_var = 1.0 + 0.1 * jax.random.uniform(ks[5], (kc,), dtype)
    inv = gamma / jnp.sqrt(run_var + 1e-5)

    return {
        "w_key": w_key * inv[None, :],
        "b_key": (b_key - run_mean) * inv + beta,
        "w_value": w(ks[6], (in_ch, kc), in_ch),
        "b_value": 0.1 * jax.random.normal(ks[7], (kc,), dtype),
        "w_out": w(ks[8], (kc, out_ch), kc),
        "b_out": 0.1 * jax.random.normal(ks[9], (out_ch,), dtype),
        "w_fuse": w(ks[10], (out_ch * 2, out_ch), out_ch * 2),
        "b_fuse": 0.1 * jax.random.normal(ks[11], (out_ch,), dtype),
    }


# ---------------------------------------------------------------------------
# Forward pass (Pallas kernels on the hot path, plain-JAX glue elsewhere)
# ---------------------------------------------------------------------------
def temp_attn_forward(x, params, scale=2, *, precise=False):
    B, V, C, H, W = x.shape
    assert V == 3
    HW = H * W
    kc = C // scale
    out_ch = params["w_out"].shape[1]
    sm_scale = float(kc) ** (-0.5)

    # fast path: bf16 MXU matmuls (f32 accumulation) + approx EUP reciprocal
    cdt = x.dtype if precise else jnp.bfloat16
    approx_recip = not precise

    # NCHW-ish -> pixel-major channels-last: (B, V, HW, C)
    xf = jnp.transpose(x.reshape(B, V, C, HW), (0, 1, 3, 2))

    # One fused key(=query)/value projection for every view, computed once.
    w_kv = jnp.concatenate([params["w_key"], params["w_value"]], axis=1)   # (C, 2kc)
    b_kv = jnp.concatenate([params["b_key"], params["b_value"]], axis=0)   # (2kc,)
    kv = conv1x1(xf.reshape(B * V * HW, C), w_kv, b_kv,
                 out_dtype=cdt).reshape(B, V, HW, 2 * kc)
    keys = kv[..., :kc]       # f_query == f_key -> query of a view is its key
    values = kv[..., kc:]

    wo = params["w_out"].astype(cdt)
    wfr = params["w_fuse"][:C].astype(cdt)          # multiplies ref  (C == out_ch)
    wfm = params["w_fuse"][C:].astype(cdt)          # multiplies matching

    def attn_call(view_tbl, emit_map):
        return multi_view_attention(
            view_tbl, keys, values, xf, wo, params["b_out"],
            wfr, wfm, params["b_fuse"],
            sm_scale=sm_scale, emit_map=emit_map,
            out_dtype=x.dtype, approx_recip=approx_recip)

    # rows: [ref_view, adj0, adj1]
    tbl0 = jnp.array([[0, 1, 2]], jnp.int32)
    tbl12 = jnp.array([[1, 0, 2], [2, 0, 1]], jnp.int32)

    out0, attn_maps = attn_call(tbl0, emit_map=True)     # (B, 1, HW, C), (B,2,HW,HW)
    out12, _ = attn_call(tbl12, emit_map=False)           # (B, 2, HW, C)

    out = jnp.concatenate([out0, out12], axis=1)           # (B, 3, HW, C)
    out = jnp.transpose(out, (0, 1, 3, 2)).reshape(B, V, C, H, W)
    return out, attn_maps


# ---------------------------------------------------------------------------
# Pure-JAX reference (same math, PyTorch op order) for validation
# ---------------------------------------------------------------------------
def reference_forward(x, params, scale=2):
    B, V, C, H, W = x.shape
    HW = H * W
    kc = C // scale
    out_ch = params["w_out"].shape[1]
    sm_scale = float(kc) ** (-0.5)
    xf = jnp.transpose(x.reshape(B, V, C, HW), (0, 1, 3, 2))

    def proj(z, w, b):
        return z @ w + b

    outs, attn_maps = [], []
    for i in range(V):
        adj_ids = [j for j in range(V) if j != i]
        ref = xf[:, i]
        q = proj(ref, params["w_key"], params["b_key"])
        matching = jnp.zeros((B, HW, out_ch), x.dtype)
        for a in adj_ids:
            adj = xf[:, a]
            k = proj(adj, params["w_key"], params["b_key"])
            v = proj(adj, params["w_value"], params["b_value"])
            sim = jnp.einsum("bqc,bkc->bqk", q, k) * sm_scale
            attn = jax.nn.softmax(sim, axis=-1)
            ctx = jnp.einsum("bqk,bkc->bqc", attn, v)
            matching = matching + proj(ctx, params["w_out"], params["b_out"])
            if i == 0:
                attn_maps.append(attn[:, None])
        fuse = proj(jnp.concatenate([ref, matching], axis=-1),
                    params["w_fuse"], params["b_fuse"])
        outs.append((ref + fuse)[:, None])
    out = jnp.concatenate(outs, axis=1)
    out = jnp.transpose(out, (0, 1, 3, 2)).reshape(B, V, C, H, W)
    return out, jnp.concatenate(attn_maps, axis=1)


# ---------------------------------------------------------------------------
if __name__ == "__main__":
    key = jax.random.PRNGKey(0)
    B, V, C, H, W = 2, 3, 8, 8, 8        # in_channels == out_channels (module requirement)
    kx, kp = jax.random.split(key)
    x = jax.random.normal(kx, (B, V, C, H, W), jnp.float32)
    params = init_params(kp, C, C, scale=2)

    ref_out, ref_attn = reference_forward(x, params)

    # Precise path (f32 matmuls, exact reciprocal): tight numerical check.
    fwd_precise = jax.jit(lambda xx: temp_attn_forward(xx, params, precise=True))
    out_p, attn_p = fwd_precise(x)
    jax.block_until_ready((out_p, attn_p))
    assert out_p.shape == (B, V, C, H, W)
    assert attn_p.shape == (B, 2, H * W, H * W)
    assert jnp.allclose(out_p, ref_out, atol=1e-4, rtol=1e-4)
    assert jnp.allclose(attn_p, ref_attn, atol=1e-5, rtol=1e-4)

    # Fast path (default: bf16 MXU matmuls + approx reciprocal): loose sanity check.
    fwd_fast = jax.jit(lambda xx: temp_attn_forward(xx, params))
    out_f, attn_f = fwd_fast(x)
    jax.block_until_ready((out_f, attn_f))
    assert out_f.shape == (B, V, C, H, W)
    assert attn_f.shape == (B, 2, H * W, H * W)
    assert jnp.allclose(out_f, ref_out, atol=2.5e-1, rtol=2.5e-1)
    assert jnp.allclose(attn_f, ref_attn, atol=5e-2, rtol=5e-2)

    print("KERNEL_OK")
</pallas_src>

<mosaic_0001>
module attributes {stable_mosaic.version = 11 : i64} {
  func.func @_proj_kernel(%arg0: i32, %arg1: memref<384x8xf32, #tpu.memory_space<vmem>>, %arg2: memref<8x8xf32, #tpu.memory_space<vmem>>, %arg3: memref<1x8xf32, #tpu.memory_space<vmem>>, %arg4: memref<384x8xf32, #tpu.memory_space<vmem>>) attributes {dimension_semantics = [#tpu.dimension_semantics<parallel>], iteration_bounds = array<i64: 1>, scalar_prefetch = 0 : i64, scratch_operands = 0 : i64, tpu.core_type = #tpu.core_type<tc>, window_params = [{transform_indices = @transform_0, window_bounds = array<i64: 384, 8>}, {pipeline_mode = #tpu.pipeline_mode<synchronous>, transform_indices = @transform_1, window_bounds = array<i64: 8, 8>}, {pipeline_mode = #tpu.pipeline_mode<synchronous>, transform_indices = @transform_2, window_bounds = array<i64: 1, 8>}, {transform_indices = @transform_3, window_bounds = array<i64: 384, 8>}]} {
    %c0 = arith.constant 0 : index
    %c0_0 = arith.constant 0 : index
    %0 = vector.load %arg1[%c0, %c0_0] : memref<384x8xf32, #tpu.memory_space<vmem>>, vector<384x8xf32>
    %c0_1 = arith.constant 0 : index
    %c0_2 = arith.constant 0 : index
    %1 = vector.load %arg2[%c0_1, %c0_2] : memref<8x8xf32, #tpu.memory_space<vmem>>, vector<8x8xf32>
    %cst = arith.constant dense<0.000000e+00> : vector<384x8xf32>
    %2 = tpu.matmul %0, %1, %cst {dimension_numbers = #tpu.dot_dimension_numbers<[1], [0], [0], [1], [0, 0, 1, 1], [], []>} : vector<384x8xf32>, vector<8x8xf32>, vector<384x8xf32> -> vector<384x8xf32>
    %c0_3 = arith.constant 0 : index
    %c0_4 = arith.constant 0 : index
    %3 = vector.load %arg3[%c0_3, %c0_4] : memref<1x8xf32, #tpu.memory_space<vmem>>, vector<1x8xf32>
    %4 = vector.broadcast %3 : vector<1x8xf32> to vector<384x8xf32>
    %5 = arith.addf %2, %4 : vector<384x8xf32>
    %c0_5 = arith.constant 0 : index
    %c0_6 = arith.constant 0 : index
    %6 = vector.load %arg4[%c0_5, %c0_6] : memref<384x8xf32, #tpu.memory_space<vmem>>, vector<384x8xf32>
    tpu.vector_store %arg4[%c0_5, %c0_6], %5 {strides = array<i32>} : memref<384x8xf32, #tpu.memory_space<vmem>>, vector<384x8xf32>,
    return
  }
  func.func @transform_0(%arg0: i32) -> (i32, i32) {
    %c0_i32 = arith.constant 0 : i32
    %c0_i32_0 = arith.constant 0 : i32
    return %arg0, %c0_i32 : i32, i32
  }
  func.func @transform_1(%arg0: i32) -> (i32, i32) {
    %c0_i32 = arith.constant 0 : i32
    %c0_i32_0 = arith.constant 0 : i32
    %c0_i32_1 = arith.constant 0 : i32
    return %c0_i32, %c0_i32_0 : i32, i32
  }
  func.func @transform_2(%arg0: i32) -> (i32, i32) {
    %c0_i32 = arith.constant 0 : i32
    %c0_i32_0 = arith.constant 0 : i32
    %c0_i32_1 = arith.constant 0 : i32
    return %c0_i32, %c0_i32_0 : i32, i32
  }
  func.func @transform_3(%arg0: i32) -> (i32, i32) {
    %c0_i32 = arith.constant 0 : i32
    %c0_i32_0 = arith.constant 0 : i32
    return %arg0, %c0_i32 : i32, i32
  }
}

module attributes {stable_mosaic.version = 11 : i64} {
  func.func @kernel(%arg0: i32, %arg1: i32, %arg2: i32, %arg3: memref<2x3xi32, #tpu.memory_space<smem>>, %arg4: memref<1x1x64x4xf32, #tpu.memory_space<vmem>>, %arg5: memref<1x3x64x4xf32, #tpu.memory_space<vmem>>, %arg6: memref<1x3x64x4xf32, #tpu.memory_space<vmem>>, %arg7: memref<1x1x64x8xf32, #tpu.memory_space<vmem>>, %arg8: memref<4x8xf32, #tpu.memory_space<vmem>>, %arg9: memref<1x8xf32, #tpu.memory_space<vmem>>, %arg10: memref<8x8xf32, #tpu.memory_space<vmem>>, %arg11: memref<8x8xf32, #tpu.memory_space<vmem>>, %arg12: memref<1x8xf32, #tpu.memory_space<vmem>>, %arg13: memref<1x1x64x8xf32, #tpu.memory_space<vmem>>) attributes {dimension_semantics = [#tpu.dimension_semantics<parallel>, #tpu.dimension_semantics<parallel>, #tpu.dimension_semantics<parallel>], iteration_bounds = array<i64: 2, 2, 1>, scalar_prefetch = 1 : i64, scratch_operands = 0 : i64, tpu.core_type = #tpu.core_type<tc>, window_params = [{transform_indices = @transform_0, window_bounds = array<i64: 1, 1, 64, 4>}, {transform_indices = @transform_1, window_bounds = array<i64: 1, 3, 64, 4>}, {transform_indices = @transform_2, window_bounds = array<i64: 1, 3, 64, 4>}, {transform_indices = @transform_3, window_bounds = array<i64: 1, 1, 64, 8>}, {pipeline_mode = #tpu.pipeline_mode<synchronous>, transform_indices = @transform_4, window_bounds = array<i64: 4, 8>}, {pipeline_mode = #tpu.pipeline_mode<synchronous>, transform_indices = @transform_5, window_bounds = array<i64: 1, 8>}, {pipeline_mode = #tpu.pipeline_mode<synchronous>, transform_indices = @transform_6, window_bounds = array<i64: 8, 8>}, {pipeline_mode = #tpu.pipeline_mode<synchronous>, transform_indices = @transform_7, window_bounds = array<i64: 8, 8>}, {pipeline_mode = #tpu.pipeline_mode<synchronous>, transform_indices = @transform_8, window_bounds = array<i64: 1, 8>}, {transform_indices = @transform_9, window_bounds = array<i64: 1, 1, 64, 8>}]} {
    %c0 = arith.constant 0 : index
    %c0_0 = arith.constant 0 : index
    %c0_1 = arith.constant 0 : index
    %c0_2 = arith.constant 0 : index
    %0 = vector.load %arg4[%c0, %c0_0, %c0_1, %c0_2] : memref<1x1x64x4xf32, #tpu.memory_space<vmem>>, vector<1x1x64x4xf32>
    %1 = vector.shape_cast %0 : vector<1x1x64x4xf32> to vector<64x4xf32>
    %cst = arith.constant 0.000000e+00 : f32
    %2 = vector.broadcast %cst : f32 to vector<64x4xf32>
    %3 = arith.index_cast %arg1 : i32 to index
    %c1 = arith.constant 1 : index
    %4 = memref.load %arg3[%3, %c1] : memref<2x3xi32, #tpu.memory_space<smem>>
    %c0_3 = arith.constant 0 : index
    %5 = arith.index_cast %4 : i32 to index
    %c0_4 = arith.constant 0 : index
    %c0_5 = arith.constant 0 : index
    %6 = vector.load %arg5[%c0_3, %5, %c0_4, %c0_5] : memref<1x3x64x4xf32, #tpu.memory_space<vmem>>, vector<1x1x64x4xf32>
    %7 = vector.shape_cast %6 : vector<1x1x64x4xf32> to vector<64x4xf32>
    %c0_6 = arith.constant 0 : index
    %8 = arith.index_cast %4 : i32 to index
    %c0_7 = arith.constant 0 : index
    %c0_8 = arith.constant 0 : index
    %9 = vector.load %arg6[%c0_6, %8, %c0_7, %c0_8] : memref<1x3x64x4xf32, #tpu.memory_space<vmem>>, vector<1x1x64x4xf32>
    %10 = vector.shape_cast %9 : vector<1x1x64x4xf32> to vector<64x4xf32>
    %cst_9 = arith.constant dense<0.000000e+00> : vector<64x64xf32>
    %11 = tpu.matmul %1, %7, %cst_9 {dimension_numbers = #tpu.dot_dimension_numbers<[1], [1], [0], [0], [0, 0, 1, 0], [], []>} : vector<64x4xf32>, vector<64x4xf32>, vector<64x64xf32> -> vector<64x64xf32>
    %cst_10 = arith.constant 5.000000e-01 : f32
    %12 = vector.broadcast %cst_10 : f32 to vector<64x64xf32>
    %13 = arith.mulf %11, %12 : vector<64x64xf32>
    %cst_11 = arith.constant dense<0xFF800000> : vector<64xf32>
    %14 = vector.multi_reduction <maximumf>, %13, %cst_11 [1] : vector<64x64xf32> to vector<64xf32>
    %15 = vector.shape_cast %14 : vector<64xf32> to vector<64x1xf32>
    %16 = vector.broadcast %15 : vector<64x1xf32> to vector<64x64xf32>
    %17 = arith.subf %13, %16 : vector<64x64xf32>
    %18 = math.exp %17 : vector<64x64xf32>
    %cst_12 = arith.constant dense<0.000000e+00> : vector<64xf32>
    %19 = vector.multi_reduction <add>, %18, %cst_12 [1] : vector<64x64xf32> to vector<64xf32>
    %20 = vector.shape_cast %19 : vector<64xf32> to vector<64x1xf32>
    %21 = tpu.reciprocal %20 : vector<64x1xf32> -> vector<64x1xf32>
    %22 = vector.broadcast %21 : vector<64x1xf32> to vector<64x64xf32>
    %23 = arith.mulf %18, %22 : vector<64x64xf32>
    %cst_13 = arith.constant dense<0.000000e+00> : vector<64x4xf32>
    %24 = tpu.matmul %23, %10, %cst_13 {dimension_numbers = #tpu.dot_dimension_numbers<[1], [0], [0], [1], [0, 0, 1, 1], [], []>} : vector<64x64xf32>, vector<64x4xf32>, vector<64x4xf32> -> vector<64x4xf32>
    %25 = arith.addf %2, %24 : vector<64x4xf32>
    %26 = arith.index_cast %arg1 : i32 to index
    %c2 = arith.constant 2 : index
    %27 = memref.load %arg3[%26, %c2] : memref<2x3xi32, #tpu.memory_space<smem>>
    %c0_14 = arith.constant 0 : index
    %28 = arith.index_cast %27 : i32 to index
    %c0_15 = arith.constant 0 : index
    %c0_16 = arith.constant 0 : index
    %29 = vector.load %arg5[%c0_14, %28, %c0_15, %c0_16] : memref<1x3x64x4xf32, #tpu.memory_space<vmem>>, vector<1x1x64x4xf32>
    %30 = vector.shape_cast %29 : vector<1x1x64x4xf32> to vector<64x4xf32>
    %c0_17 = arith.constant 0 : index
    %31 = arith.index_cast %27 : i32 to index
    %c0_18 = arith.constant 0 : index
    %c0_19 = arith.constant 0 : index
    %32 = vector.load %arg6[%c0_17, %31, %c0_18, %c0_19] : memref<1x3x64x4xf32, #tpu.memory_space<vmem>>, vector<1x1x64x4xf32>
    %33 = vector.shape_cast %32 : vector<1x1x64x4xf32> to vector<64x4xf32>
    %cst_20 = arith.constant dense<0.000000e+00> : vector<64x64xf32>
    %34 = tpu.matmul %1, %30, %cst_20 {dimension_numbers = #tpu.dot_dimension_numbers<[1], [1], [0], [0], [0, 0, 1, 0], [], []>} : vector<64x4xf32>, vector<64x4xf32>, vector<64x64xf32> -> vector<64x64xf32>
    %cst_21 = arith.constant 5.000000e-01 : f32
    %35 = vector.broadcast %cst_21 : f32 to vector<64x64xf32>
    %36 = arith.mulf %34, %35 : vector<64x64xf32>
    %cst_22 = arith.constant dense<0xFF800000> : vector<64xf32>
    %37 = vector.multi_reduction <maximumf>, %36, %cst_22 [1] : vector<64x64xf32> to vector<64xf32>
    %38 = vector.shape_cast %37 : vector<64xf32> to vector<64x1xf32>
    %39 = vector.broadcast %38 : vector<64x1xf32> to vector<64x64xf32>
    %40 = arith.subf %36, %39 : vector<64x64xf32>
    %41 = math.exp %40 : vector<64x64xf32>
    %cst_23 = arith.constant dense<0.000000e+00> : vector<64xf32>
    %42 = vector.multi_reduction <add>, %41, %cst_23 [1] : vector<64x64xf32> to vector<64xf32>
    %43 = vector.shape_cast %42 : vector<64xf32> to vector<64x1xf32>
    %44 = tpu.reciprocal %43 : vector<64x1xf32> -> vector<64x1xf32>
    %45 = vector.broadcast %44 : vector<64x1xf32> to vector<64x64xf32>
    %46 = arith.mulf %41, %45 : vector<64x64xf32>
    %cst_24 = arith.constant dense<0.000000e+00> : vector<64x4xf32>
    %47 = tpu.matmul %46, %33, %cst_24 {dimension_numbers = #tpu.dot_dimension_numbers<[1], [0], [0], [1], [0, 0, 1, 1], [], []>} : vector<64x64xf32>, vector<64x4xf32>, vector<64x4xf32> -> vector<64x4xf32>
    %48 = arith.addf %25, %47 : vector<64x4xf32>
    %c0_25 = arith.constant 0 : index
    %c0_26 = arith.constant 0 : index
    %49 = vector.load %arg8[%c0_25, %c0_26] : memref<4x8xf32, #tpu.memory_space<vmem>>, vector<4x8xf32>
    %cst_27 = arith.constant dense<0.000000e+00> : vector<64x8xf32>
    %50 = tpu.matmul %48, %49, %cst_27 {dimension_numbers = #tpu.dot_dimension_numbers<[1], [0], [0], [1], [0, 0, 1, 1], [], []>} : vector<64x4xf32>, vector<4x8xf32>, vector<64x8xf32> -> vector<64x8xf32>
    %c0_28 = arith.constant 0 : index
    %c0_29 = arith.constant 0 : index
    %51 = vector.load %arg9[%c0_28, %c0_29] : memref<1x8xf32, #tpu.memory_space<vmem>>, vector<1x8xf32>
    %cst_30 = arith.constant 2.000000e+00 : f32
    %52 = vector.broadcast %cst_30 : f32 to vector<1x8xf32>
    %53 = arith.mulf %52, %51 : vector<1x8xf32>
    %54 = vector.broadcast %53 : vector<1x8xf32> to vector<64x8xf32>
    %55 = arith.addf %50, %54 : vector<64x8xf32>
    %c0_31 = arith.constant 0 : index
    %c0_32 = arith.constant 0 : index
    %c0_33 = arith.constant 0 : index
    %c0_34 = arith.constant 0 : index
    %56 = vector.load %arg7[%c0_31, %c0_32, %c0_33, %c0_34] : memref<1x1x64x8xf32, #tpu.memory_space<vmem>>, vector<1x1x64x8xf32>
    %57 = vector.shape_cast %56 : vector<1x1x64x8xf32> to vector<64x8xf32>
    %c0_35 = arith.constant 0 : index
    %c0_36 = arith.constant 0 : index
    %58 = vector.load %arg10[%c0_35, %c0_36] : memref<8x8xf32, #tpu.memory_space<vmem>>, vector<8x8xf32>
    %cst_37 = arith.constant dense<0.000000e+00> : vector<64x8xf32>
    %59 = tpu.matmul %57, %58, %cst_37 {dimension_numbers = #tpu.dot_dimension_numbers<[1], [0], [0], [1], [0, 0, 1, 1], [], []>} : vector<64x8xf32>, vector<8x8xf32>, vector<64x8xf32> -> vector<64x8xf32>
    %60 = arith.addf %57, %59 : vector<64x8xf32>
    %c0_38 = arith.constant 0 : index
    %c0_39 = arith.constant 0 : index
    %61 = vector.load %arg11[%c0_38, %c0_39] : memref<8x8xf32, #tpu.memory_space<vmem>>, vector<8x8xf32>
    %cst_40 = arith.constant dense<0.000000e+00> : vector<64x8xf32>
    %62 = tpu.matmul %55, %61, %cst_40 {dimension_numbers = #tpu.dot_dimension_numbers<[1], [0], [0], [1], [0, 0, 1, 1], [], []>} : vector<64x8xf32>, vector<8x8xf32>, vector<64x8xf32> -> vector<64x8xf32>
    %63 = arith.addf %60, %62 : vector<64x8xf32>
    %c0_41 = arith.constant 0 : index
    %c0_42 = arith.constant 0 : index
    %64 = vector.load %arg12[%c0_41, %c0_42] : memref<1x8xf32, #tpu.memory_space<vmem>>, vector<1x8xf32>
    %65 = vector.broadcast %64 : vector<1x8xf32> to vector<64x8xf32>
    %66 = arith.addf %63, %65 : vector<64x8xf32>
    %c0_43 = arith.constant 0 : index
    %c0_44 = arith.constant 0 : index
    %c0_45 = arith.constant 0 : index
    %c0_46 = arith.constant 0 : index
    %67 = vector.load %arg13[%c0_43, %c0_44, %c0_45, %c0_46] : memref<1x1x64x8xf32, #tpu.memory_space<vmem>>, vector<1x1x64x8xf32>
    %68 = vector.shape_cast %67 : vector<1x1x64x8xf32> to vector<64x8xf32>
    %69 = vector.shape_cast %66 : vector<64x8xf32> to vector<1x1x64x8xf32>
    tpu.vector_store %arg13[%c0_43, %c0_44, %c0_45, %c0_46], %69 {strides = array<i32>} : memref<1x1x64x8xf32, #tpu.memory_space<vmem>>, vector<1x1x64x8xf32>,
    return
  }
  func.func @transform_0(%arg0: i32, %arg1: i32, %arg2: i32, %arg3: memref<2x3xi32, #tpu.memory_space<smem>>) -> (i32, i32, i32, i32) {
    %0 = arith.index_cast %arg1 : i32 to index
    %c0 = arith.constant 0 : index
    %1 = memref.load %arg3[%0, %c0] : memref<2x3xi32, #tpu.memory_space<smem>>
    %c0_i32 = arith.constant 0 : i32
    %c0_i32_0 = arith.constant 0 : i32
    return %arg0, %1, %arg2, %c0_i32 : i32, i32, i32, i32
  }
  func.func @transform_1(%arg0: i32, %arg1: i32, %arg2: i32, %arg3: memref<2x3xi32, #tpu.memory_space<smem>>) -> (i32, i32, i32, i32) {
    %c0_i32 = arith.constant 0 : i32
    %c0_i32_0 = arith.constant 0 : i32
    %c0_i32_1 = arith.constant 0 : i32
    %c0_i32_2 = arith.constant 0 : i32
    return %arg0, %c0_i32, %c0_i32_0, %c0_i32_1 : i32, i32, i32, i32
  }
  func.func @transform_2(%arg0: i32, %arg1: i32, %arg2: i32, %arg3: memref<2x3xi32, #tpu.memory_space<smem>>) -> (i32, i32, i32, i32) {
    %c0_i32 = arith.constant 0 : i32
    %c0_i32_0 = arith.constant 0 : i32
    %c0_i32_1 = arith.constant 0 : i32
    %c0_i32_2 = arith.constant 0 : i32
    return %arg0, %c0_i32, %c0_i32_0, %c0_i32_1 : i32, i32, i32, i32
  }
  func.func @transform_3(%arg0: i32, %arg1: i32, %arg2: i32, %arg3: memref<2x3xi32, #tpu.memory_space<smem>>) -> (i32, i32, i32, i32) {
    %0 = arith.index_cast %arg1 : i32 to index
    %c0 = arith.constant 0 : index
    %1 = memref.load %arg3[%0, %c0] : memref<2x3xi32, #tpu.memory_space<smem>>
    %c0_i32 = arith.constant 0 : i32
    %c0_i32_0 = arith.constant 0 : i32
    return %arg0, %1, %arg2, %c0_i32 : i32, i32, i32, i32
  }
  func.func @transform_4(%arg0: i32, %arg1: i32, %arg2: i32, %arg3: memref<2x3xi32, #tpu.memory_space<smem>>) -> (i32, i32) {
    %c0_i32 = arith.constant 0 : i32
    %c0_i32_0 = arith.constant 0 : i32
    %c0_i32_1 = arith.constant 0 : i32
    return %c0_i32, %c0_i32_0 : i32, i32
  }
  func.func @transform_5(%arg0: i32, %arg1: i32, %arg2: i32, %arg3: memref<2x3xi32, #tpu.memory_space<smem>>) -> (i32, i32) {
    %c0_i32 = arith.constant 0 : i32
    %c0_i32_0 = arith.constant 0 : i32
    %c0_i32_1 = arith.constant 0 : i32
    return %c0_i32, %c0_i32_0 : i32, i32
  }
  func.func @transform_6(%arg0: i32, %arg1: i32, %arg2: i32, %arg3: memref<2x3xi32, #tpu.memory_space<smem>>) -> (i32, i32) {
    %c0_i32 = arith.constant 0 : i32
    %c0_i32_0 = arith.constant 0 : i32
    %c0_i32_1 = arith.constant 0 : i32
    return %c0_i32, %c0_i32_0 : i32, i32
  }
  func.func @transform_7(%arg0: i32, %arg1: i32, %arg2: i32, %arg3: memref<2x3xi32, #tpu.memory_space<smem>>) -> (i32, i32) {
    %c0_i32 = arith.constant 0 : i32
    %c0_i32_0 = arith.constant 0 : i32
    %c0_i32_1 = arith.constant 0 : i32
    return %c0_i32, %c0_i32_0 : i32, i32
  }
  func.func @transform_8(%arg0: i32, %arg1: i32, %arg2: i32, %arg3: memref<2x3xi32, #tpu.memory_space<smem>>) -> (i32, i32) {
    %c0_i32 = arith.constant 0 : i32
    %c0_i32_0 = arith.constant 0 : i32
    %c0_i32_1 = arith.constant 0 : i32
    return %c0_i32, %c0_i32_0 : i32, i32
  }
  func.func @transform_9(%arg0: i32, %arg1: i32, %arg2: i32, %arg3: memref<2x3xi32, #tpu.memory_space<smem>>) -> (i32, i32, i32, i32) {
    %c0_i32 = arith.constant 0 : i32
    %c0_i32_0 = arith.constant 0 : i32
    return %arg0, %arg1, %arg2, %c0_i32 : i32, i32, i32, i32
  }
}

module attributes {stable_mosaic.version = 11 : i64} {
  func.func @kernel(%arg0: i32, %arg1: i32, %arg2: i32, %arg3: memref<1x3xi32, #tpu.memory_space<smem>>, %arg4: memref<1x1x64x4xf32, #tpu.memory_space<vmem>>, %arg5: memref<1x3x64x4xf32, #tpu.memory_space<vmem>>, %arg6: memref<1x3x64x4xf32, #tpu.memory_space<vmem>>, %arg7: memref<1x1x64x8xf32, #tpu.memory_space<vmem>>, %arg8: memref<4x8xf32, #tpu.memory_space<vmem>>, %arg9: memref<1x8xf32, #tpu.memory_space<vmem>>, %arg10: memref<8x8xf32, #tpu.memory_space<vmem>>, %arg11: memref<8x8xf32, #tpu.memory_space<vmem>>, %arg12: memref<1x8xf32, #tpu.memory_space<vmem>>, %arg13: memref<1x1x64x8xf32, #tpu.memory_space<vmem>>, %arg14: memref<1x2x64x64xf32, #tpu.memory_space<vmem>>) attributes {dimension_semantics = [#tpu.dimension_semantics<parallel>, #tpu.dimension_semantics<parallel>, #tpu.dimension_semantics<parallel>], iteration_bounds = array<i64: 2, 1, 1>, scalar_prefetch = 1 : i64, scratch_operands = 0 : i64, tpu.core_type = #tpu.core_type<tc>, window_params = [{transform_indices = @transform_0, window_bounds = array<i64: 1, 1, 64, 4>}, {transform_indices = @transform_1, window_bounds = array<i64: 1, 3, 64, 4>}, {transform_indices = @transform_2, window_bounds = array<i64: 1, 3, 64, 4>}, {transform_indices = @transform_3, window_bounds = array<i64: 1, 1, 64, 8>}, {pipeline_mode = #tpu.pipeline_mode<synchronous>, transform_indices = @transform_4, window_bounds = array<i64: 4, 8>}, {pipeline_mode = #tpu.pipeline_mode<synchronous>, transform_indices = @transform_5, window_bounds = array<i64: 1, 8>}, {pipeline_mode = #tpu.pipeline_mode<synchronous>, transform_indices = @transform_6, window_bounds = array<i64: 8, 8>}, {pipeline_mode = #tpu.pipeline_mode<synchronous>, transform_indices = @transform_7, window_bounds = array<i64: 8, 8>}, {pipeline_mode = #tpu.pipeline_mode<synchronous>, transform_indices = @transform_8, window_bounds = array<i64: 1, 8>}, {transform_indices = @transform_9, window_bounds = array<i64: 1, 1, 64, 8>}, {transform_indices = @transform_10, window_bounds = array<i64: 1, 2, 64, 64>}]} {
    %c0 = arith.constant 0 : index
    %c0_0 = arith.constant 0 : index
    %c0_1 = arith.constant 0 : index
    %c0_2 = arith.constant 0 : index
    %0 = vector.load %arg4[%c0, %c0_0, %c0_1, %c0_2] : memref<1x1x64x4xf32, #tpu.memory_space<vmem>>, vector<1x1x64x4xf32>
    %1 = vector.shape_cast %0 : vector<1x1x64x4xf32> to vector<64x4xf32>
    %cst = arith.constant 0.000000e+00 : f32
    %2 = vector.broadcast %cst : f32 to vector<64x4xf32>
    %3 = arith.index_cast %arg1 : i32 to index
    %c1 = arith.constant 1 : index
    %4 = memref.load %arg3[%3, %c1] : memref<1x3xi32, #tpu.memory_space<smem>>
    %c0_3 = arith.constant 0 : index
    %5 = arith.index_cast %4 : i32 to index
    %c0_4 = arith.constant 0 : index
    %c0_5 = arith.constant 0 : index
    %6 = vector.load %arg5[%c0_3, %5, %c0_4, %c0_5] : memref<1x3x64x4xf32, #tpu.memory_space<vmem>>, vector<1x1x64x4xf32>
    %7 = vector.shape_cast %6 : vector<1x1x64x4xf32> to vector<64x4xf32>
    %c0_6 = arith.constant 0 : index
    %8 = arith.index_cast %4 : i32 to index
    %c0_7 = arith.constant 0 : index
    %c0_8 = arith.constant 0 : index
    %9 = vector.load %arg6[%c0_6, %8, %c0_7, %c0_8] : memref<1x3x64x4xf32, #tpu.memory_space<vmem>>, vector<1x1x64x4xf32>
    %10 = vector.shape_cast %9 : vector<1x1x64x4xf32> to vector<64x4xf32>
    %cst_9 = arith.constant dense<0.000000e+00> : vector<64x64xf32>
    %11 = tpu.matmul %1, %7, %cst_9 {dimension_numbers = #tpu.dot_dimension_numbers<[1], [1], [0], [0], [0, 0, 1, 0], [], []>} : vector<64x4xf32>, vector<64x4xf32>, vector<64x64xf32> -> vector<64x64xf32>
    %cst_10 = arith.constant 5.000000e-01 : f32
    %12 = vector.broadcast %cst_10 : f32 to vector<64x64xf32>
    %13 = arith.mulf %11, %12 : vector<64x64xf32>
    %cst_11 = arith.constant dense<0xFF800000> : vector<64xf32>
    %14 = vector.multi_reduction <maximumf>, %13, %cst_11 [1] : vector<64x64xf32> to vector<64xf32>
    %15 = vector.shape_cast %14 : vector<64xf32> to vector<64x1xf32>
    %16 = vector.broadcast %15 : vector<64x1xf32> to vector<64x64xf32>
    %17 = arith.subf %13, %16 : vector<64x64xf32>
    %18 = math.exp %17 : vector<64x64xf32>
    %cst_12 = arith.constant dense<0.000000e+00> : vector<64xf32>
    %19 = vector.multi_reduction <add>, %18, %cst_12 [1] : vector<64x64xf32> to vector<64xf32>
    %20 = vector.shape_cast %19 : vector<64xf32> to vector<64x1xf32>
    %21 = tpu.reciprocal %20 : vector<64x1xf32> -> vector<64x1xf32>
    %22 = vector.broadcast %21 : vector<64x1xf32> to vector<64x64xf32>
    %23 = arith.mulf %18, %22 : vector<64x64xf32>
    %c0_13 = arith.constant 0 : index
    %c0_14 = arith.constant 0 : index
    %c0_15 = arith.constant 0 : index
    %c0_16 = arith.constant 0 : index
    %24 = vector.load %arg14[%c0_13, %c0_14, %c0_15, %c0_16] : memref<1x2x64x64xf32, #tpu.memory_space<vmem>>, vector<1x1x64x64xf32>
    %25 = vector.shape_cast %24 : vector<1x1x64x64xf32> to vector<64x64xf32>
    %26 = vector.shape_cast %23 : vector<64x64xf32> to vector<1x1x64x64xf32>
    tpu.vector_store %arg14[%c0_13, %c0_14, %c0_15, %c0_16], %26 {strides = array<i32>} : memref<1x2x64x64xf32, #tpu.memory_space<vmem>>, vector<1x1x64x64xf32>,
    %cst_17 = arith.constant dense<0.000000e+00> : vector<64x4xf32>
    %27 = tpu.matmul %23, %10, %cst_17 {dimension_numbers = #tpu.dot_dimension_numbers<[1], [0], [0], [1], [0, 0, 1, 1], [], []>} : vector<64x64xf32>, vector<64x4xf32>, vector<64x4xf32> -> vector<64x4xf32>
    %28 = arith.addf %2, %27 : vector<64x4xf32>
    %29 = arith.index_cast %arg1 : i32 to index
    %c2 = arith.constant 2 : index
    %30 = memref.load %arg3[%29, %c2] : memref<1x3xi32, #tpu.memory_space<smem>>
    %c0_18 = arith.constant 0 : index
    %31 = arith.index_cast %30 : i32 to index
    %c0_19 = arith.constant 0 : index
    %c0_20 = arith.constant 0 : index
    %32 = vector.load %arg5[%c0_18, %31, %c0_19, %c0_20] : memref<1x3x64x4xf32, #tpu.memory_space<vmem>>, vector<1x1x64x4xf32>
    %33 = vector.shape_cast %32 : vector<1x1x64x4xf32> to vector<64x4xf32>
    %c0_21 = arith.constant 0 : index
    %34 = arith.index_cast %30 : i32 to index
    %c0_22 = arith.constant 0 : index
    %c0_23 = arith.constant 0 : index
    %35 = vector.load %arg6[%c0_21, %34, %c0_22, %c0_23] : memref<1x3x64x4xf32, #tpu.memory_space<vmem>>, vector<1x1x64x4xf32>
    %36 = vector.shape_cast %35 : vector<1x1x64x4xf32> to vector<64x4xf32>
    %cst_24 = arith.constant dense<0.000000e+00> : vector<64x64xf32>
    %37 = tpu.matmul %1, %33, %cst_24 {dimension_numbers = #tpu.dot_dimension_numbers<[1], [1], [0], [0], [0, 0, 1, 0], [], []>} : vector<64x4xf32>, vector<64x4xf32>, vector<64x64xf32> -> vector<64x64xf32>
    %cst_25 = arith.constant 5.000000e-01 : f32
    %38 = vector.broadcast %cst_25 : f32 to vector<64x64xf32>
    %39 = arith.mulf %37, %38 : vector<64x64xf32>
    %cst_26 = arith.constant dense<0xFF800000> : vector<64xf32>
    %40 = vector.multi_reduction <maximumf>, %39, %cst_26 [1] : vector<64x64xf32> to vector<64xf32>
    %41 = vector.shape_cast %40 : vector<64xf32> to vector<64x1xf32>
    %42 = vector.broadcast %41 : vector<64x1xf32> to vector<64x64xf32>
    %43 = arith.subf %39, %42 : vector<64x64xf32>
    %44 = math.exp %43 : vector<64x64xf32>
    %cst_27 = arith.constant dense<0.000000e+00> : vector<64xf32>
    %45 = vector.multi_reduction <add>, %44, %cst_27 [1] : vector<64x64xf32> to vector<64xf32>
    %46 = vector.shape_cast %45 : vector<64xf32> to vector<64x1xf32>
    %47 = tpu.reciprocal %46 : vector<64x1xf32> -> vector<64x1xf32>
    %48 = vector.broadcast %47 : vector<64x1xf32> to vector<64x64xf32>
    %49 = arith.mulf %44, %48 : vector<64x64xf32>
    %c0_28 = arith.constant 0 : index
    %c1_29 = arith.constant 1 : index
    %c0_30 = arith.constant 0 : index
    %c0_31 = arith.constant 0 : index
    %50 = vector.load %arg14[%c0_28, %c1_29, %c0_30, %c0_31] : memref<1x2x64x64xf32, #tpu.memory_space<vmem>>, vector<1x1x64x64xf32>
    %51 = vector.shape_cast %50 : vector<1x1x64x64xf32> to vector<64x64xf32>
    %52 = vector.shape_cast %49 : vector<64x64xf32> to vector<1x1x64x64xf32>
    tpu.vector_store %arg14[%c0_28, %c1_29, %c0_30, %c0_31], %52 {strides = array<i32>} : memref<1x2x64x64xf32, #tpu.memory_space<vmem>>, vector<1x1x64x64xf32>,
    %cst_32 = arith.constant dense<0.000000e+00> : vector<64x4xf32>
    %53 = tpu.matmul %49, %36, %cst_32 {dimension_numbers = #tpu.dot_dimension_numbers<[1], [0], [0], [1], [0, 0, 1, 1], [], []>} : vector<64x64xf32>, vector<64x4xf32>, vector<64x4xf32> -> vector<64x4xf32>
    %54 = arith.addf %28, %53 : vector<64x4xf32>
    %c0_33 = arith.constant 0 : index
    %c0_34 = arith.constant 0 : index
    %55 = vector.load %arg8[%c0_33, %c0_34] : memref<4x8xf32, #tpu.memory_space<vmem>>, vector<4x8xf32>
    %cst_35 = arith.constant dense<0.000000e+00> : vector<64x8xf32>
    %56 = tpu.matmul %54, %55, %cst_35 {dimension_numbers = #tpu.dot_dimension_numbers<[1], [0], [0], [1], [0, 0, 1, 1], [], []>} : vector<64x4xf32>, vector<4x8xf32>, vector<64x8xf32> -> vector<64x8xf32>
    %c0_36 = arith.constant 0 : index
    %c0_37 = arith.constant 0 : index
    %57 = vector.load %arg9[%c0_36, %c0_37] : memref<1x8xf32, #tpu.memory_space<vmem>>, vector<1x8xf32>
    %cst_38 = arith.constant 2.000000e+00 : f32
    %58 = vector.broadcast %cst_38 : f32 to vector<1x8xf32>
    %59 = arith.mulf %58, %57 : vector<1x8xf32>
    %60 = vector.broadcast %59 : vector<1x8xf32> to vector<64x8xf32>
    %61 = arith.addf %56, %60 : vector<64x8xf32>
    %c0_39 = arith.constant 0 : index
    %c0_40 = arith.constant 0 : index
    %c0_41 = arith.constant 0 : index
    %c0_42 = arith.constant 0 : index
    %62 = vector.load %arg7[%c0_39, %c0_40, %c0_41, %c0_42] : memref<1x1x64x8xf32, #tpu.memory_space<vmem>>, vector<1x1x64x8xf32>
    %63 = vector.shape_cast %62 : vector<1x1x64x8xf32> to vector<64x8xf32>
    %c0_43 = arith.constant 0 : index
    %c0_44 = arith.constant 0 : index
    %64 = vector.load %arg10[%c0_43, %c0_44] : memref<8x8xf32, #tpu.memory_space<vmem>>, vector<8x8xf32>
    %cst_45 = arith.constant dense<0.000000e+00> : vector<64x8xf32>
    %65 = tpu.matmul %63, %64, %cst_45 {dimension_numbers = #tpu.dot_dimension_numbers<[1], [0], [0], [1], [0, 0, 1, 1], [], []>} : vector<64x8xf32>, vector<8x8xf32>, vector<64x8xf32> -> vector<64x8xf32>
    %66 = arith.addf %63, %65 : vector<64x8xf32>
    %c0_46 = arith.constant 0 : index
    %c0_47 = arith.constant 0 : index
    %67 = vector.load %arg11[%c0_46, %c0_47] : memref<8x8xf32, #tpu.memory_space<vmem>>, vector<8x8xf32>
    %cst_48 = arith.constant dense<0.000000e+00> : vector<64x8xf32>
    %68 = tpu.matmul %61, %67, %cst_48 {dimension_numbers = #tpu.dot_dimension_numbers<[1], [0], [0], [1], [0, 0, 1, 1], [], []>} : vector<64x8xf32>, vector<8x8xf32>, vector<64x8xf32> -> vector<64x8xf32>
    %69 = arith.addf %66, %68 : vector<64x8xf32>
    %c0_49 = arith.constant 0 : index
    %c0_50 = arith.constant 0 : index
    %70 = vector.load %arg12[%c0_49, %c0_50] : memref<1x8xf32, #tpu.memory_space<vmem>>, vector<1x8xf32>
    %71 = vector.broadcast %70 : vector<1x8xf32> to vector<64x8xf32>
    %72 = arith.addf %69, %71 : vector<64x8xf32>
    %c0_51 = arith.constant 0 : index
    %c0_52 = arith.constant 0 : index
    %c0_53 = arith.constant 0 : index
    %c0_54 = arith.constant 0 : index
    %73 = vector.load %arg13[%c0_51, %c0_52, %c0_53, %c0_54] : memref<1x1x64x8xf32, #tpu.memory_space<vmem>>, vector<1x1x64x8xf32>
    %74 = vector.shape_cast %73 : vector<1x1x64x8xf32> to vector<64x8xf32>
    %75 = vector.shape_cast %72 : vector<64x8xf32> to vector<1x1x64x8xf32>
    tpu.vector_store %arg13[%c0_51, %c0_52, %c0_53, %c0_54], %75 {strides = array<i32>} : memref<1x1x64x8xf32, #tpu.memory_space<vmem>>, vector<1x1x64x8xf32>,
    return
  }
  func.func @transform_0(%arg0: i32, %arg1: i32, %arg2: i32, %arg3: memref<1x3xi32, #tpu.memory_space<smem>>) -> (i32, i32, i32, i32) {
    %0 = arith.index_cast %arg1 : i32 to index
    %c0 = arith.constant 0 : index
    %1 = memref.load %arg3[%0, %c0] : memref<1x3xi32, #tpu.memory_space<smem>>
    %c0_i32 = arith.constant 0 : i32
    %c0_i32_0 = arith.constant 0 : i32
    return %arg0, %1, %arg2, %c0_i32 : i32, i32, i32, i32
  }
  func.func @transform_1(%arg0: i32, %arg1: i32, %arg2: i32, %arg3: memref<1x3xi32, #tpu.memory_space<smem>>) -> (i32, i32, i32, i32) {
    %c0_i32 = arith.constant 0 : i32
    %c0_i32_0 = arith.constant 0 : i32
    %c0_i32_1 = arith.constant 0 : i32
    %c0_i32_2 = arith.constant 0 : i32
    return %arg0, %c0_i32, %c0_i32_0, %c0_i32_1 : i32, i32, i32, i32
  }
  func.func @transform_2(%arg0: i32, %arg1: i32, %arg2: i32, %arg3: memref<1x3xi32, #tpu.memory_space<smem>>) -> (i32, i32, i32, i32) {
    %c0_i32 = arith.constant 0 : i32
    %c0_i32_0 = arith.constant 0 : i32
    %c0_i32_1 = arith.constant 0 : i32
    %c0_i32_2 = arith.constant 0 : i32
    return %arg0, %c0_i32, %c0_i32_0, %c0_i32_1 : i32, i32, i32, i32
  }
  func.func @transform_3(%arg0: i32, %arg1: i32, %arg2: i32, %arg3: memref<1x3xi32, #tpu.memory_space<smem>>) -> (i32, i32, i32, i32) {
    %0 = arith.index_cast %arg1 : i32 to index
    %c0 = arith.constant 0 : index
    %1 = memref.load %arg3[%0, %c0] : memref<1x3xi32, #tpu.memory_space<smem>>
    %c0_i32 = arith.constant 0 : i32
    %c0_i32_0 = arith.constant 0 : i32
    return %arg0, %1, %arg2, %c0_i32 : i32, i32, i32, i32
  }
  func.func @transform_4(%arg0: i32, %arg1: i32, %arg2: i32, %arg3: memref<1x3xi32, #tpu.memory_space<smem>>) -> (i32, i32) {
    %c0_i32 = arith.constant 0 : i32
    %c0_i32_0 = arith.constant 0 : i32
    %c0_i32_1 = arith.constant 0 : i32
    return %c0_i32, %c0_i32_0 : i32, i32
  }
  func.func @transform_5(%arg0: i32, %arg1: i32, %arg2: i32, %arg3: memref<1x3xi32, #tpu.memory_space<smem>>) -> (i32, i32) {
    %c0_i32 = arith.constant 0 : i32
    %c0_i32_0 = arith.constant 0 : i32
    %c0_i32_1 = arith.constant 0 : i32
    return %c0_i32, %c0_i32_0 : i32, i32
  }
  func.func @transform_6(%arg0: i32, %arg1: i32, %arg2: i32, %arg3: memref<1x3xi32, #tpu.memory_space<smem>>) -> (i32, i32) {
    %c0_i32 = arith.constant 0 : i32
    %c0_i32_0 = arith.constant 0 : i32
    %c0_i32_1 = arith.constant 0 : i32
    return %c0_i32, %c0_i32_0 : i32, i32
  }
  func.func @transform_7(%arg0: i32, %arg1: i32, %arg2: i32, %arg3: memref<1x3xi32, #tpu.memory_space<smem>>) -> (i32, i32) {
    %c0_i32 = arith.constant 0 : i32
    %c0_i32_0 = arith.constant 0 : i32
    %c0_i32_1 = arith.constant 0 : i32
    return %c0_i32, %c0_i32_0 : i32, i32
  }
  func.func @transform_8(%arg0: i32, %arg1: i32, %arg2: i32, %arg3: memref<1x3xi32, #tpu.memory_space<smem>>) -> (i32, i32) {
    %c0_i32 = arith.constant 0 : i32
    %c0_i32_0 = arith.constant 0 : i32
    %c0_i32_1 = arith.constant 0 : i32
    return %c0_i32, %c0_i32_0 : i32, i32
  }
  func.func @transform_9(%arg0: i32, %arg1: i32, %arg2: i32, %arg3: memref<1x3xi32, #tpu.memory_space<smem>>) -> (i32, i32, i32, i32) {
    %c0_i32 = arith.constant 0 : i32
    %c0_i32_0 = arith.constant 0 : i32
    return %arg0, %arg1, %arg2, %c0_i32 : i32, i32, i32, i32
  }
  func.func @transform_10(%arg0: i32, %arg1: i32, %arg2: i32, %arg3: memref<1x3xi32, #tpu.memory_space<smem>>) -> (i32, i32, i32, i32) {
    %c0_i32 = arith.constant 0 : i32
    %c0_i32_0 = arith.constant 0 : i32
    %c0_i32_1 = arith.constant 0 : i32
    return %arg0, %c0_i32, %arg2, %c0_i32_0 : i32, i32, i32, i32
  }
}

</mosaic_0001>

<llo_original>
// kernel: _lambda_.3
$region0: #{_lambda_.3}
  #allocation0 [shape = 'u32[]', space=smem, size = 0x4, offset = 0x4, fixed_abs, tag = 'smem constant byte address 0x4 - core index']
  #allocation1 [shape = 'u32[144,128]{1,0:T(1,128)}', space=vmem, size = 0x12000, scoped, tag = 'internal scratch']
  %s0 = inlined_call_operand.hbm [shape: f32[384,8], index: 0, kind: input, shape index: {}]
  %s1 = inlined_call_operand.hbm [shape: f32[8,8], index: 1, kind: input, shape index: {}]
  %s2 = inlined_call_operand.hbm [shape: f32[1,8], index: 2, kind: input, shape index: {}]
  %s3 = inlined_call_operand.hbm [shape: f32[384,8], index: 3, kind: output, shape index: {}]
  %s4 = sld [smem:[#allocation0]]
  $region34: #{_lambda_.3} parent=0
    _
  %s6 = ssub.s32 1, %s4
  %s7 = scalar_select 0, %s6, %s4
  $region1: #{_lambda_.3} parent=0
    #allocation2 [shape = 'u8[196608]{0}', space=vmem, size = 0x30000, scoped, tag = 'input window, operand 0, single buffered']
    #allocation3 [shape = 's32[1]{0}', space=sflag, size = 0x4, scoped, tag = 'scoped memory for _lambda_.3']
    #allocation4 [shape = 's32[1]{0}', space=sflag, size = 0x4, scoped, tag = 'scoped memory for _lambda_.3']
    #allocation5 [shape = 'u8[4096]{0}', space=vmem, size = 0x1000, scoped, tag = 'input window, operand 1, single buffered']
    #allocation6 [shape = 's32[1]{0}', space=sflag, size = 0x4, scoped, tag = 'scoped memory for _lambda_.3']
    #allocation7 [shape = 'u8[512]{0}', space=vmem, size = 0x400, scoped, tag = 'input window, operand 2, single buffered']
    #allocation8 [shape = 'u8[196608]{0}', space=vmem, size = 0x30000, scoped, tag = 'output window, operand 0, single buffered']
    %8 = vsyncpa [#allocation3], 0
    %9 = vsyncpa [#allocation6], 0
    %10 = vsyncpa [#allocation4], 0
    // Predicated region
    $region2: #{_lambda_.3} parent=1 // pred_check
      _
    $region3: #{_lambda_.3} parent=1 // pred_check_branch
      %12 = sbr.rel (0) target = $region5
    $region4: #{_lambda_.3} parent=1 // pred_region
      %s14 = ssub.s32 6144, 6144
      %15 = vsyncadd [#allocation3], %s14
      %s16 = sshll.u32 [#allocation2], 4
      %s17 = int_to_ptr.vmem [resolvable:$true] %s16
      %22 = dma.hbm_to_vmem [thread:$0]  %s0, 6144, %s17, [#allocation3], 128, 128, 8
    $region5: #{_lambda_.3} parent=1 // pred_fallthru
      _
    // Predicated region
    $region6: #{_lambda_.3} parent=1 // pred_check
      _
    $region7: #{_lambda_.3} parent=1 // pred_check_branch
      %24 = sbr.rel (0) target = $region9
    $region8: #{_lambda_.3} parent=1 // pred_region
      %s26 = ssub.s32 128, 128
      %27 = vsyncadd [#allocation6], %s26
      %s29 = sshll.u32 [#allocation5], 4
      %s30 = int_to_ptr.vmem [resolvable:$true] %s29
      %32 = dma.hbm_to_vmem [thread:$0]  %s1, 128, %s30, [#allocation6]
    $region9: #{_lambda_.3} parent=1 // pred_fallthru
      _
    // Predicated region
    $region10: #{_lambda_.3} parent=1 // pred_check
      _
    $region11: #{_lambda_.3} parent=1 // pred_check_branch
      %34 = sbr.rel (0) target = $region13
    $region12: #{_lambda_.3} parent=1 // pred_region
      %s36 = ssub.s32 16, 16
      %37 = vsyncadd [#allocation6], %s36
      %s39 = sshll.u32 [#allocation7], 4
      %s40 = int_to_ptr.vmem [resolvable:$true] %s39
      %42 = dma.hbm_to_vmem [thread:$0]  %s2, 16, %s40, [#allocation6]
    $region13: #{_lambda_.3} parent=1 // pred_fallthru
      _
    // Predicated region
    $region14: #{_lambda_.3} parent=1 // pred_check
      _
    $region15: #{_lambda_.3} parent=1 // pred_check_branch
      %44 = sbr.rel (0) target = $region17
    $region16: #{_lambda_.3} parent=1 // pred_region
      %45 = dma.done [#allocation3], 6144
    $region17: #{_lambda_.3} parent=1 // pred_fallthru
      _
    // Predicated region
    $region18: #{_lambda_.3} parent=1 // pred_check
      _
    $region19: #{_lambda_.3} parent=1 // pred_check_branch
      %47 = sbr.rel (0) target = $region21
    $region20: #{_lambda_.3} parent=1 // pred_region
      %48 = dma.done [#allocation6], 128
    $region21: #{_lambda_.3} parent=1 // pred_fallthru
      _
    // Predicated region
    $region22: #{_lambda_.3} parent=1 // pred_check
      _
    $region23: #{_lambda_.3} parent=1 // pred_check_branch
      %50 = sbr.rel (0) target = $region25
    $region24: #{_lambda_.3} parent=1 // pred_region
      %51 = dma.done [#allocation6], 16
    $region25: #{_lambda_.3} parent=1 // pred_fallthru
      _
    %v52 = vld [vmem:[#allocation2] sm:$0xff]
    %v53 = vld [vmem:[#allocation2 + $0x8] sm:$0xff]
    %v54 = vld [vmem:[#allocation2 + $0x10] sm:$0xff]
    %v55 = vld [vmem:[#allocation2 + $0x18] sm:$0xff]
    %v56 = vld [vmem:[#allocation2 + $0x20] sm:$0xff]
    %v57 = vld [vmem:[#allocation2 + $0x28] sm:$0xff]
    %v58 = vld [vmem:[#allocation2 + $0x30] sm:$0xff]
    %v59 = vld [vmem:[#allocation2 + $0x38] sm:$0xff]
    %v60 = vld [vmem:[#allocation2 + $0x40] sm:$0xff]
    %v61 = vld [vmem:[#allocation2 + $0x48] sm:$0xff]
    %v62 = vld [vmem:[#allocation2 + $0x50] sm:$0xff]
    %v63 = vld [vmem:[#allocation2 + $0x58] sm:$0xff]
    %v64 = vld [vmem:[#allocation2 + $0x60] sm:$0xff]
    %v65 = vld [vmem:[#allocation2 + $0x68] sm:$0xff]
    %v66 = vld [vmem:[#allocation2 + $0x70] sm:$0xff]
    %v67 = vld [vmem:[#allocation2 + $0x78] sm:$0xff]
    %v68 = vld [vmem:[#allocation2 + $0x80] sm:$0xff]
    %v69 = vld [vmem:[#allocation2 + $0x88] sm:$0xff]
    %v70 = vld [vmem:[#allocation2 + $0x90] sm:$0xff]
    %v71 = vld [vmem:[#allocation2 + $0x98] sm:$0xff]
    %v72 = vld [vmem:[#allocation2 + $0xa0] sm:$0xff]
    %v73 = vld [vmem:[#allocation2 + $0xa8] sm:$0xff]
    %v74 = vld [vmem:[#allocation2 + $0xb0] sm:$0xff]
    %v75 = vld [vmem:[#allocation2 + $0xb8] sm:$0xff]
    %v76 = vld [vmem:[#allocation2 + $0xc0] sm:$0xff]
    %v77 = vld [vmem:[#allocation2 + $0xc8] sm:$0xff]
    %v78 = vld [vmem:[#allocation2 + $0xd0] sm:$0xff]
    %v79 = vld [vmem:[#allocation2 + $0xd8] sm:$0xff]
    %v80 = vld [vmem:[#allocation2 + $0xe0] sm:$0xff]
    %v81 = vld [vmem:[#allocation2 + $0xe8] sm:$0xff]
    %v82 = vld [vmem:[#allocation2 + $0xf0] sm:$0xff]
    %v83 = vld [vmem:[#allocation2 + $0xf8] sm:$0xff]
    %v84 = vld [vmem:[#allocation2 + $0x100] sm:$0xff]
    %v85 = vld [vmem:[#allocation2 + $0x108] sm:$0xff]
    %v86 = vld [vmem:[#allocation2 + $0x110] sm:$0xff]
    %v87 = vld [vmem:[#allocation2 + $0x118] sm:$0xff]
    %v88 = vld [vmem:[#allocation2 + $0x120] sm:$0xff]
    %v89 = vld [vmem:[#allocation2 + $0x128] sm:$0xff]
    %v90 = vld [vmem:[#allocation2 + $0x130] sm:$0xff]
    %v91 = vld [vmem:[#allocation2 + $0x138] sm:$0xff]
    %v92 = vld [vmem:[#allocation2 + $0x140] sm:$0xff]
    %v93 = vld [vmem:[#allocation2 + $0x148] sm:$0xff]
    %v94 = vld [vmem:[#allocation2 + $0x150] sm:$0xff]
    %v95 = vld [vmem:[#allocation2 + $0x158] sm:$0xff]
    %v96 = vld [vmem:[#allocation2 + $0x160] sm:$0xff]
    %v97 = vld [vmem:[#allocation2 + $0x168] sm:$0xff]
    %v98 = vld [vmem:[#allocation2 + $0x170] sm:$0xff]
    %v99 = vld [vmem:[#allocation2 + $0x178] sm:$0xff]
    %v100 = vld [vmem:[#allocation5] sm:$0xff]
    %v101 = vld [vmem:[#allocation7] sm:$0x1]
    %v103 = vlaneseq
    %v104 = vshrl.u32 %v103, 7
    %v105 = vsub.s32 0, %v104
    %v106 = vrot.slane %v101, %v105
    %vm108 = vcmask 64512
    %v110 = vsel %vm108, %v52, 0
    %v113 = vsel %vm108, %v53, 0
    %v116 = vsel %vm108, %v54, 0
    %v119 = vsel %vm108, %v55, 0
    %v122 = vsel %vm108, %v56, 0
    %v125 = vsel %vm108, %v57, 0
    %v128 = vsel %vm108, %v58, 0
    %v131 = vsel %vm108, %v59, 0
    %v134 = vsel %vm108, %v60, 0
    %v137 = vsel %vm108, %v61, 0
    %v140 = vsel %vm108, %v62, 0
    %v143 = vsel %vm108, %v63, 0
    %v146 = vsel %vm108, %v64, 0
    %v149 = vsel %vm108, %v65, 0
    %v152 = vsel %vm108, %v66, 0
    %v155 = vsel %vm108, %v67, 0
    %v158 = vsel %vm108, %v68, 0
    %v161 = vsel %vm108, %v69, 0
    %v164 = vsel %vm108, %v70, 0
    %v167 = vsel %vm108, %v71, 0
    %v170 = vsel %vm108, %v72, 0
    %v173 = vsel %vm108, %v73, 0
    %v176 = vsel %vm108, %v74, 0
    %v179 = vsel %vm108, %v75, 0
    %v182 = vsel %vm108, %v76, 0
    %v185 = vsel %vm108, %v77, 0
    %v188 = vsel %vm108, %v78, 0
    %v191 = vsel %vm108, %v79, 0
    %v194 = vsel %vm108, %v80, 0
    %v197 = vsel %vm108, %v81, 0
    %v200 = vsel %vm108, %v82, 0
    %v203 = vsel %vm108, %v83, 0
    %v206 = vsel %vm108, %v84, 0
    %v209 = vsel %vm108, %v85, 0
    %v212 = vsel %vm108, %v86, 0
    %v215 = vsel %vm108, %v87, 0
    %v218 = vsel %vm108, %v88, 0
    %v221 = vsel %vm108, %v89, 0
    %v224 = vsel %vm108, %v90, 0
    %v227 = vsel %vm108, %v91, 0
    %v230 = vsel %vm108, %v92, 0
    %v233 = vsel %vm108, %v93, 0
    %v236 = vsel %vm108, %v94, 0
    %v239 = vsel %vm108, %v95, 0
    %v242 = vsel %vm108, %v96, 0
    %v245 = vsel %vm108, %v97, 0
    %v248 = vsel %vm108, %v98, 0
    %v251 = vsel %vm108, %v99, 0
    %253 = vmatprep.subr.mxu0 0.0
    %254 = vmatpush1.msra.mxu0 %v100
    %255 = vmatprep.subr.mxu0 0.0
    %256 = vmatpush1.msra.mxu0 0.0
    %257 = vmatprep.subr.mxu0 0.0
    %258 = vmatpush1.msra.mxu0 0.0
    %259 = vmatprep.subr.mxu0 0.0
    %260 = vmatpush1.msra.mxu0 0.0
    %261 = vmatprep.subr.mxu0 0.0
    %262 = vmatpush1.msra.mxu0 0.0
    %263 = vmatprep.subr.mxu0 0.0
    %264 = vmatpush1.msra.mxu0 0.0
    %265 = vmatprep.subr.mxu0 0.0
    %266 = vmatpush1.msra.mxu0 0.0
    %267 = vmatprep.subr.mxu0 0.0
    %268 = vmatpush1.msra.mxu0 0.0
    %269 = vmatprep.subr.mxu0 0.0
    %270 = vmatpush1.msra.mxu0 0.0
    %271 = vmatprep.subr.mxu0 0.0
    %272 = vmatpush1.msra.mxu0 0.0
    %273 = vmatprep.subr.mxu0 0.0
    %274 = vmatpush1.msra.mxu0 0.0
    %275 = vmatprep.subr.mxu0 0.0
    %276 = vmatpush1.msra.mxu0 0.0
    %277 = vmatprep.subr.mxu0 0.0
    %278 = vmatpush1.msra.mxu0 0.0
    %279 = vmatprep.subr.mxu0 0.0
    %280 = vmatpush1.msra.mxu0 0.0
    %281 = vmatprep.subr.mxu0 0.0
    %282 = vmatpush1.msra.mxu0 0.0
    %283 = vmatprep.subr.mxu0 0.0
    %284 = vmatpush1.msra.mxu0 0.0
    %285 = vmatprep.subr.mxu0 0.0
    %286 = vmatpush1.msra.mxu0 0.0
    %287 = vmatprep.subr.mxu0 0.0
    %288 = vmatpush1.msra.mxu0 0.0
    %289 = vmatprep.subr.mxu0 0.0
    %290 = vmatpush1.msra.mxu0 0.0
    %291 = vmatprep.subr.mxu0 0.0
    %292 = vmatpush1.msra.mxu0 0.0
    %293 = vmatprep.subr.mxu0 0.0
    %294 = vmatpush1.msra.mxu0 0.0
    %295 = vmatprep.subr.mxu0 0.0
    %296 = vmatpush1.msra.mxu0 0.0
    %297 = vmatprep.subr.mxu0 0.0
    %298 = vmatpush1.msra.mxu0 0.0
    %299 = vmatprep.subr.mxu0 0.0
    %300 = vmatpush1.msra.mxu0 0.0
    %301 = vmatprep.subr.mxu0 0.0
    %302 = vmatpush1.msra.mxu0 0.0
    %303 = vmatprep.subr.mxu0 0.0
    %304 = vmatpush1.msra.mxu0 0.0
    %305 = vmatprep.subr.mxu0 0.0
    %306 = vmatpush1.msra.mxu0 0.0
    %307 = vmatprep.subr.mxu0 0.0
    %308 = vmatpush1.msra.mxu0 0.0
    %309 = vmatprep.subr.mxu0 0.0
    %310 = vmatpush1.msra.mxu0 0.0
    %311 = vmatprep.subr.mxu0 0.0
    %312 = vmatpush1.msra.mxu0 0.0
    %313 = vmatprep.subr.mxu0 0.0
    %314 = vmatpush1.msra.mxu0 0.0
    %315 = vmatprep.subr.mxu0 0.0
    %316 = vmatpush1.msra.mxu0 0.0
    %317 = vmatprep.mubr.f32.mxu0 0.0
    %318 = vmatmul.mubr.f32.gmra.mrb[0].mxu0 %v110
    %v319 = vpop.f32.mrb[0].mxu0
    %v320 = vadd.f32 %v106, %v319
    %v321 = vpop.f32.mrb[0].mxu0
    %322 = vmatprep.mubr.f32.mxu0 0.0
    %323 = vmatmul.mubr.f32.gmra.mrb[0].mxu0 %v113
    %v324 = vpop.f32.mrb[0].mxu0
    %v325 = vadd.f32 %v106, %v324
    %v326 = vpop.f32.mrb[0].mxu0
    %327 = vmatprep.mubr.f32.mxu0 0.0
    %328 = vmatmul.mubr.f32.gmra.mrb[0].mxu0 %v116
    %v329 = vpop.f32.mrb[0].mxu0
    %v330 = vadd.f32 %v106, %v329
    %v331 = vpop.f32.mrb[0].mxu0
    %332 = vmatprep.mubr.f32.mxu0 0.0
    %333 = vmatmul.mubr.f32.gmra.mrb[0].mxu0 %v119
    %v334 = vpop.f32.mrb[0].mxu0
    %v335 = vadd.f32 %v106, %v334
    %v336 = vpop.f32.mrb[0].mxu0
    %337 = vmatprep.mubr.f32.mxu0 0.0
    %338 = vmatmul.mubr.f32.gmra.mrb[0].mxu0 %v122
    %v339 = vpop.f32.mrb[0].mxu0
    %v340 = vadd.f32 %v106, %v339
    %v341 = vpop.f32.mrb[0].mxu0
    %342 = vmatprep.mubr.f32.mxu0 0.0
    %343 = vmatmul.mubr.f32.gmra.mrb[0].mxu0 %v125
    %v344 = vpop.f32.mrb[0].mxu0
    %v345 = vadd.f32 %v106, %v344
    %v346 = vpop.f32.mrb[0].mxu0
    %347 = vmatprep.mubr.f32.mxu0 0.0
    %348 = vmatmul.mubr.f32.gmra.mrb[0].mxu0 %v128
    %v349 = vpop.f32.mrb[0].mxu0
    %v350 = vadd.f32 %v106, %v349
    %v351 = vpop.f32.mrb[0].mxu0
    %352 = vmatprep.mubr.f32.mxu0 0.0
    %353 = vmatmul.mubr.f32.gmra.mrb[0].mxu0 %v131
    %v354 = vpop.f32.mrb[0].mxu0
    %v355 = vadd.f32 %v106, %v354
    %v356 = vpop.f32.mrb[0].mxu0
    %357 = vmatprep.mubr.f32.mxu0 0.0
    %358 = vmatmul.mubr.f32.gmra.mrb[0].mxu0 %v134
    %v359 = vpop.f32.mrb[0].mxu0
    %v360 = vadd.f32 %v106, %v359
    %v361 = vpop.f32.mrb[0].mxu0
    %362 = vmatprep.mubr.f32.mxu0 0.0
    %363 = vmatmul.mubr.f32.gmra.mrb[0].mxu0 %v137
    %v364 = vpop.f32.mrb[0].mxu0
    %v365 = vadd.f32 %v106, %v364
    %v366 = vpop.f32.mrb[0].mxu0
    %367 = vmatprep.mubr.f32.mxu0 0.0
    %368 = vmatmul.mubr.f32.gmra.mrb[0].mxu0 %v140
    %v369 = vpop.f32.mrb[0].mxu0
    %v370 = vadd.f32 %v106, %v369
    %v371 = vpop.f32.mrb[0].mxu0
    %372 = vmatprep.mubr.f32.mxu0 0.0
    %373 = vmatmul.mubr.f32.gmra.mrb[0].mxu0 %v143
    %v374 = vpop.f32.mrb[0].mxu0
    %v375 = vadd.f32 %v106, %v374
    %v376 = vpop.f32.mrb[0].mxu0
    %377 = vmatprep.mubr.f32.mxu0 0.0
    %378 = vmatmul.mubr.f32.gmra.mrb[0].mxu0 %v146
    %v379 = vpop.f32.mrb[0].mxu0
    %v380 = vadd.f32 %v106, %v379
    %v381 = vpop.f32.mrb[0].mxu0
    %382 = vmatprep.mubr.f32.mxu0 0.0
    %383 = vmatmul.mubr.f32.gmra.mrb[0].mxu0 %v149
    %v384 = vpop.f32.mrb[0].mxu0
    %v385 = vadd.f32 %v106, %v384
    %v386 = vpop.f32.mrb[0].mxu0
    %387 = vmatprep.mubr.f32.mxu0 0.0
    %388 = vmatmul.mubr.f32.gmra.mrb[0].mxu0 %v152
    %v389 = vpop.f32.mrb[0].mxu0
    %v390 = vadd.f32 %v106, %v389
    %v391 = vpop.f32.mrb[0].mxu0
    %392 = vmatprep.mubr.f32.mxu0 0.0
    %393 = vmatmul.mubr.f32.gmra.mrb[0].mxu0 %v155
    %v394 = vpop.f32.mrb[0].mxu0
    %v395 = vadd.f32 %v106, %v394
    %v396 = vpop.f32.mrb[0].mxu0
    %397 = vmatprep.mubr.f32.mxu0 0.0
    %398 = vmatmul.mubr.f32.gmra.mrb[0].mxu0 %v158
    %v399 = vpop.f32.mrb[0].mxu0
    %v400 = vadd.f32 %v106, %v399
    %v401 = vpop.f32.mrb[0].mxu0
    %402 = vmatprep.mubr.f32.mxu0 0.0
    %403 = vmatmul.mubr.f32.gmra.mrb[0].mxu0 %v161
    %v404 = vpop.f32.mrb[0].mxu0
    %v405 = vadd.f32 %v106, %v404
    %v406 = vpop.f32.mrb[0].mxu0
    %407 = vmatprep.mubr.f32.mxu0 0.0
    %408 = vmatmul.mubr.f32.gmra.mrb[0].mxu0 %v164
    %v409 = vpop.f32.mrb[0].mxu0
    %v410 = vadd.f32 %v106, %v409
    %v411 = vpop.f32.mrb[0].mxu0
    %412 = vmatprep.mubr.f32.mxu0 0.0
    %413 = vmatmul.mubr.f32.gmra.mrb[0].mxu0 %v167
    %v414 = vpop.f32.mrb[0].mxu0
    %v415 = vadd.f32 %v106, %v414
    %v416 = vpop.f32.mrb[0].mxu0
    %417 = vmatprep.mubr.f32.mxu0 0.0
    %418 = vmatmul.mubr.f32.gmra.mrb[0].mxu0 %v170
    %v419 = vpop.f32.mrb[0].mxu0
    %v420 = vadd.f32 %v106, %v419
    %v421 = vpop.f32.mrb[0].mxu0
    %422 = vmatprep.mubr.f32.mxu0 0.0
    %423 = vmatmul.mubr.f32.gmra.mrb[0].mxu0 %v173
    %v424 = vpop.f32.mrb[0].mxu0
    %v425 = vadd.f32 %v106, %v424
    %v426 = vpop.f32.mrb[0].mxu0
    %427 = vmatprep.mubr.f32.mxu0 0.0
    %428 = vmatmul.mubr.f32.gmra.mrb[0].mxu0 %v176
    %v429 = vpop.f32.mrb[0].mxu0
    %v430 = vadd.f32 %v106, %v429
    %v431 = vpop.f32.mrb[0].mxu0
    %432 = vmatprep.mubr.f32.mxu0 0.0
    %433 = vmatmul.mubr.f32.gmra.mrb[0].mxu0 %v179
    %v434 = vpop.f32.mrb[0].mxu0
    %v435 = vadd.f32 %v106, %v434
    %v436 = vpop.f32.mrb[0].mxu0
    %437 = vmatprep.mubr.f32.mxu0 0.0
    %438 = vmatmul.mubr.f32.gmra.mrb[0].mxu0 %v182
    %v439 = vpop.f32.mrb[0].mxu0
    %v440 = vadd.f32 %v106, %v439
    %v441 = vpop.f32.mrb[0].mxu0
    %442 = vmatprep.mubr.f32.mxu0 0.0
    %443 = vmatmul.mubr.f32.gmra.mrb[0].mxu0 %v185
    %v444 = vpop.f32.mrb[0].mxu0
    %v445 = vadd.f32 %v106, %v444
    %v446 = vpop.f32.mrb[0].mxu0
    %447 = vmatprep.mubr.f32.mxu0 0.0
    %448 = vmatmul.mubr.f32.gmra.mrb[0].mxu0 %v188
    %v449 = vpop.f32.mrb[0].mxu0
    %v450 = vadd.f32 %v106, %v449
    %v451 = vpop.f32.mrb[0].mxu0
    %452 = vmatprep.mubr.f32.mxu0 0.0
    %453 = vmatmul.mubr.f32.gmra.mrb[0].mxu0 %v191
    %v454 = vpop.f32.mrb[0].mxu0
    %v455 = vadd.f32 %v106, %v454
    %v456 = vpop.f32.mrb[0].mxu0
    %457 = vmatprep.mubr.f32.mxu0 0.0
    %458 = vmatmul.mubr.f32.gmra.mrb[0].mxu0 %v194
    %v459 = vpop.f32.mrb[0].mxu0
    %v460 = vadd.f32 %v106, %v459
    %v461 = vpop.f32.mrb[0].mxu0
    %462 = vmatprep.mubr.f32.mxu0 0.0
    %463 = vmatmul.mubr.f32.gmra.mrb[0].mxu0 %v197
    %v464 = vpop.f32.mrb[0].mxu0
    %v465 = vadd.f32 %v106, %v464
    %v466 = vpop.f32.mrb[0].mxu0
    %467 = vmatprep.mubr.f32.mxu0 0.0
    %468 = vmatmul.mubr.f32.gmra.mrb[0].mxu0 %v200
    %v469 = vpop.f32.mrb[0].mxu0
    %v470 = vadd.f32 %v106, %v469
    %v471 = vpop.f32.mrb[0].mxu0
    %472 = vmatprep.mubr.f32.mxu0 0.0
    %473 = vmatmul.mubr.f32.gmra.mrb[0].mxu0 %v203
    %v474 = vpop.f32.mrb[0].mxu0
    %v475 = vadd.f32 %v106, %v474
    %v476 = vpop.f32.mrb[0].mxu0
    %477 = vmatprep.mubr.f32.mxu0 0.0
    %478 = vmatmul.mubr.f32.gmra.mrb[0].mxu0 %v206
    %v479 = vpop.f32.mrb[0].mxu0
    %v480 = vadd.f32 %v106, %v479
    %v481 = vpop.f32.mrb[0].mxu0
    %482 = vmatprep.mubr.f32.mxu0 0.0
    %483 = vmatmul.mubr.f32.gmra.mrb[0].mxu0 %v209
    %v484 = vpop.f32.mrb[0].mxu0
    %v485 = vadd.f32 %v106, %v484
    %v486 = vpop.f32.mrb[0].mxu0
    %487 = vmatprep.mubr.f32.mxu0 0.0
    %488 = vmatmul.mubr.f32.gmra.mrb[0].mxu0 %v212
    %v489 = vpop.f32.mrb[0].mxu0
    %v490 = vadd.f32 %v106, %v489
    %v491 = vpop.f32.mrb[0].mxu0
    %492 = vmatprep.mubr.f32.mxu0 0.0
    %493 = vmatmul.mubr.f32.gmra.mrb[0].mxu0 %v215
    %v494 = vpop.f32.mrb[0].mxu0
    %v495 = vadd.f32 %v106, %v494
    %v496 = vpop.f32.mrb[0].mxu0
    %497 = vmatprep.mubr.f32.mxu0 0.0
    %498 = vmatmul.mubr.f32.gmra.mrb[0].mxu0 %v218
    %v499 = vpop.f32.mrb[0].mxu0
    %v500 = vadd.f32 %v106, %v499
    %v501 = vpop.f32.mrb[0].mxu0
    %502 = vmatprep.mubr.f32.mxu0 0.0
    %503 = vmatmul.mubr.f32.gmra.mrb[0].mxu0 %v221
    %v504 = vpop.f32.mrb[0].mxu0
    %v505 = vadd.f32 %v106, %v504
    %v506 = vpop.f32.mrb[0].mxu0
    %507 = vmatprep.mubr.f32.mxu0 0.0
    %508 = vmatmul.mubr.f32.gmra.mrb[0].mxu0 %v224
    %v509 = vpop.f32.mrb[0].mxu0
    %v510 = vadd.f32 %v106, %v509
    %v511 = vpop.f32.mrb[0].mxu0
    %512 = vmatprep.mubr.f32.mxu0 0.0
    %513 = vmatmul.mubr.f32.gmra.mrb[0].mxu0 %v227
    %v514 = vpop.f32.mrb[0].mxu0
    %v515 = vadd.f32 %v106, %v514
    %v516 = vpop.f32.mrb[0].mxu0
    %517 = vmatprep.mubr.f32.mxu0 0.0
    %518 = vmatmul.mubr.f32.gmra.mrb[0].mxu0 %v230
    %v519 = vpop.f32.mrb[0].mxu0
    %v520 = vadd.f32 %v106, %v519
    %v521 = vpop.f32.mrb[0].mxu0
    %522 = vmatprep.mubr.f32.mxu0 0.0
    %523 = vmatmul.mubr.f32.gmra.mrb[0].mxu0 %v233
    %v524 = vpop.f32.mrb[0].mxu0
    %v525 = vadd.f32 %v106, %v524
    %v526 = vpop.f32.mrb[0].mxu0
    %527 = vmatprep.mubr.f32.mxu0 0.0
    %528 = vmatmul.mubr.f32.gmra.mrb[0].mxu0 %v236
    %v529 = vpop.f32.mrb[0].mxu0
    %v530 = vadd.f32 %v106, %v529
    %v531 = vpop.f32.mrb[0].mxu0
    %532 = vmatprep.mubr.f32.mxu0 0.0
    %533 = vmatmul.mubr.f32.gmra.mrb[0].mxu0 %v239
    %v534 = vpop.f32.mrb[0].mxu0
    %v535 = vadd.f32 %v106, %v534
    %v536 = vpop.f32.mrb[0].mxu0
    %537 = vmatprep.mubr.f32.mxu0 0.0
    %538 = vmatmul.mubr.f32.gmra.mrb[0].mxu0 %v242
    %v539 = vpop.f32.mrb[0].mxu0
    %v540 = vadd.f32 %v106, %v539
    %v541 = vpop.f32.mrb[0].mxu0
    %542 = vmatprep.mubr.f32.mxu0 0.0
    %543 = vmatmul.mubr.f32.gmra.mrb[0].mxu0 %v245
    %v544 = vpop.f32.mrb[0].mxu0
    %v545 = vadd.f32 %v106, %v544
    %v546 = vpop.f32.mrb[0].mxu0
    %547 = vmatprep.mubr.f32.mxu0 0.0
    %548 = vmatmul.mubr.f32.gmra.mrb[0].mxu0 %v248
    %v549 = vpop.f32.mrb[0].mxu0
    %v550 = vadd.f32 %v106, %v549
    %v551 = vpop.f32.mrb[0].mxu0
    %552 = vmatprep.mubr.f32.mxu0 0.0
    %553 = vmatmul.mubr.f32.gmra.mrb[0].mxu0 %v251
    %v554 = vpop.f32.mrb[0].mxu0
    %v555 = vadd.f32 %v106, %v554
    %v556 = vpop.f32.mrb[0].mxu0
    %557 = vdwg.mxu0
    %558 = vst.msk [vmem:[#allocation8] sm:$0xff] %vm108, %v320
    %559 = vst.msk [vmem:[#allocation8 + $0x8] sm:$0xff] %vm108, %v325
    %560 = vst.msk [vmem:[#allocation8 + $0x10] sm:$0xff] %vm108, %v330
    %561 = vst.msk [vmem:[#allocation8 + $0x18] sm:$0xff] %vm108, %v335
    %562 = vst.msk [vmem:[#allocation8 + $0x20] sm:$0xff] %vm108, %v340
    %563 = vst.msk [vmem:[#allocation8 + $0x28] sm:$0xff] %vm108, %v345
    %564 = vst.msk [vmem:[#allocation8 + $0x30] sm:$0xff] %vm108, %v350
    %565 = vst.msk [vmem:[#allocation8 + $0x38] sm:$0xff] %vm108, %v355
    %566 = vst.msk [vmem:[#allocation8 + $0x40] sm:$0xff] %vm108, %v360
    %567 = vst.msk [vmem:[#allocation8 + $0x48] sm:$0xff] %vm108, %v365
    %568 = vst.msk [vmem:[#allocation8 + $0x50] sm:$0xff] %vm108, %v370
    %569 = vst.msk [vmem:[#allocation8 + $0x58] sm:$0xff] %vm108, %v375
    %570 = vst.msk [vmem:[#allocation8 + $0x60] sm:$0xff] %vm108, %v380
    %571 = vst.msk [vmem:[#allocation8 + $0x68] sm:$0xff] %vm108, %v385
    %572 = vst.msk [vmem:[#allocation8 + $0x70] sm:$0xff] %vm108, %v390
    %573 = vst.msk [vmem:[#allocation8 + $0x78] sm:$0xff] %vm108, %v395
    %574 = vst.msk [vmem:[#allocation8 + $0x80] sm:$0xff] %vm108, %v400
    %575 = vst.msk [vmem:[#allocation8 + $0x88] sm:$0xff] %vm108, %v405
    %576 = vst.msk [vmem:[#allocation8 + $0x90] sm:$0xff] %vm108, %v410
    %577 = vst.msk [vmem:[#allocation8 + $0x98] sm:$0xff] %vm108, %v415
    %578 = vst.msk [vmem:[#allocation8 + $0xa0] sm:$0xff] %vm108, %v420
    %579 = vst.msk [vmem:[#allocation8 + $0xa8] sm:$0xff] %vm108, %v425
    %580 = vst.msk [vmem:[#allocation8 + $0xb0] sm:$0xff] %vm108, %v430
    %581 = vst.msk [vmem:[#allocation8 + $0xb8] sm:$0xff] %vm108, %v435
    %582 = vst.msk [vmem:[#allocation8 + $0xc0] sm:$0xff] %vm108, %v440
    %583 = vst.msk [vmem:[#allocation8 + $0xc8] sm:$0xff] %vm108, %v445
    %584 = vst.msk [vmem:[#allocation8 + $0xd0] sm:$0xff] %vm108, %v450
    %585 = vst.msk [vmem:[#allocation8 + $0xd8] sm:$0xff] %vm108, %v455
    %586 = vst.msk [vmem:[#allocation8 + $0xe0] sm:$0xff] %vm108, %v460
    %587 = vst.msk [vmem:[#allocation8 + $0xe8] sm:$0xff] %vm108, %v465
    %588 = vst.msk [vmem:[#allocation8 + $0xf0] sm:$0xff] %vm108, %v470
    %589 = vst.msk [vmem:[#allocation8 + $0xf8] sm:$0xff] %vm108, %v475
    %590 = vst.msk [vmem:[#allocation8 + $0x100] sm:$0xff] %vm108, %v480
    %591 = vst.msk [vmem:[#allocation8 + $0x108] sm:$0xff] %vm108, %v485
    %592 = vst.msk [vmem:[#allocation8 + $0x110] sm:$0xff] %vm108, %v490
    %593 = vst.msk [vmem:[#allocation8 + $0x118] sm:$0xff] %vm108, %v495
    %594 = vst.msk [vmem:[#allocation8 + $0x120] sm:$0xff] %vm108, %v500
    %595 = vst.msk [vmem:[#allocation8 + $0x128] sm:$0xff] %vm108, %v505
    %596 = vst.msk [vmem:[#allocation8 + $0x130] sm:$0xff] %vm108, %v510
    %597 = vst.msk [vmem:[#allocation8 + $0x138] sm:$0xff] %vm108, %v515
    %598 = vst.msk [vmem:[#allocation8 + $0x140] sm:$0xff] %vm108, %v520
    %599 = vst.msk [vmem:[#allocation8 + $0x148] sm:$0xff] %vm108, %v525
    %600 = vst.msk [vmem:[#allocation8 + $0x150] sm:$0xff] %vm108, %v530
    %601 = vst.msk [vmem:[#allocation8 + $0x158] sm:$0xff] %vm108, %v535
    %602 = vst.msk [vmem:[#allocation8 + $0x160] sm:$0xff] %vm108, %v540
    %603 = vst.msk [vmem:[#allocation8 + $0x168] sm:$0xff] %vm108, %v545
    %604 = vst.msk [vmem:[#allocation8 + $0x170] sm:$0xff] %vm108, %v550
    %605 = vst.msk [vmem:[#allocation8 + $0x178] sm:$0xff] %vm108, %v555
    // Predicated region
    $region26: #{_lambda_.3} parent=1 // pred_check
      _
    $region27: #{_lambda_.3} parent=1 // pred_check_branch
      %607 = sbr.rel (0) target = $region29
    $region28: #{_lambda_.3} parent=1 // pred_region
      %s609 = ssub.s32 6144, 6144
      %610 = vsyncadd [#allocation4], %s609
      %s611 = sshll.u32 [#allocation8], 4
      %s612 = int_to_ptr.vmem [resolvable:$true] %s611
      %617 = dma.vmem_to_hbm [thread:$0]  %s612, 6144, %s3, [#allocation4], 128, 128, 8
    $region29: #{_lambda_.3} parent=1 // pred_fallthru
      _
    // Predicated region
    $region30: #{_lambda_.3} parent=1 // pred_check
      _
    $region31: #{_lambda_.3} parent=1 // pred_check_branch
      %619 = sbr.rel (0) target = $region33
    $region32: #{_lambda_.3} parent=1 // pred_region
      %620 = dma.done [#allocation4], 6144
    $region33: #{_lambda_.3} parent=1 // pred_fallthru
      _
    %621 = vsyncpa [#allocation3], 1
    %622 = vsyncpa [#allocation6], 1
    %623 = vsyncpa [#allocation4], 1

// kernel: _lambda_.5
$region0: #{_lambda_.5}
  #allocation0 [shape = 'u32[]', space=smem, size = 0x4, offset = 0x4, fixed_abs, tag = 'smem constant byte address 0x4 - core index']
  #allocation1 [shape = 'u32[144,128]{1,0:T(1,128)}', space=vmem, size = 0x12000, scoped, tag = 'internal scratch']
  #allocation2 [shape = 's32[1]{0}', space=sflag, size = 0x4, scoped, tag = 'scoped memory for _lambda_.5']
  #allocation3 [shape = 'u8[1024]{0}', space=smem, size = 0x400, scoped, tag = 'prefetched SMEM operand 0']
  %s0 = inlined_call_operand.hbm [shape: s32[2,3], index: 0, kind: input, shape index: {}]
  %s1 = inlined_call_operand.hbm [shape: f32[2,3,64,4], index: 1, kind: input, shape index: {}, may-alias: {1,2}]
  %s2 = inlined_call_operand.hbm [shape: f32[2,3,64,4], index: 2, kind: input, shape index: {}, may-alias: {1,2}]
  %s3 = inlined_call_operand.hbm [shape: f32[2,3,64,4], index: 3, kind: input, shape index: {}]
  %s4 = inlined_call_operand.hbm [shape: f32[2,3,64,8], index: 4, kind: input, shape index: {}]
  %s5 = inlined_call_operand.hbm [shape: f32[4,8], index: 5, kind: input, shape index: {}]
  %s6 = inlined_call_operand.hbm [shape: f32[1,8], index: 6, kind: input, shape index: {}]
  %s7 = inlined_call_operand.hbm [shape: f32[8,8], index: 7, kind: input, shape index: {}]
  %s8 = inlined_call_operand.hbm [shape: f32[8,8], index: 8, kind: input, shape index: {}]
  %s9 = inlined_call_operand.hbm [shape: f32[1,8], index: 9, kind: input, shape index: {}]
  %s10 = inlined_call_operand.hbm [shape: f32[2,2,64,8], index: 10, kind: output, shape index: {}]
  %s11 = sld [smem:[#allocation0]]
  $region105: #{_lambda_.5} parent=0
    _
  %s13 = ssub.s32 1, %s11
  %s14 = scalar_select 0, %s13, %s11
  %16 = dma.hbm_to_smem %s0, 32, [#allocation3], [#allocation2]
  %17 = dma.done [#allocation2], 32
  %18 = sfence
  $region1: #{_lambda_.5} parent=0
    #allocation4 [shape = 'u8[65536]{0}', space=vmem, size = 0x10000, scoped, tag = 'input window, operand 1']
    #allocation5 [shape = 's32[2]{0}', space=sflag, size = 0x8, scoped, tag = 'scoped memory for _lambda_.5']
    #allocation6 [shape = 's32[2]{0}', space=sflag, size = 0x8, scoped, tag = 'scoped memory for _lambda_.5']
    #allocation7 [shape = 'u8[196608]{0}', space=vmem, size = 0x30000, scoped, tag = 'input window, operand 2']
    #allocation8 [shape = 's32[2]{0}', space=sflag, size = 0x8, scoped, tag = 'scoped memory for _lambda_.5']
    #allocation9 [shape = 'u8[196608]{0}', space=vmem, size = 0x30000, scoped, tag = 'input window, operand 3']
    #allocation10 [shape = 'u8[65536]{0}', space=vmem, size = 0x10000, scoped, tag = 'input window, operand 4']
    #allocation11 [shape = 's32[2]{0}', space=sflag, size = 0x8, scoped, tag = 'scoped memory for _lambda_.5']
    #allocation12 [shape = 'u8[2048]{0}', space=vmem, size = 0x800, scoped, tag = 'input window, operand 5, single buffered']
    #allocation13 [shape = 'u8[512]{0}', space=vmem, size = 0x400, scoped, tag = 'input window, operand 6, single buffered']
    #allocation14 [shape = 's32[1]{0}', space=sflag, size = 0x4, scoped, tag = 'scoped memory for _lambda_.5']
    #allocation15 [shape = 'u8[4096]{0}', space=vmem, size = 0x1000, scoped, tag = 'input window, operand 7, single buffered']
    #allocation16 [shape = 'u8[4096]{0}', space=vmem, size = 0x1000, scoped, tag = 'input window, operand 8, single buffered']
    #allocation17 [shape = 's32[1]{0}', space=sflag, size = 0x4, scoped, tag = 'scoped memory for _lambda_.5']
    #allocation18 [shape = 'u8[512]{0}', space=vmem, size = 0x400, scoped, tag = 'input window, operand 9, single buffered']
    #allocation19 [shape = 'u8[65536]{0}', space=vmem, size = 0x10000, scoped, tag = 'output window, operand 0']
    %19 = vsyncpa [#allocation5], 0
    %s20 = scalar_lea.sflag [#allocation5], 1
    %21 = vsyncpa %s20, 0
    %22 = vsyncpa [#allocation8], 0
    %s23 = scalar_lea.sflag [#allocation8], 1
    %24 = vsyncpa %s23, 0
    %25 = vsyncpa [#allocation11], 0
    %s26 = scalar_lea.sflag [#allocation11], 1
    %27 = vsyncpa %s26, 0
    %28 = vsyncpa [#allocation14], 0
    %29 = vsyncpa [#allocation17], 0
    %30 = vsyncpa [#allocation6], 0
    %s31 = scalar_lea.sflag [#allocation6], 1
    %32 = vsyncpa %s31, 0
    loop: start=0, step=1, limit=6
    $region2: #{_lambda_.5} parent=1 // loop_pre_header
      _
    $region3: #{_lambda_.5} parent=1 // loop_header
      %s34 = sphi 0, %s38
      %p35 = scmp.ge.s32.totalorder %s34, 6
      %s41 = sphi 0, %s60
      %s42 = sphi 0, %s56
      %s43 = sphi 0, %s52
      %s44 = sphi 0, %s41
      %s45 = sphi 0, %s42
      %s46 = sphi 0, %s43
      %s47 = sphi 0, %s44
      %s48 = sphi 0, %s45
      %s49 = sphi 0, %s46
      %s71 = sphi 0, %s73
      %s74 = sphi 0, %s71
      %s75 = sphi 0, %s74
      %s91 = sphi 0, %s75
      %s97 = sphi 0, %s99
      %s100 = sphi 0, %s97
      %s101 = sphi 0, %s100
      %s117 = sphi 0, %s101
      %s123 = sphi 0, %s125
      %s126 = sphi 0, %s123
      %s127 = sphi 0, %s126
      %s143 = sphi 0, %s127
      %s157 = sphi 0, %s159
      %s160 = sphi 0, %s157
      %s161 = sphi 0, %s160
      %s177 = sphi 0, %s161
      %s181 = sphi 0, %s181
      %s183 = sphi 0, %s181
      %s184 = sphi 0, %s183
      %s198 = sphi 0, %s184
      %s202 = sphi 0, %s202
      %s204 = sphi 0, %s202
      %s205 = sphi 0, %s204
      %s219 = sphi 0, %s205
      %s223 = sphi 0, %s223
      %s225 = sphi 0, %s223
      %s226 = sphi 0, %s225
      %s240 = sphi 0, %s226
      %s244 = sphi 0, %s244
      %s246 = sphi 0, %s244
      %s247 = sphi 0, %s246
      %s261 = sphi 0, %s247
      %s265 = sphi 0, %s265
      %s267 = sphi 0, %s265
      %s268 = sphi 0, %s267
      %s282 = sphi 0, %s268
      %s292 = sphi 0, %s294
      %s295 = sphi 0, %s292
      %s296 = sphi 0, %s295
      %s312 = sphi 0, %s296
    $region4: #{_lambda_.5} parent=1 // loop_header_branch
      %37 = sbr.rel (%p35) target = $region8
    $region5: #{_lambda_.5} parent=1 // loop_body
      %s39 = ssub.s32 %s34, 1
      %s40 = ssub.s32 %s34, 2
      %s50 = sadd.s32 1, %s43
      %p51 = scmp.ge.s32.totalorder %s50, 1
      %s52 = scalar_select %p51, 0, %s50
      %s53 = sadd.s32 1, %s42
      %s54 = scalar_select %p51, %s53, %s42
      %p55 = scmp.ge.s32.totalorder %s54, 2
      %s56 = scalar_select %p55, 0, %s54
      %s57 = sadd.s32 1, %s41
      %s58 = scalar_select %p55, %s57, %s41
      %p59 = scmp.ge.s32.totalorder %s58, 2
      %s60 = scalar_select %p59, 0, %s58
      %s61 = smul.u32 %s42, 128
      %s62 = sld [smem:[#allocation3 + %s61]]
      %s63 = smul.u32 %s56, 128
      %s64 = sld [smem:[#allocation3 + %s63]]
      %s65 = ssub.s32 %s41, %s60
      %s66 = ssub.s32 %s62, %s64
      %s67 = sor.u32 %s65, %s66
      %s68 = ssub.s32 %s43, %s52
      %s69 = sor.u32 %s67, %s68
      %p70 = scmp.eq.s32.totalorder %s69, 0
      %s72 = sadd.s32 %s71, 1
      %s73 = scalar_select %p70, %s71, %s72
      %p76 = pneg %p70
      %p77 = scmp.eq.s32.totalorder %s34, 3
      %p78 = por %p76, %p77
      %p79 = scmp.ne.s32.totalorder %s71, %s74
      %p80 = scmp.eq.s32.totalorder %s34, 0
      %p81 = por %p79, %p80
      %p82 = scmp.ne.s32.totalorder %s71, %s74
      %p83 = scmp.eq.s32.totalorder %s39, 3
      %p84 = por %p82, %p83
      %p85 = scmp.ne.s32.totalorder %s74, %s75
      %p86 = scmp.eq.s32.totalorder %s39, 0
      %p87 = por %p85, %p86
      %p88 = scmp.ne.s32.totalorder %s74, %s75
      %p89 = scmp.eq.s32.totalorder %s40, 3
      %p90 = por %p88, %p89
      %p92 = scmp.ne.s32.totalorder %s75, %s91
      %p93 = scmp.eq.s32.totalorder %s40, 0
      %p94 = por %p92, %p93
      %s95 = ssub.s32 %s41, %s60
      %p96 = scmp.eq.s32.totalorder %s95, 0
      %s98 = sadd.s32 %s97, 1
      %s99 = scalar_select %p96, %s97, %s98
      %p102 = pneg %p96
      %p103 = scmp.eq.s32.totalorder %s34, 3
      %p104 = por %p102, %p103
      %p105 = scmp.ne.s32.totalorder %s97, %s100
      %p106 = scmp.eq.s32.totalorder %s34, 0
      %p107 = por %p105, %p106
      %p108 = scmp.ne.s32.totalorder %s97, %s100
      %p109 = scmp.eq.s32.totalorder %s39, 3
      %p110 = por %p108, %p109
      %p111 = scmp.ne.s32.totalorder %s100, %s101
      %p112 = scmp.eq.s32.totalorder %s39, 0
      %p113 = por %p111, %p112
      %p114 = scmp.ne.s32.totalorder %s100, %s101
      %p115 = scmp.eq.s32.totalorder %s40, 3
      %p116 = por %p114, %p115
      %p118 = scmp.ne.s32.totalorder %s101, %s117
      %p119 = scmp.eq.s32.totalorder %s40, 0
      %p120 = por %p118, %p119
      %s121 = ssub.s32 %s41, %s60
      %p122 = scmp.eq.s32.totalorder %s121, 0
      %s124 = sadd.s32 %s123, 1
      %s125 = scalar_select %p122, %s123, %s124
      %p128 = pneg %p122
      %p129 = scmp.eq.s32.totalorder %s34, 3
      %p130 = por %p128, %p129
      %p131 = scmp.ne.s32.totalorder %s123, %s126
      %p132 = scmp.eq.s32.totalorder %s34, 0
      %p133 = por %p131, %p132
      %p134 = scmp.ne.s32.totalorder %s123, %s126
      %p135 = scmp.eq.s32.totalorder %s39, 3
      %p136 = por %p134, %p135
      %p137 = scmp.ne.s32.totalorder %s126, %s127
      %p138 = scmp.eq.s32.totalorder %s39, 0
      %p139 = por %p137, %p138
      %p140 = scmp.ne.s32.totalorder %s126, %s127
      %p141 = scmp.eq.s32.totalorder %s40, 3
      %p142 = por %p140, %p141
      %p144 = scmp.ne.s32.totalorder %s127, %s143
      %p145 = scmp.eq.s32.totalorder %s40, 0
      %p146 = por %p144, %p145
      %s147 = smul.u32 %s42, 128
      %s148 = sld [smem:[#allocation3 + %s147]]
      %s149 = smul.u32 %s56, 128
      %s150 = sld [smem:[#allocation3 + %s149]]
      %s151 = ssub.s32 %s41, %s60
      %s152 = ssub.s32 %s148, %s150
      %s153 = sor.u32 %s151, %s152
      %s154 = ssub.s32 %s43, %s52
      %s155 = sor.u32 %s153, %s154
      %p156 = scmp.eq.s32.totalorder %s155, 0
      %s158 = sadd.s32 %s157, 1
      %s159 = scalar_select %p156, %s157, %s158
      %p162 = pneg %p156
      %p163 = scmp.eq.s32.totalorder %s34, 3
      %p164 = por %p162, %p163
      %p165 = scmp.ne.s32.totalorder %s157, %s160
      %p166 = scmp.eq.s32.totalorder %s34, 0
      %p167 = por %p165, %p166
      %p168 = scmp.ne.s32.totalorder %s157, %s160
      %p169 = scmp.eq.s32.totalorder %s39, 3
      %p170 = por %p168, %p169
      %p171 = scmp.ne.s32.totalorder %s160, %s161
      %p172 = scmp.eq.s32.totalorder %s39, 0
      %p173 = por %p171, %p172
      %p174 = scmp.ne.s32.totalorder %s160, %s161
      %p175 = scmp.eq.s32.totalorder %s40, 3
      %p176 = por %p174, %p175
      %p178 = scmp.ne.s32.totalorder %s161, %s177
      %p179 = scmp.eq.s32.totalorder %s40, 0
      %p180 = por %p178, %p179
      %s182 = sadd.s32 %s181, 1
      %p185 = scmp.eq.s32.totalorder %s34, 3
      %p186 = scmp.ne.s32.totalorder %s181, %s183
      %p187 = scmp.eq.s32.totalorder %s34, 0
      %p188 = por %p186, %p187
      %p189 = scmp.ne.s32.totalorder %s181, %s183
      %p190 = scmp.eq.s32.totalorder %s39, 3
      %p191 = por %p189, %p190
      %p192 = scmp.ne.s32.totalorder %s183, %s184
      %p193 = scmp.eq.s32.totalorder %s39, 0
      %p194 = por %p192, %p193
      %p195 = scmp.ne.s32.totalorder %s183, %s184
      %p196 = scmp.eq.s32.totalorder %s40, 3
      %p197 = por %p195, %p196
      %p199 = scmp.ne.s32.totalorder %s184, %s198
      %p200 = scmp.eq.s32.totalorder %s40, 0
      %p201 = por %p199, %p200
      %s203 = sadd.s32 %s202, 1
      %p206 = scmp.eq.s32.totalorder %s34, 3
      %p207 = scmp.ne.s32.totalorder %s202, %s204
      %p208 = scmp.eq.s32.totalorder %s34, 0
      %p209 = por %p207, %p208
      %p210 = scmp.ne.s32.totalorder %s202, %s204
      %p211 = scmp.eq.s32.totalorder %s39, 3
      %p212 = por %p210, %p211
      %p213 = scmp.ne.s32.totalorder %s204, %s205
      %p214 = scmp.eq.s32.totalorder %s39, 0
      %p215 = por %p213, %p214
      %p216 = scmp.ne.s32.totalorder %s204, %s205
      %p217 = scmp.eq.s32.totalorder %s40, 3
      %p218 = por %p216, %p217
      %p220 = scmp.ne.s32.totalorder %s205, %s219
      %p221 = scmp.eq.s32.totalorder %s40, 0
      %p222 = por %p220, %p221
      %s224 = sadd.s32 %s223, 1
      %p227 = scmp.eq.s32.totalorder %s34, 3
      %p228 = scmp.ne.s32.totalorder %s223, %s225
      %p229 = scmp.eq.s32.totalorder %s34, 0
      %p230 = por %p228, %p229
      %p231 = scmp.ne.s32.totalorder %s223, %s225
      %p232 = scmp.eq.s32.totalorder %s39, 3
      %p233 = por %p231, %p232
      %p234 = scmp.ne.s32.totalorder %s225, %s226
      %p235 = scmp.eq.s32.totalorder %s39, 0
      %p236 = por %p234, %p235
      %p237 = scmp.ne.s32.totalorder %s225, %s226
      %p238 = scmp.eq.s32.totalorder %s40, 3
      %p239 = por %p237, %p238
      %p241 = scmp.ne.s32.totalorder %s226, %s240
      %p242 = scmp.eq.s32.totalorder %s40, 0
      %p243 = por %p241, %p242
      %s245 = sadd.s32 %s244, 1
      %p248 = scmp.eq.s32.totalorder %s34, 3
      %p249 = scmp.ne.s32.totalorder %s244, %s246
      %p250 = scmp.eq.s32.totalorder %s34, 0
      %p251 = por %p249, %p250
      %p252 = scmp.ne.s32.totalorder %s244, %s246
      %p253 = scmp.eq.s32.totalorder %s39, 3
      %p254 = por %p252, %p253
      %p255 = scmp.ne.s32.totalorder %s246, %s247
      %p256 = scmp.eq.s32.totalorder %s39, 0
      %p257 = por %p255, %p256
      %p258 = scmp.ne.s32.totalorder %s246, %s247
      %p259 = scmp.eq.s32.totalorder %s40, 3
      %p260 = por %p258, %p259
      %p262 = scmp.ne.s32.totalorder %s247, %s261
      %p263 = scmp.eq.s32.totalorder %s40, 0
      %p264 = por %p262, %p263
      %s266 = sadd.s32 %s265, 1
      %p269 = scmp.eq.s32.totalorder %s34, 3
      %p270 = scmp.ne.s32.totalorder %s265, %s267
      %p271 = scmp.eq.s32.totalorder %s34, 0
      %p272 = por %p270, %p271
      %p273 = scmp.ne.s32.totalorder %s265, %s267
      %p274 = scmp.eq.s32.totalorder %s39, 3
      %p275 = por %p273, %p274
      %p276 = scmp.ne.s32.totalorder %s267, %s268
      %p277 = scmp.eq.s32.totalorder %s39, 0
      %p278 = por %p276, %p277
      %p279 = scmp.ne.s32.totalorder %s267, %s268
      %p280 = scmp.eq.s32.totalorder %s40, 3
      %p281 = por %p279, %p280
      %p283 = scmp.ne.s32.totalorder %s268, %s282
      %p284 = scmp.eq.s32.totalorder %s40, 0
      %p285 = por %p283, %p284
      %s286 = ssub.s32 %s41, %s60
      %s287 = ssub.s32 %s42, %s56
      %s288 = sor.u32 %s286, %s287
      %s289 = ssub.s32 %s43, %s52
      %s290 = sor.u32 %s288, %s289
      %p291 = scmp.eq.s32.totalorder %s290, 0
      %s293 = sadd.s32 %s292, 1
      %s294 = scalar_select %p291, %s292, %s293
      %p297 = pneg %p291
      %p298 = scmp.eq.s32.totalorder %s34, 3
      %p299 = por %p297, %p298
      %p300 = scmp.ne.s32.totalorder %s292, %s295
      %p301 = scmp.eq.s32.totalorder %s34, 0
      %p302 = por %p300, %p301
      %p303 = scmp.ne.s32.totalorder %s292, %s295
      %p304 = scmp.eq.s32.totalorder %s39, 3
      %p305 = por %p303, %p304
      %p306 = scmp.ne.s32.totalorder %s295, %s296
      %p307 = scmp.eq.s32.totalorder %s39, 0
      %p308 = por %p306, %p307
      %p309 = scmp.ne.s32.totalorder %s295, %s296
      %p310 = scmp.eq.s32.totalorder %s40, 3
      %p311 = por %p309, %p310
      %p313 = scmp.ne.s32.totalorder %s296, %s312
      %p314 = scmp.eq.s32.totalorder %s40, 0
      %p315 = por %p313, %p314
      %p316 = scmp.le.s32.totalorder 1, %s34
      %p317 = scmp.lt.s32.totalorder %s34, 5
      %p318 = pnand %p316, %p317
      %p319 = pneg %p318
      // Predicated region
      $region9: #{_lambda_.5} parent=5 // pred_check
        _
      $region10: #{_lambda_.5} parent=5 // pred_check_branch
        %321 = sbr.rel (%p318) target = $region12
      $region11: #{_lambda_.5} parent=5 // pred_region
        %s322 = ssub.s32 %s34, 1
        // Predicated region
        $region13: #{_lambda_.5} parent=11 // pred_check
          %p323 = pneg %p194
        $region14: #{_lambda_.5} parent=11 // pred_check_branch
          %325 = sbr.rel (%p323) target = $region16
        $region15: #{_lambda_.5} parent=11 // pred_region
          %s327 = ssub.s32 64, 64
          %328 = vsyncadd [#allocation11], %s327
          %s330 = sshll.u32 [#allocation12], 4
          %s331 = int_to_ptr.vmem [resolvable:$true] %s330
          %333 = dma.hbm_to_vmem [thread:$0]  %s5, 64, %s331, [#allocation11]
        $region16: #{_lambda_.5} parent=11 // pred_fallthru
          _
        // Predicated region
        $region17: #{_lambda_.5} parent=11 // pred_check
          %p334 = pneg %p215
        $region18: #{_lambda_.5} parent=11 // pred_check_branch
          %336 = sbr.rel (%p334) target = $region20
        $region19: #{_lambda_.5} parent=11 // pred_region
          %s338 = ssub.s32 16, 16
          %339 = vsyncadd [#allocation14], %s338
          %s341 = sshll.u32 [#allocation13], 4
          %s342 = int_to_ptr.vmem [resolvable:$true] %s341
          %344 = dma.hbm_to_vmem [thread:$0]  %s6, 16, %s342, [#allocation14]
        $region20: #{_lambda_.5} parent=11 // pred_fallthru
          _
        // Predicated region
        $region21: #{_lambda_.5} parent=11 // pred_check
          %p345 = pneg %p236
        $region22: #{_lambda_.5} parent=11 // pred_check_branch
          %347 = sbr.rel (%p345) target = $region24
        $region23: #{_lambda_.5} parent=11 // pred_region
          %s349 = ssub.s32 128, 128
          %350 = vsyncadd [#allocation14], %s349
          %s352 = sshll.u32 [#allocation15], 4
          %s353 = int_to_ptr.vmem [resolvable:$true] %s352
          %355 = dma.hbm_to_vmem [thread:$0]  %s7, 128, %s353, [#allocation14]
        $region24: #{_lambda_.5} parent=11 // pred_fallthru
          _
        // Predicated region
        $region25: #{_lambda_.5} parent=11 // pred_check
          %p356 = pneg %p257
        $region26: #{_lambda_.5} parent=11 // pred_check_branch
          %358 = sbr.rel (%p356) target = $region28
        $region27: #{_lambda_.5} parent=11 // pred_region
          %s360 = ssub.s32 128, 128
          %361 = vsyncadd [#allocation17], %s360
          %s363 = sshll.u32 [#allocation16], 4
          %s364 = int_to_ptr.vmem [resolvable:$true] %s363
          %366 = dma.hbm_to_vmem [thread:$0]  %s8, 128, %s364, [#allocation17]
        $region28: #{_lambda_.5} parent=11 // pred_fallthru
          _
        // Predicated region
        $region29: #{_lambda_.5} parent=11 // pred_check
          %p367 = pneg %p278
        $region30: #{_lambda_.5} parent=11 // pred_check_branch
          %369 = sbr.rel (%p367) target = $region32
        $region31: #{_lambda_.5} parent=11 // pred_region
          %s371 = ssub.s32 16, 16
          %372 = vsyncadd [#allocation17], %s371
          %s374 = sshll.u32 [#allocation18], 4
          %s375 = int_to_ptr.vmem [resolvable:$true] %s374
          %377 = dma.hbm_to_vmem [thread:$0]  %s9, 16, %s375, [#allocation17]
        $region32: #{_lambda_.5} parent=11 // pred_fallthru
          _
      $region12: #{_lambda_.5} parent=5 // pred_fallthru
        _
      %p378 = scmp.lt.s32.totalorder %s34, 4
      // Predicated region
      $region33: #{_lambda_.5} parent=5 // pred_check
        %p379 = pneg %p378
      $region34: #{_lambda_.5} parent=5 // pred_check_branch
        %381 = sbr.rel (%p379) target = $region36
      $region35: #{_lambda_.5} parent=5 // pred_region
        // Predicated region
        $region37: #{_lambda_.5} parent=35 // pred_check
          %p382 = pneg %p81
        $region38: #{_lambda_.5} parent=35 // pred_check_branch
          %384 = sbr.rel (%p382) target = $region40
        $region39: #{_lambda_.5} parent=35 // pred_region
          %s385 = sand.u32 %s71, 1
          %s386 = scalar_lea.sflag [#allocation5], %s385
          %s387 = sand.u32 %s71, 1
          %s388 = smul.addr %s387, 64
          %s389 = scalar_lea.vmem [#allocation4], %s388
          %s390 = smul.u32 %s42, 128
          %s391 = sld [smem:[#allocation3 + %s390]]
          %s392 = smul.u32 8, %s43
          %s394 = ssub.s32 1024, 1024
          %395 = vsyncadd %s386, %s394
          %s396 = smul.addr %s391, 8
          %s397 = sadd.s32 %s392, %s396
          %s398 = smul.addr %s41, 24
          %s399 = sadd.s32 %s397, %s398
          %s400 = smul.addr %s399, 128
          %s401 = scalar_lea.hbm %s1, %s400
          %s402 = sshll.u32 %s389, 4
          %s403 = int_to_ptr.vmem [resolvable:$true] %s402
          %408 = dma.hbm_to_vmem [thread:$0]  %s401, 1024, %s403, %s386, 128, 128, 8
        $region40: #{_lambda_.5} parent=35 // pred_fallthru
          _
        // Predicated region
        $region41: #{_lambda_.5} parent=35 // pred_check
          %p409 = pneg %p107
        $region42: #{_lambda_.5} parent=35 // pred_check_branch
          %411 = sbr.rel (%p409) target = $region44
        $region43: #{_lambda_.5} parent=35 // pred_region
          %s412 = sand.u32 %s34, 1
          %s413 = scalar_lea.sflag [#allocation8], %s412
          %s414 = sand.u32 %s97, 1
          %s415 = smul.addr %s414, 192
          %s416 = scalar_lea.vmem [#allocation7], %s415
          %s418 = ssub.s32 3072, 3072
          %419 = vsyncadd %s413, %s418
          %s420 = smul.addr %s41, 24
          %s421 = smul.addr %s420, 128
          %s422 = scalar_lea.hbm %s2, %s421
          %s423 = sshll.u32 %s416, 4
          %s424 = int_to_ptr.vmem [resolvable:$true] %s423
          %429 = dma.hbm_to_vmem [thread:$0]  %s422, 3072, %s424, %s413, 128, 128, 8
        $region44: #{_lambda_.5} parent=35 // pred_fallthru
          _
        // Predicated region
        $region45: #{_lambda_.5} parent=35 // pred_check
          %p430 = pneg %p133
        $region46: #{_lambda_.5} parent=35 // pred_check_branch
          %432 = sbr.rel (%p430) target = $region48
        $region47: #{_lambda_.5} parent=35 // pred_region
          %s433 = sand.u32 %s34, 1
          %s434 = scalar_lea.sflag [#allocation8], %s433
          %s435 = sand.u32 %s123, 1
          %s436 = smul.addr %s435, 192
          %s437 = scalar_lea.vmem [#allocation9], %s436
          %s439 = ssub.s32 3072, 3072
          %440 = vsyncadd %s434, %s439
          %s441 = smul.addr %s41, 24
          %s442 = smul.addr %s441, 128
          %s443 = scalar_lea.hbm %s3, %s442
          %s444 = sshll.u32 %s437, 4
          %s445 = int_to_ptr.vmem [resolvable:$true] %s444
          %450 = dma.hbm_to_vmem [thread:$0]  %s443, 3072, %s445, %s434, 128, 128, 8
        $region48: #{_lambda_.5} parent=35 // pred_fallthru
          _
        // Predicated region
        $region49: #{_lambda_.5} parent=35 // pred_check
          %p451 = pneg %p167
        $region50: #{_lambda_.5} parent=35 // pred_check_branch
          %453 = sbr.rel (%p451) target = $region52
        $region51: #{_lambda_.5} parent=35 // pred_region
          %s454 = sand.u32 %s34, 1
          %s455 = scalar_lea.sflag [#allocation11], %s454
          %s456 = sand.u32 %s157, 1
          %s457 = smul.addr %s456, 64
          %s458 = scalar_lea.vmem [#allocation10], %s457
          %s459 = smul.u32 %s42, 128
          %s460 = sld [smem:[#allocation3 + %s459]]
          %s461 = smul.u32 8, %s43
          %s463 = ssub.s32 1024, 1024
          %464 = vsyncadd %s455, %s463
          %s465 = smul.addr %s460, 8
          %s466 = sadd.s32 %s461, %s465
          %s467 = smul.addr %s41, 24
          %s468 = sadd.s32 %s466, %s467
          %s469 = smul.addr %s468, 128
          %s470 = scalar_lea.hbm %s4, %s469
          %s471 = sshll.u32 %s458, 4
          %s472 = int_to_ptr.vmem [resolvable:$true] %s471
          %477 = dma.hbm_to_vmem [thread:$0]  %s470, 1024, %s472, %s455, 128, 128, 8
        $region52: #{_lambda_.5} parent=35 // pred_fallthru
          _
      $region36: #{_lambda_.5} parent=5 // pred_fallthru
        _
      %p478 = scmp.le.s32.totalorder 1, %s34
      %p479 = scmp.lt.s32.totalorder %s34, 5
      %p480 = pnand %p478, %p479
      %p481 = pneg %p480
      // Predicated region
      $region53: #{_lambda_.5} parent=5 // pred_check
        _
      $region54: #{_lambda_.5} parent=5 // pred_check_branch
        %483 = sbr.rel (%p480) target = $region56
      $region55: #{_lambda_.5} parent=5 // pred_region
        %s484 = ssub.s32 %s34, 1
        %s485 = sand.u32 %s74, 1
        %s486 = scalar_lea.sflag [#allocation5], %s485
        %s487 = sand.u32 %s74, 1
        %s488 = smul.addr %s487, 64
        %s489 = scalar_lea.vmem [#allocation4], %s488
        // Predicated region
        $region57: #{_lambda_.5} parent=55 // pred_check
          %p490 = pneg %p87
        $region58: #{_lambda_.5} parent=55 // pred_check_branch
          %492 = sbr.rel (%p490) target = $region60
        $region59: #{_lambda_.5} parent=55 // pred_region
          %493 = dma.done %s486, 1024
        $region60: #{_lambda_.5} parent=55 // pred_fallthru
          _
        %s494 = sand.u32 %s39, 1
        %s495 = scalar_lea.sflag [#allocation8], %s494
        %s496 = sand.u32 %s100, 1
        %s497 = smul.addr %s496, 192
        %s498 = scalar_lea.vmem [#allocation7], %s497
        // Predicated region
        $region61: #{_lambda_.5} parent=55 // pred_check
          %p499 = pneg %p113
        $region62: #{_lambda_.5} parent=55 // pred_check_branch
          %501 = sbr.rel (%p499) target = $region64
        $region63: #{_lambda_.5} parent=55 // pred_region
          %502 = dma.done %s495, 3072
        $region64: #{_lambda_.5} parent=55 // pred_fallthru
          _
        %s503 = sand.u32 %s39, 1
        %s504 = scalar_lea.sflag [#allocation8], %s503
        %s505 = sand.u32 %s126, 1
        %s506 = smul.addr %s505, 192
        %s507 = scalar_lea.vmem [#allocation9], %s506
        // Predicated region
        $region65: #{_lambda_.5} parent=55 // pred_check
          %p508 = pneg %p139
        $region66: #{_lambda_.5} parent=55 // pred_check_branch
          %510 = sbr.rel (%p508) target = $region68
        $region67: #{_lambda_.5} parent=55 // pred_region
          %511 = dma.done %s504, 3072
        $region68: #{_lambda_.5} parent=55 // pred_fallthru
          _
        %s512 = sand.u32 %s39, 1
        %s513 = scalar_lea.sflag [#allocation11], %s512
        %s514 = sand.u32 %s160, 1
        %s515 = smul.addr %s514, 64
        %s516 = scalar_lea.vmem [#allocation10], %s515
        // Predicated region
        $region69: #{_lambda_.5} parent=55 // pred_check
          %p517 = pneg %p173
        $region70: #{_lambda_.5} parent=55 // pred_check_branch
          %519 = sbr.rel (%p517) target = $region72
        $region71: #{_lambda_.5} parent=55 // pred_region
          %520 = dma.done %s513, 1024
        $region72: #{_lambda_.5} parent=55 // pred_fallthru
          _
        // Predicated region
        $region73: #{_lambda_.5} parent=55 // pred_check
          %p521 = pneg %p194
        $region74: #{_lambda_.5} parent=55 // pred_check_branch
          %523 = sbr.rel (%p521) target = $region76
        $region75: #{_lambda_.5} parent=55 // pred_region
          %524 = dma.done [#allocation11], 64
        $region76: #{_lambda_.5} parent=55 // pred_fallthru
          _
        // Predicated region
        $region77: #{_lambda_.5} parent=55 // pred_check
          %p525 = pneg %p215
        $region78: #{_lambda_.5} parent=55 // pred_check_branch
          %527 = sbr.rel (%p525) target = $region80
        $region79: #{_lambda_.5} parent=55 // pred_region
          %528 = dma.done [#allocation14], 16
        $region80: #{_lambda_.5} parent=55 // pred_fallthru
          _
        // Predicated region
        $region81: #{_lambda_.5} parent=55 // pred_check
          %p529 = pneg %p236
        $region82: #{_lambda_.5} parent=55 // pred_check_branch
          %531 = sbr.rel (%p529) target = $region84
        $region83: #{_lambda_.5} parent=55 // pred_region
          %532 = dma.done [#allocation14], 128
        $region84: #{_lambda_.5} parent=55 // pred_fallthru
          _
        // Predicated region
        $region85: #{_lambda_.5} parent=55 // pred_check
          %p533 = pneg %p257
        $region86: #{_lambda_.5} parent=55 // pred_check_branch
          %535 = sbr.rel (%p533) target = $region88
        $region87: #{_lambda_.5} parent=55 // pred_region
          %536 = dma.done [#allocation17], 128
        $region88: #{_lambda_.5} parent=55 // pred_fallthru
          _
        // Predicated region
        $region89: #{_lambda_.5} parent=55 // pred_check
          %p537 = pneg %p278
        $region90: #{_lambda_.5} parent=55 // pred_check_branch
          %539 = sbr.rel (%p537) target = $region92
        $region91: #{_lambda_.5} parent=55 // pred_region
          %540 = dma.done [#allocation17], 16
        $region92: #{_lambda_.5} parent=55 // pred_fallthru
          _
        %s541 = sand.u32 %s74, 1
        %s542 = scalar_lea.sflag [#allocation5], %s541
        %s543 = sand.u32 %s74, 1
        %s544 = smul.addr %s543, 64
        %s545 = scalar_lea.vmem [#allocation4], %s544
        %p546 = pneg %p87
        %p547 = pneg %p84
        %s548 = sand.u32 %s39, 1
        %s549 = scalar_lea.sflag [#allocation8], %s548
        %s550 = sand.u32 %s100, 1
        %s551 = smul.addr %s550, 192
        %s552 = scalar_lea.vmem [#allocation7], %s551
        %p553 = pneg %p113
        %p554 = pneg %p110
        %s555 = sand.u32 %s39, 1
        %s556 = scalar_lea.sflag [#allocation8], %s555
        %s557 = sand.u32 %s126, 1
        %s558 = smul.addr %s557, 192
        %s559 = scalar_lea.vmem [#allocation9], %s558
        %p560 = pneg %p139
        %p561 = pneg %p136
        %s562 = sand.u32 %s39, 1
        %s563 = scalar_lea.sflag [#allocation11], %s562
        %s564 = sand.u32 %s160, 1
        %s565 = smul.addr %s564, 64
        %s566 = scalar_lea.vmem [#allocation10], %s565
        %p567 = pneg %p173
        %p568 = pneg %p170
        %p569 = pneg %p194
        %p570 = pneg %p191
        %p571 = pneg %p215
        %p572 = pneg %p212
        %p573 = pneg %p236
        %p574 = pneg %p233
        %p575 = pneg %p257
        %p576 = pneg %p254
        %p577 = pneg %p278
        %p578 = pneg %p275
        %p579 = pneg %p308
        %p580 = pneg %p305
        %s581 = sand.u32 %s295, 1
        %s582 = scalar_lea.sflag [#allocation6], %s581
        %s583 = sand.u32 %s295, 1
        %s584 = smul.addr %s583, 64
        %s585 = scalar_lea.vmem [#allocation19], %s584
        %s586 = smul.u32 %s45, 128
        %s587 = sld [smem:[#allocation3 + %s586]]
        %s588 = smul.u32 8, %s46
        %s589 = smul.u32 %s45, 128
        %s590 = sld [smem:[#allocation3 + %s589]]
        %s591 = smul.u32 8, %s46
        %s592 = smul.u32 8, %s46
        %v593 = vld [vmem:[%s489] sm:$0xff]
        %v594 = vld [vmem:[%s489 + $0x8] sm:$0xff]
        %v595 = vld [vmem:[%s489 + $0x10] sm:$0xff]
        %v596 = vld [vmem:[%s489 + $0x18] sm:$0xff]
        %v597 = vld [vmem:[%s489 + $0x20] sm:$0xff]
        %v598 = vld [vmem:[%s489 + $0x28] sm:$0xff]
        %v599 = vld [vmem:[%s489 + $0x30] sm:$0xff]
        %v600 = vld [vmem:[%s489 + $0x38] sm:$0xff]
        %s601 = smul.u32 %s45, 128
        %s602 = sadd.s32 %s601, 1
        %s603 = sld [smem:[#allocation3 + %s602]]
        %s604 = smul.u32 %s603, 64
        %s605 = scalar_lea.vmem %s498, %s604 [#allocation7]
        %v606 = vld [vmem:[%s605] sm:$0xff]
        %v607 = vld [vmem:[%s605 + $0x8] sm:$0xff]
        %v608 = vld [vmem:[%s605 + $0x10] sm:$0xff]
        %v609 = vld [vmem:[%s605 + $0x18] sm:$0xff]
        %v610 = vld [vmem:[%s605 + $0x20] sm:$0xff]
        %v611 = vld [vmem:[%s605 + $0x28] sm:$0xff]
        %v612 = vld [vmem:[%s605 + $0x30] sm:$0xff]
        %v613 = vld [vmem:[%s605 + $0x38] sm:$0xff]
        %s614 = scalar_lea.vmem %s507, %s604 [#allocation9]
        %v615 = vld [vmem:[%s614] sm:$0xff]
        %v616 = vld [vmem:[%s614 + $0x8] sm:$0xff]
        %v617 = vld [vmem:[%s614 + $0x10] sm:$0xff]
        %v618 = vld [vmem:[%s614 + $0x18] sm:$0xff]
        %v619 = vld [vmem:[%s614 + $0x20] sm:$0xff]
        %v620 = vld [vmem:[%s614 + $0x28] sm:$0xff]
        %v621 = vld [vmem:[%s614 + $0x30] sm:$0xff]
        %v622 = vld [vmem:[%s614 + $0x38] sm:$0xff]
        %vm623 = vcmask 31744
        %v625 = vsel %vm623, %v593, 0
        %v628 = vsel %vm623, %v594, 0
        %v631 = vsel %vm623, %v595, 0
        %v634 = vsel %vm623, %v596, 0
        %v637 = vsel %vm623, %v597, 0
        %v640 = vsel %vm623, %v598, 0
        %v643 = vsel %vm623, %v599, 0
        %v646 = vsel %vm623, %v600, 0
        %v649 = vsel %vm623, %v606, 0
        %v652 = vsel %vm623, %v607, 0
        %v655 = vsel %vm623, %v608, 0
        %v658 = vsel %vm623, %v609, 0
        %v661 = vsel %vm623, %v610, 0
        %v664 = vsel %vm623, %v611, 0
        %v667 = vsel %vm623, %v612, 0
        %v670 = vsel %vm623, %v613, 0
        %672 = vmatprep.subr.mxu0 0.0
        %673 = vmatpush1.xpose.msra.mxu0 %v649
        %674 = vmatprep.subr.mxu0 0.0
        %675 = vmatpush1.xpose.msra.mxu0 %v652
        %676 = vmatprep.subr.mxu0 0.0
        %677 = vmatpush1.xpose.msra.mxu0 %v655
        %678 = vmatprep.subr.mxu0 0.0
        %679 = vmatpush1.xpose.msra.mxu0 %v658
        %680 = vmatprep.subr.mxu0 0.0
        %681 = vmatpush1.xpose.msra.mxu0 %v661
        %682 = vmatprep.subr.mxu0 0.0
        %683 = vmatpush1.xpose.msra.mxu0 %v664
        %684 = vmatprep.subr.mxu0 0.0
        %685 = vmatpush1.xpose.msra.mxu0 %v667
        %686 = vmatprep.subr.mxu0 0.0
        %687 = vmatpush1.xpose.msra.mxu0 %v670
        %688 = vmatprep.subr.mxu0 0.0
        %689 = vmatpush1.xpose.msra.mxu0 0.0
        %690 = vmatprep.subr.mxu0 0.0
        %691 = vmatpush1.xpose.msra.mxu0 0.0
        %692 = vmatprep.subr.mxu0 0.0
        %693 = vmatpush1.xpose.msra.mxu0 0.0
        %694 = vmatprep.subr.mxu0 0.0
        %695 = vmatpush1.xpose.msra.mxu0 0.0
        %696 = vmatprep.subr.mxu0 0.0
        %697 = vmatpush1.xpose.msra.mxu0 0.0
        %698 = vmatprep.subr.mxu0 0.0
        %699 = vmatpush1.xpose.msra.mxu0 0.0
        %700 = vmatprep.subr.mxu0 0.0
        %701 = vmatpush1.xpose.msra.mxu0 0.0
        %702 = vmatprep.subr.mxu0 0.0
        %703 = vmatpush1.xpose.msra.mxu0 0.0
        %704 = vmatprep.subr.mxu0 0.0
        %705 = vmatpush1.xpose.msra.mxu0 0.0
        %706 = vmatprep.subr.mxu0 0.0
        %707 = vmatpush1.xpose.msra.mxu0 0.0
        %708 = vmatprep.subr.mxu0 0.0
        %709 = vmatpush1.xpose.msra.mxu0 0.0
        %710 = vmatprep.subr.mxu0 0.0
        %711 = vmatpush1.xpose.msra.mxu0 0.0
        %712 = vmatprep.subr.mxu0 0.0
        %713 = vmatpush1.xpose.msra.mxu0 0.0
        %714 = vmatprep.subr.mxu0 0.0
        %715 = vmatpush1.xpose.msra.mxu0 0.0
        %716 = vmatprep.subr.mxu0 0.0
        %717 = vmatpush1.xpose.msra.mxu0 0.0
        %718 = vmatprep.subr.mxu0 0.0
        %719 = vmatpush1.xpose.msra.mxu0 0.0
        %720 = vmatprep.subr.mxu0 0.0
        %721 = vmatpush1.xpose.msra.mxu0 0.0
        %722 = vmatprep.subr.mxu0 0.0
        %723 = vmatpush1.xpose.msra.mxu0 0.0
        %724 = vmatprep.subr.mxu0 0.0
        %725 = vmatpush1.xpose.msra.mxu0 0.0
        %726 = vmatprep.subr.mxu0 0.0
        %727 = vmatpush1.xpose.msra.mxu0 0.0
        %728 = vmatprep.subr.mxu0 0.0
        %729 = vmatpush1.xpose.msra.mxu0 0.0
        %730 = vmatprep.subr.mxu0 0.0
        %731 = vmatpush1.xpose.msra.mxu0 0.0
        %732 = vmatprep.subr.mxu0 0.0
        %733 = vmatpush1.xpose.msra.mxu0 0.0
        %734 = vmatprep.subr.mxu0 0.0
        %735 = vmatpush1.xpose.msra.mxu0 0.0
        %736 = vmatprep.mubr.f32.mxu0 0.0
        %737 = vmatmul.mubr.f32.gmra.mrb[0].mxu0 %v625
        %v738 = vpop.f32.mrb[0].mxu0
        %v739 = vadd.f32 0.0, %v738
        %v740 = vpop.f32.mrb[0].mxu0
        %741 = vmatprep.mubr.f32.mxu0 0.0
        %742 = vmatmul.mubr.f32.gmra.mrb[0].mxu0 %v628
        %v743 = vpop.f32.mrb[0].mxu0
        %v744 = vadd.f32 0.0, %v743
        %v745 = vpop.f32.mrb[0].mxu0
        %746 = vmatprep.mubr.f32.mxu0 0.0
        %747 = vmatmul.mubr.f32.gmra.mrb[0].mxu0 %v631
        %v748 = vpop.f32.mrb[0].mxu0
        %v749 = vadd.f32 0.0, %v748
        %v750 = vpop.f32.mrb[0].mxu0
        %751 = vmatprep.mubr.f32.mxu0 0.0
        %752 = vmatmul.mubr.f32.gmra.mrb[0].mxu0 %v634
        %v753 = vpop.f32.mrb[0].mxu0
        %v754 = vadd.f32 0.0, %v753
        %v755 = vpop.f32.mrb[0].mxu0
        %756 = vmatprep.mubr.f32.mxu0 0.0
        %757 = vmatmul.mubr.f32.gmra.mrb[0].mxu0 %v637
        %v758 = vpop.f32.mrb[0].mxu0
        %v759 = vadd.f32 0.0, %v758
        %v760 = vpop.f32.mrb[0].mxu0
        %761 = vmatprep.mubr.f32.mxu0 0.0
        %762 = vmatmul.mubr.f32.gmra.mrb[0].mxu0 %v640
        %v763 = vpop.f32.mrb[0].mxu0
        %v764 = vadd.f32 0.0, %v763
        %v765 = vpop.f32.mrb[0].mxu0
        %766 = vmatprep.mubr.f32.mxu0 0.0
        %767 = vmatmul.mubr.f32.gmra.mrb[0].mxu0 %v643
        %v768 = vpop.f32.mrb[0].mxu0
        %v769 = vadd.f32 0.0, %v768
        %v770 = vpop.f32.mrb[0].mxu0
        %771 = vmatprep.mubr.f32.mxu0 0.0
        %772 = vmatmul.mubr.f32.gmra.mrb[0].mxu0 %v646
        %v773 = vpop.f32.mrb[0].mxu0
        %v774 = vadd.f32 0.0, %v773
        %v775 = vpop.f32.mrb[0].mxu0
        %776 = vdwg.mxu0
        %v777 = vmul.f32 %v739, 0.5
        %v778 = vmul.f32 %v744, 0.5
        %v779 = vmul.f32 %v749, 0.5
        %v780 = vmul.f32 %v754, 0.5
        %v781 = vmul.f32 %v759, 0.5
        %v782 = vmul.f32 %v764, 0.5
        %v783 = vmul.f32 %v769, 0.5
        %v784 = vmul.f32 %v774, 0.5
        %vm785 = vcmask 523264
        %v786 = vsel %vm785, %v777, -inf
        %787 = vmax.xlane.f32.xlu0 %v786
        %v788 = vpop.xlane.xlu0 %787
        %v789 = vsel %vm785, %v778, -inf
        %790 = vmax.xlane.f32.xlu0 %v789
        %v791 = vpop.xlane.xlu0 %790
        %v792 = vsel %vm785, %v779, -inf
        %793 = vmax.xlane.f32.xlu0 %v792
        %v794 = vpop.xlane.xlu0 %793
        %v795 = vsel %vm785, %v780, -inf
        %796 = vmax.xlane.f32.xlu0 %v795
        %v797 = vpop.xlane.xlu0 %796
        %v798 = vsel %vm785, %v781, -inf
        %799 = vmax.xlane.f32.xlu0 %v798
        %v800 = vpop.xlane.xlu0 %799
        %v801 = vsel %vm785, %v782, -inf
        %802 = vmax.xlane.f32.xlu0 %v801
        %v803 = vpop.xlane.xlu0 %802
        %v804 = vsel %vm785, %v783, -inf
        %805 = vmax.xlane.f32.xlu0 %v804
        %v806 = vpop.xlane.xlu0 %805
        %v807 = vsel %vm785, %v784, -inf
        %808 = vmax.xlane.f32.xlu0 %v807
        %v809 = vpop.xlane.xlu0 %808
        %v810 = vsub.f32 %v777, %v788
        %v811 = vsub.f32 %v778, %v791
        %v812 = vsub.f32 %v779, %v794
        %v813 = vsub.f32 %v780, %v797
        %v814 = vsub.f32 %v781, %v800
        %v815 = vsub.f32 %v782, %v803
        %v816 = vsub.f32 %v783, %v806
        %v817 = vsub.f32 %v784, %v809
        %v818 = vmul.f32 %v810, 1.442695
        %v819 = vpow.pop %v818
        %v820 = vmul.f32 %v811, 1.442695
        %v821 = vpow.pop %v820
        %v822 = vmul.f32 %v812, 1.442695
        %v823 = vpow.pop %v822
        %v824 = vmul.f32 %v813, 1.442695
        %v825 = vpow.pop %v824
        %v826 = vmul.f32 %v814, 1.442695
        %v827 = vpow.pop %v826
        %v828 = vmul.f32 %v815, 1.442695
        %v829 = vpow.pop %v828
        %v830 = vmul.f32 %v816, 1.442695
        %v831 = vpow.pop %v830
        %v832 = vmul.f32 %v817, 1.442695
        %v833 = vpow.pop %v832
        %v834 = vsel %vm785, %v819, 0.0
        %835 = vadd.xlane.f32.xlu0 %v834
        %v836 = vpop.xlane.xlu0 %835
        %v837 = vsel %vm785, %v821, 0.0
        %838 = vadd.xlane.f32.xlu0 %v837
        %v839 = vpop.xlane.xlu0 %838
        %v840 = vsel %vm785, %v823, 0.0
        %841 = vadd.xlane.f32.xlu0 %v840
        %v842 = vpop.xlane.xlu0 %841
        %v843 = vsel %vm785, %v825, 0.0
        %844 = vadd.xlane.f32.xlu0 %v843
        %v845 = vpop.xlane.xlu0 %844
        %v846 = vsel %vm785, %v827, 0.0
        %847 = vadd.xlane.f32.xlu0 %v846
        %v848 = vpop.xlane.xlu0 %847
        %v849 = vsel %vm785, %v829, 0.0
        %850 = vadd.xlane.f32.xlu0 %v849
        %v851 = vpop.xlane.xlu0 %850
        %v852 = vsel %vm785, %v831, 0.0
        %853 = vadd.xlane.f32.xlu0 %v852
        %v854 = vpop.xlane.xlu0 %853
        %v855 = vsel %vm785, %v833, 0.0
        %856 = vadd.xlane.f32.xlu0 %v855
        %v857 = vpop.xlane.xlu0 %856
        %v858 = vrcp.pop %v836
        %v859 = vrcp.pop %v839
        %v860 = vrcp.pop %v842
        %v861 = vrcp.pop %v845
        %v862 = vrcp.pop %v848
        %v863 = vrcp.pop %v851
        %v864 = vrcp.pop %v854
        %v865 = vrcp.pop %v857
        %v866 = vmul.f32 %v819, %v858
        %v867 = vmul.f32 %v821, %v859
        %v868 = vmul.f32 %v823, %v860
        %v869 = vmul.f32 %v825, %v861
        %v870 = vmul.f32 %v827, %v862
        %v871 = vmul.f32 %v829, %v863
        %v872 = vmul.f32 %v831, %v864
        %v873 = vmul.f32 %v833, %v865
        %s874 = sadd.s32 %s601, 2
        %s875 = sld [smem:[#allocation3 + %s874]]
        %s876 = smul.u32 %s875, 64
        %s877 = scalar_lea.vmem %s498, %s876 [#allocation7]
        %v878 = vld [vmem:[%s877] sm:$0xff]
        %v879 = vld [vmem:[%s877 + $0x8] sm:$0xff]
        %v880 = vld [vmem:[%s877 + $0x10] sm:$0xff]
        %v881 = vld [vmem:[%s877 + $0x18] sm:$0xff]
        %v882 = vld [vmem:[%s877 + $0x20] sm:$0xff]
        %v883 = vld [vmem:[%s877 + $0x28] sm:$0xff]
        %v884 = vld [vmem:[%s877 + $0x30] sm:$0xff]
        %v885 = vld [vmem:[%s877 + $0x38] sm:$0xff]
        %s886 = scalar_lea.vmem %s507, %s876 [#allocation9]
        %v887 = vld [vmem:[%s886] sm:$0xff]
        %v888 = vld [vmem:[%s886 + $0x8] sm:$0xff]
        %v889 = vld [vmem:[%s886 + $0x10] sm:$0xff]
        %v890 = vld [vmem:[%s886 + $0x18] sm:$0xff]
        %v891 = vld [vmem:[%s886 + $0x20] sm:$0xff]
        %v892 = vld [vmem:[%s886 + $0x28] sm:$0xff]
        %v893 = vld [vmem:[%s886 + $0x30] sm:$0xff]
        %v894 = vld [vmem:[%s886 + $0x38] sm:$0xff]
        %v896 = vsel %vm623, %v878, 0
        %v899 = vsel %vm623, %v879, 0
        %v902 = vsel %vm623, %v880, 0
        %v905 = vsel %vm623, %v881, 0
        %v908 = vsel %vm623, %v882, 0
        %v911 = vsel %vm623, %v883, 0
        %v914 = vsel %vm623, %v884, 0
        %v917 = vsel %vm623, %v885, 0
        %919 = vmatprep.subr.mxu0 0.0
        %920 = vmatpush1.xpose.msra.mxu0 %v896
        %921 = vmatprep.subr.mxu0 0.0
        %922 = vmatpush1.xpose.msra.mxu0 %v899
        %923 = vmatprep.subr.mxu0 0.0
        %924 = vmatpush1.xpose.msra.mxu0 %v902
        %925 = vmatprep.subr.mxu0 0.0
        %926 = vmatpush1.xpose.msra.mxu0 %v905
        %927 = vmatprep.subr.mxu0 0.0
        %928 = vmatpush1.xpose.msra.mxu0 %v908
        %929 = vmatprep.subr.mxu0 0.0
        %930 = vmatpush1.xpose.msra.mxu0 %v911
        %931 = vmatprep.subr.mxu0 0.0
        %932 = vmatpush1.xpose.msra.mxu0 %v914
        %933 = vmatprep.subr.mxu0 0.0
        %934 = vmatpush1.xpose.msra.mxu0 %v917
        %935 = vmatprep.subr.mxu0 0.0
        %936 = vmatpush1.xpose.msra.mxu0 0.0
        %937 = vmatprep.subr.mxu0 0.0
        %938 = vmatpush1.xpose.msra.mxu0 0.0
        %939 = vmatprep.subr.mxu0 0.0
        %940 = vmatpush1.xpose.msra.mxu0 0.0
        %941 = vmatprep.subr.mxu0 0.0
        %942 = vmatpush1.xpose.msra.mxu0 0.0
        %943 = vmatprep.subr.mxu0 0.0
        %944 = vmatpush1.xpose.msra.mxu0 0.0
        %945 = vmatprep.subr.mxu0 0.0
        %946 = vmatpush1.xpose.msra.mxu0 0.0
        %947 = vmatprep.subr.mxu0 0.0
        %948 = vmatpush1.xpose.msra.mxu0 0.0
        %949 = vmatprep.subr.mxu0 0.0
        %950 = vmatpush1.xpose.msra.mxu0 0.0
        %951 = vmatprep.subr.mxu0 0.0
        %952 = vmatpush1.xpose.msra.mxu0 0.0
        %953 = vmatprep.subr.mxu0 0.0
        %954 = vmatpush1.xpose.msra.mxu0 0.0
        %955 = vmatprep.subr.mxu0 0.0
        %956 = vmatpush1.xpose.msra.mxu0 0.0
        %957 = vmatprep.subr.mxu0 0.0
        %958 = vmatpush1.xpose.msra.mxu0 0.0
        %959 = vmatprep.subr.mxu0 0.0
        %960 = vmatpush1.xpose.msra.mxu0 0.0
        %961 = vmatprep.subr.mxu0 0.0
        %962 = vmatpush1.xpose.msra.mxu0 0.0
        %963 = vmatprep.subr.mxu0 0.0
        %964 = vmatpush1.xpose.msra.mxu0 0.0
        %965 = vmatprep.subr.mxu0 0.0
        %966 = vmatpush1.xpose.msra.mxu0 0.0
        %967 = vmatprep.subr.mxu0 0.0
        %968 = vmatpush1.xpose.msra.mxu0 0.0
        %969 = vmatprep.subr.mxu0 0.0
        %970 = vmatpush1.xpose.msra.mxu0 0.0
        %971 = vmatprep.subr.mxu0 0.0
        %972 = vmatpush1.xpose.msra.mxu0 0.0
        %973 = vmatprep.subr.mxu0 0.0
        %974 = vmatpush1.xpose.msra.mxu0 0.0
        %975 = vmatprep.subr.mxu0 0.0
        %976 = vmatpush1.xpose.msra.mxu0 0.0
        %977 = vmatprep.subr.mxu0 0.0
        %978 = vmatpush1.xpose.msra.mxu0 0.0
        %979 = vmatprep.subr.mxu0 0.0
        %980 = vmatpush1.xpose.msra.mxu0 0.0
        %981 = vmatprep.subr.mxu0 0.0
        %982 = vmatpush1.xpose.msra.mxu0 0.0
        %983 = vmatprep.mubr.f32.mxu0 0.0
        %984 = vmatmul.mubr.f32.gmra.mrb[0].mxu0 %v625
        %v985 = vpop.f32.mrb[0].mxu0
        %v986 = vadd.f32 0.0, %v985
        %v987 = vpop.f32.mrb[0].mxu0
        %988 = vmatprep.mubr.f32.mxu0 0.0
        %989 = vmatmul.mubr.f32.gmra.mrb[0].mxu0 %v628
        %v990 = vpop.f32.mrb[0].mxu0
        %v991 = vadd.f32 0.0, %v990
        %v992 = vpop.f32.mrb[0].mxu0
        %993 = vmatprep.mubr.f32.mxu0 0.0
        %994 = vmatmul.mubr.f32.gmra.mrb[0].mxu0 %v631
        %v995 = vpop.f32.mrb[0].mxu0
        %v996 = vadd.f32 0.0, %v995
        %v997 = vpop.f32.mrb[0].mxu0
        %998 = vmatprep.mubr.f32.mxu0 0.0
        %999 = vmatmul.mubr.f32.gmra.mrb[0].mxu0 %v634
        %v1000 = vpop.f32.mrb[0].mxu0
        %v1001 = vadd.f32 0.0, %v1000
        %v1002 = vpop.f32.mrb[0].mxu0
        %1003 = vmatprep.mubr.f32.mxu0 0.0
        %1004 = vmatmul.mubr.f32.gmra.mrb[0].mxu0 %v637
        %v1005 = vpop.f32.mrb[0].mxu0
        %v1006 = vadd.f32 0.0, %v1005
        %v1007 = vpop.f32.mrb[0].mxu0
        %1008 = vmatprep.mubr.f32.mxu0 0.0
        %1009 = vmatmul.mubr.f32.gmra.mrb[0].mxu0 %v640
        %v1010 = vpop.f32.mrb[0].mxu0
        %v1011 = vadd.f32 0.0, %v1010
        %v1012 = vpop.f32.mrb[0].mxu0
        %1013 = vmatprep.mubr.f32.mxu0 0.0
        %1014 = vmatmul.mubr.f32.gmra.mrb[0].mxu0 %v643
        %v1015 = vpop.f32.mrb[0].mxu0
        %v1016 = vadd.f32 0.0, %v1015
        %v1017 = vpop.f32.mrb[0].mxu0
        %1018 = vmatprep.mubr.f32.mxu0 0.0
        %1019 = vmatmul.mubr.f32.gmra.mrb[0].mxu0 %v646
        %v1020 = vpop.f32.mrb[0].mxu0
        %v1021 = vadd.f32 0.0, %v1020
        %v1022 = vpop.f32.mrb[0].mxu0
        %1023 = vdwg.mxu0
        %v1024 = vmul.f32 %v986, 0.5
        %v1025 = vmul.f32 %v991, 0.5
        %v1026 = vmul.f32 %v996, 0.5
        %v1027 = vmul.f32 %v1001, 0.5
        %v1028 = vmul.f32 %v1006, 0.5
        %v1029 = vmul.f32 %v1011, 0.5
        %v1030 = vmul.f32 %v1016, 0.5
        %v1031 = vmul.f32 %v1021, 0.5
        %v1032 = vsel %vm785, %v1024, -inf
        %1033 = vmax.xlane.f32.xlu0 %v1032
        %v1034 = vpop.xlane.xlu0 %1033
        %v1035 = vsel %vm785, %v1025, -inf
        %1036 = vmax.xlane.f32.xlu0 %v1035
        %v1037 = vpop.xlane.xlu0 %1036
        %v1038 = vsel %vm785, %v1026, -inf
        %1039 = vmax.xlane.f32.xlu0 %v1038
        %v1040 = vpop.xlane.xlu0 %1039
        %v1041 = vsel %vm785, %v1027, -inf
        %1042 = vmax.xlane.f32.xlu0 %v1041
        %v1043 = vpop.xlane.xlu0 %1042
        %v1044 = vsel %vm785, %v1028, -inf
        %1045 = vmax.xlane.f32.xlu0 %v1044
        %v1046 = vpop.xlane.xlu0 %1045
        %v1047 = vsel %vm785, %v1029, -inf
        %1048 = vmax.xlane.f32.xlu0 %v1047
        %v1049 = vpop.xlane.xlu0 %1048
        %v1050 = vsel %vm785, %v1030, -inf
        %1051 = vmax.xlane.f32.xlu0 %v1050
        %v1052 = vpop.xlane.xlu0 %1051
        %v1053 = vsel %vm785, %v1031, -inf
        %1054 = vmax.xlane.f32.xlu0 %v1053
        %v1055 = vpop.xlane.xlu0 %1054
        %v1056 = vsub.f32 %v1024, %v1034
        %v1057 = vsub.f32 %v1025, %v1037
        %v1058 = vsub.f32 %v1026, %v1040
        %v1059 = vsub.f32 %v1027, %v1043
        %v1060 = vsub.f32 %v1028, %v1046
        %v1061 = vsub.f32 %v1029, %v1049
        %v1062 = vsub.f32 %v1030, %v1052
        %v1063 = vsub.f32 %v1031, %v1055
        %v1064 = vmul.f32 %v1056, 1.442695
        %v1065 = vpow.pop %v1064
        %v1066 = vmul.f32 %v1057, 1.442695
        %v1067 = vpow.pop %v1066
        %v1068 = vmul.f32 %v1058, 1.442695
        %v1069 = vpow.pop %v1068
        %v1070 = vmul.f32 %v1059, 1.442695
        %v1071 = vpow.pop %v1070
        %v1072 = vmul.f32 %v1060, 1.442695
        %v1073 = vpow.pop %v1072
        %v1074 = vmul.f32 %v1061, 1.442695
        %v1075 = vpow.pop %v1074
        %v1076 = vmul.f32 %v1062, 1.442695
        %v1077 = vpow.pop %v1076
        %v1078 = vmul.f32 %v1063, 1.442695
        %v1079 = vpow.pop %v1078
        %v1080 = vsel %vm785, %v1065, 0.0
        %1081 = vadd.xlane.f32.xlu0 %v1080
        %v1082 = vpop.xlane.xlu0 %1081
        %v1083 = vsel %vm785, %v1067, 0.0
        %1084 = vadd.xlane.f32.xlu0 %v1083
        %v1085 = vpop.xlane.xlu0 %1084
        %v1086 = vsel %vm785, %v1069, 0.0
        %1087 = vadd.xlane.f32.xlu0 %v1086
        %v1088 = vpop.xlane.xlu0 %1087
        %v1089 = vsel %vm785, %v1071, 0.0
        %1090 = vadd.xlane.f32.xlu0 %v1089
        %v1091 = vpop.xlane.xlu0 %1090
        %v1092 = vsel %vm785, %v1073, 0.0
        %1093 = vadd.xlane.f32.xlu0 %v1092
        %v1094 = vpop.xlane.xlu0 %1093
        %v1095 = vsel %vm785, %v1075, 0.0
        %1096 = vadd.xlane.f32.xlu0 %v1095
        %v1097 = vpop.xlane.xlu0 %1096
        %v1098 = vsel %vm785, %v1077, 0.0
        %1099 = vadd.xlane.f32.xlu0 %v1098
        %v1100 = vpop.xlane.xlu0 %1099
        %v1101 = vsel %vm785, %v1079, 0.0
        %1102 = vadd.xlane.f32.xlu0 %v1101
        %v1103 = vpop.xlane.xlu0 %1102
        %v1104 = vrcp.pop %v1082
        %v1105 = vrcp.pop %v1085
        %v1106 = vrcp.pop %v1088
        %v1107 = vrcp.pop %v1091
        %v1108 = vrcp.pop %v1094
        %v1109 = vrcp.pop %v1097
        %v1110 = vrcp.pop %v1100
        %v1111 = vrcp.pop %v1103
        %v1112 = vmul.f32 %v1065, %v1104
        %v1113 = vmul.f32 %v1067, %v1105
        %v1114 = vmul.f32 %v1069, %v1106
        %v1115 = vmul.f32 %v1071, %v1107
        %v1116 = vmul.f32 %v1073, %v1108
        %v1117 = vmul.f32 %v1075, %v1109
        %v1118 = vmul.f32 %v1077, %v1110
        %v1119 = vmul.f32 %v1079, %v1111
        %v1121 = vsel %vm785, %v1112, 0
        %v1124 = vsel %vm785, %v1113, 0
        %v1127 = vsel %vm785, %v1114, 0
        %v1130 = vsel %vm785, %v1115, 0
        %v1133 = vsel %vm785, %v1116, 0
        %v1136 = vsel %vm785, %v1117, 0
        %v1139 = vsel %vm785, %v1118, 0
        %v1142 = vsel %vm785, %v1119, 0
        %1144 = vmatprep.subr.mxu0 0.0
        %1145 = vmatpush1.msra.mxu0 %v887
        %1146 = vmatprep.subr.mxu0 0.0
        %1147 = vmatpush1.msra.mxu0 %v888
        %1148 = vmatprep.subr.mxu0 0.0
        %1149 = vmatpush1.msra.mxu0 %v889
        %1150 = vmatprep.subr.mxu0 0.0
        %1151 = vmatpush1.msra.mxu0 %v890
        %1152 = vmatprep.subr.mxu0 0.0
        %1153 = vmatpush1.msra.mxu0 %v891
        %1154 = vmatprep.subr.mxu0 0.0
        %1155 = vmatpush1.msra.mxu0 %v892
        %1156 = vmatprep.subr.mxu0 0.0
        %1157 = vmatpush1.msra.mxu0 %v893
        %1158 = vmatprep.subr.mxu0 0.0
        %1159 = vmatpush1.msra.mxu0 %v894
        %1160 = vmatprep.subr.mxu0 0.0
        %1161 = vmatpush1.msra.mxu0 0.0
        %1162 = vmatprep.subr.mxu0 0.0
        %1163 = vmatpush1.msra.mxu0 0.0
        %1164 = vmatprep.subr.mxu0 0.0
        %1165 = vmatpush1.msra.mxu0 0.0
        %1166 = vmatprep.subr.mxu0 0.0
        %1167 = vmatpush1.msra.mxu0 0.0
        %1168 = vmatprep.subr.mxu0 0.0
        %1169 = vmatpush1.msra.mxu0 0.0
        %1170 = vmatprep.subr.mxu0 0.0
        %1171 = vmatpush1.msra.mxu0 0.0
        %1172 = vmatprep.subr.mxu0 0.0
        %1173 = vmatpush1.msra.mxu0 0.0
        %1174 = vmatprep.subr.mxu0 0.0
        %1175 = vmatpush1.msra.mxu0 0.0
        %1176 = vmatprep.subr.mxu0 0.0
        %1177 = vmatpush1.msra.mxu0 0.0
        %1178 = vmatprep.subr.mxu0 0.0
        %1179 = vmatpush1.msra.mxu0 0.0
        %1180 = vmatprep.subr.mxu0 0.0
        %1181 = vmatpush1.msra.mxu0 0.0
        %1182 = vmatprep.subr.mxu0 0.0
        %1183 = vmatpush1.msra.mxu0 0.0
        %1184 = vmatprep.subr.mxu0 0.0
        %1185 = vmatpush1.msra.mxu0 0.0
        %1186 = vmatprep.subr.mxu0 0.0
        %1187 = vmatpush1.msra.mxu0 0.0
        %1188 = vmatprep.subr.mxu0 0.0
        %1189 = vmatpush1.msra.mxu0 0.0
        %1190 = vmatprep.subr.mxu0 0.0
        %1191 = vmatpush1.msra.mxu0 0.0
        %1192 = vmatprep.subr.mxu0 0.0
        %1193 = vmatpush1.msra.mxu0 0.0
        %1194 = vmatprep.subr.mxu0 0.0
        %1195 = vmatpush1.msra.mxu0 0.0
        %1196 = vmatprep.subr.mxu0 0.0
        %1197 = vmatpush1.msra.mxu0 0.0
        %1198 = vmatprep.subr.mxu0 0.0
        %1199 = vmatpush1.msra.mxu0 0.0
        %1200 = vmatprep.subr.mxu0 0.0
        %1201 = vmatpush1.msra.mxu0 0.0
        %1202 = vmatprep.subr.mxu0 0.0
        %1203 = vmatpush1.msra.mxu0 0.0
        %1204 = vmatprep.subr.mxu0 0.0
        %1205 = vmatpush1.msra.mxu0 0.0
        %1206 = vmatprep.subr.mxu0 0.0
        %1207 = vmatpush1.msra.mxu0 0.0
        %1208 = vmatprep.mubr.f32.mxu0 0.0
        %1209 = vmatmul.mubr.f32.gmra.mrb[0].mxu0 %v1121
        %v1210 = vpop.f32.mrb[0].mxu0
        %v1211 = vadd.f32 0.0, %v1210
        %v1212 = vpop.f32.mrb[0].mxu0
        %1213 = vmatprep.mubr.f32.mxu0 0.0
        %1214 = vmatmul.mubr.f32.gmra.mrb[0].mxu0 %v1124
        %v1215 = vpop.f32.mrb[0].mxu0
        %v1216 = vadd.f32 0.0, %v1215
        %v1217 = vpop.f32.mrb[0].mxu0
        %1218 = vmatprep.mubr.f32.mxu0 0.0
        %1219 = vmatmul.mubr.f32.gmra.mrb[0].mxu0 %v1127
        %v1220 = vpop.f32.mrb[0].mxu0
        %v1221 = vadd.f32 0.0, %v1220
        %v1222 = vpop.f32.mrb[0].mxu0
        %1223 = vmatprep.mubr.f32.mxu0 0.0
        %1224 = vmatmul.mubr.f32.gmra.mrb[0].mxu0 %v1130
        %v1225 = vpop.f32.mrb[0].mxu0
        %v1226 = vadd.f32 0.0, %v1225
        %v1227 = vpop.f32.mrb[0].mxu0
        %1228 = vmatprep.mubr.f32.mxu0 0.0
        %1229 = vmatmul.mubr.f32.gmra.mrb[0].mxu0 %v1133
        %v1230 = vpop.f32.mrb[0].mxu0
        %v1231 = vadd.f32 0.0, %v1230
        %v1232 = vpop.f32.mrb[0].mxu0
        %1233 = vmatprep.mubr.f32.mxu0 0.0
        %1234 = vmatmul.mubr.f32.gmra.mrb[0].mxu0 %v1136
        %v1235 = vpop.f32.mrb[0].mxu0
        %v1236 = vadd.f32 0.0, %v1235
        %v1237 = vpop.f32.mrb[0].mxu0
        %1238 = vmatprep.mubr.f32.mxu0 0.0
        %1239 = vmatmul.mubr.f32.gmra.mrb[0].mxu0 %v1139
        %v1240 = vpop.f32.mrb[0].mxu0
        %v1241 = vadd.f32 0.0, %v1240
        %v1242 = vpop.f32.mrb[0].mxu0
        %1243 = vmatprep.mubr.f32.mxu0 0.0
        %1244 = vmatmul.mubr.f32.gmra.mrb[0].mxu0 %v1142
        %v1245 = vpop.f32.mrb[0].mxu0
        %v1246 = vadd.f32 0.0, %v1245
        %v1247 = vpop.f32.mrb[0].mxu0
        %1248 = vdwg.mxu0
        %v1250 = vsel %vm785, %v866, 0
        %v1253 = vsel %vm785, %v867, 0
        %v1256 = vsel %vm785, %v868, 0
        %v1259 = vsel %vm785, %v869, 0
        %v1262 = vsel %vm785, %v870, 0
        %v1265 = vsel %vm785, %v871, 0
        %v1268 = vsel %vm785, %v872, 0
        %v1271 = vsel %vm785, %v873, 0
        %1273 = vmatprep.subr.mxu0 0.0
        %1274 = vmatpush1.msra.mxu0 %v615
        %1275 = vmatprep.subr.mxu0 0.0
        %1276 = vmatpush1.msra.mxu0 %v616
        %1277 = vmatprep.subr.mxu0 0.0
        %1278 = vmatpush1.msra.mxu0 %v617
        %1279 = vmatprep.subr.mxu0 0.0
        %1280 = vmatpush1.msra.mxu0 %v618
        %1281 = vmatprep.subr.mxu0 0.0
        %1282 = vmatpush1.msra.mxu0 %v619
        %1283 = vmatprep.subr.mxu0 0.0
        %1284 = vmatpush1.msra.mxu0 %v620
        %1285 = vmatprep.subr.mxu0 0.0
        %1286 = vmatpush1.msra.mxu0 %v621
        %1287 = vmatprep.subr.mxu0 0.0
        %1288 = vmatpush1.msra.mxu0 %v622
        %1289 = vmatprep.subr.mxu0 0.0
        %1290 = vmatpush1.msra.mxu0 0.0
        %1291 = vmatprep.subr.mxu0 0.0
        %1292 = vmatpush1.msra.mxu0 0.0
        %1293 = vmatprep.subr.mxu0 0.0
        %1294 = vmatpush1.msra.mxu0 0.0
        %1295 = vmatprep.subr.mxu0 0.0
        %1296 = vmatpush1.msra.mxu0 0.0
        %1297 = vmatprep.subr.mxu0 0.0
        %1298 = vmatpush1.msra.mxu0 0.0
        %1299 = vmatprep.subr.mxu0 0.0
        %1300 = vmatpush1.msra.mxu0 0.0
        %1301 = vmatprep.subr.mxu0 0.0
        %1302 = vmatpush1.msra.mxu0 0.0
        %1303 = vmatprep.subr.mxu0 0.0
        %1304 = vmatpush1.msra.mxu0 0.0
        %1305 = vmatprep.subr.mxu0 0.0
        %1306 = vmatpush1.msra.mxu0 0.0
        %1307 = vmatprep.subr.mxu0 0.0
        %1308 = vmatpush1.msra.mxu0 0.0
        %1309 = vmatprep.subr.mxu0 0.0
        %1310 = vmatpush1.msra.mxu0 0.0
        %1311 = vmatprep.subr.mxu0 0.0
        %1312 = vmatpush1.msra.mxu0 0.0
        %1313 = vmatprep.subr.mxu0 0.0
        %1314 = vmatpush1.msra.mxu0 0.0
        %1315 = vmatprep.subr.mxu0 0.0
        %1316 = vmatpush1.msra.mxu0 0.0
        %1317 = vmatprep.subr.mxu0 0.0
        %1318 = vmatpush1.msra.mxu0 0.0
        %1319 = vmatprep.subr.mxu0 0.0
        %1320 = vmatpush1.msra.mxu0 0.0
        %1321 = vmatprep.subr.mxu0 0.0
        %1322 = vmatpush1.msra.mxu0 0.0
        %1323 = vmatprep.subr.mxu0 0.0
        %1324 = vmatpush1.msra.mxu0 0.0
        %1325 = vmatprep.subr.mxu0 0.0
        %1326 = vmatpush1.msra.mxu0 0.0
        %1327 = vmatprep.subr.mxu0 0.0
        %1328 = vmatpush1.msra.mxu0 0.0
        %1329 = vmatprep.subr.mxu0 0.0
        %1330 = vmatpush1.msra.mxu0 0.0
        %1331 = vmatprep.subr.mxu0 0.0
        %1332 = vmatpush1.msra.mxu0 0.0
        %1333 = vmatprep.subr.mxu0 0.0
        %1334 = vmatpush1.msra.mxu0 0.0
        %1335 = vmatprep.subr.mxu0 0.0
        %1336 = vmatpush1.msra.mxu0 0.0
        %1337 = vmatprep.mubr.f32.mxu0 0.0
        %1338 = vmatmul.mubr.f32.gmra.mrb[0].mxu0 %v1250
        %v1339 = vpop.f32.mrb[0].mxu0
        %v1340 = vadd.f32 %v1211, %v1339
        %v1341 = vpop.f32.mrb[0].mxu0
        %1342 = vmatprep.mubr.f32.mxu0 0.0
        %1343 = vmatmul.mubr.f32.gmra.mrb[0].mxu0 %v1253
        %v1344 = vpop.f32.mrb[0].mxu0
        %v1345 = vadd.f32 %v1216, %v1344
        %v1346 = vpop.f32.mrb[0].mxu0
        %1347 = vmatprep.mubr.f32.mxu0 0.0
        %1348 = vmatmul.mubr.f32.gmra.mrb[0].mxu0 %v1256
        %v1349 = vpop.f32.mrb[0].mxu0
        %v1350 = vadd.f32 %v1221, %v1349
        %v1351 = vpop.f32.mrb[0].mxu0
        %1352 = vmatprep.mubr.f32.mxu0 0.0
        %1353 = vmatmul.mubr.f32.gmra.mrb[0].mxu0 %v1259
        %v1354 = vpop.f32.mrb[0].mxu0
        %v1355 = vadd.f32 %v1226, %v1354
        %v1356 = vpop.f32.mrb[0].mxu0
        %1357 = vmatprep.mubr.f32.mxu0 0.0
        %1358 = vmatmul.mubr.f32.gmra.mrb[0].mxu0 %v1262
        %v1359 = vpop.f32.mrb[0].mxu0
        %v1360 = vadd.f32 %v1231, %v1359
        %v1361 = vpop.f32.mrb[0].mxu0
        %1362 = vmatprep.mubr.f32.mxu0 0.0
        %1363 = vmatmul.mubr.f32.gmra.mrb[0].mxu0 %v1265
        %v1364 = vpop.f32.mrb[0].mxu0
        %v1365 = vadd.f32 %v1236, %v1364
        %v1366 = vpop.f32.mrb[0].mxu0
        %1367 = vmatprep.mubr.f32.mxu0 0.0
        %1368 = vmatmul.mubr.f32.gmra.mrb[0].mxu0 %v1268
        %v1369 = vpop.f32.mrb[0].mxu0
        %v1370 = vadd.f32 %v1241, %v1369
        %v1371 = vpop.f32.mrb[0].mxu0
        %1372 = vmatprep.mubr.f32.mxu0 0.0
        %1373 = vmatmul.mubr.f32.gmra.mrb[0].mxu0 %v1271
        %v1374 = vpop.f32.mrb[0].mxu0
        %v1375 = vadd.f32 %v1246, %v1374
        %v1376 = vpop.f32.mrb[0].mxu0
        %1377 = vdwg.mxu0
        %v1378 = vld [vmem:[#allocation12] sm:$0xf]
        %v1379 = vld [vmem:[#allocation13] sm:$0x1]
        %v1380 = vmul.f32 %v1379, 2.0
        %v1382 = vlaneseq
        %v1383 = vshrl.u32 %v1382, 7
        %v1384 = vsub.s32 0, %v1383
        %v1385 = vrot.slane %v1380, %v1384
        %v1388 = vsel %vm623, %v1340, 0
        %v1391 = vsel %vm623, %v1345, 0
        %v1394 = vsel %vm623, %v1350, 0
        %v1397 = vsel %vm623, %v1355, 0
        %v1400 = vsel %vm623, %v1360, 0
        %v1403 = vsel %vm623, %v1365, 0
        %v1406 = vsel %vm623, %v1370, 0
        %v1409 = vsel %vm623, %v1375, 0
        %vm1411 = vcmask 1043456
        %v1413 = vsel %vm1411, %v1378, 0
        %1415 = vmatprep.subr.mxu0 0.0
        %1416 = vmatpush1.msra.mxu0 %v1413
        %1417 = vmatprep.subr.mxu0 0.0
        %1418 = vmatpush1.msra.mxu0 0.0
        %1419 = vmatprep.subr.mxu0 0.0
        %1420 = vmatpush1.msra.mxu0 0.0
        %1421 = vmatprep.subr.mxu0 0.0
        %1422 = vmatpush1.msra.mxu0 0.0
        %1423 = vmatprep.subr.mxu0 0.0
        %1424 = vmatpush1.msra.mxu0 0.0
        %1425 = vmatprep.subr.mxu0 0.0
        %1426 = vmatpush1.msra.mxu0 0.0
        %1427 = vmatprep.subr.mxu0 0.0
        %1428 = vmatpush1.msra.mxu0 0.0
        %1429 = vmatprep.subr.mxu0 0.0
        %1430 = vmatpush1.msra.mxu0 0.0
        %1431 = vmatprep.subr.mxu0 0.0
        %1432 = vmatpush1.msra.mxu0 0.0
        %1433 = vmatprep.subr.mxu0 0.0
        %1434 = vmatpush1.msra.mxu0 0.0
        %1435 = vmatprep.subr.mxu0 0.0
        %1436 = vmatpush1.msra.mxu0 0.0
        %1437 = vmatprep.subr.mxu0 0.0
        %1438 = vmatpush1.msra.mxu0 0.0
        %1439 = vmatprep.subr.mxu0 0.0
        %1440 = vmatpush1.msra.mxu0 0.0
        %1441 = vmatprep.subr.mxu0 0.0
        %1442 = vmatpush1.msra.mxu0 0.0
        %1443 = vmatprep.subr.mxu0 0.0
        %1444 = vmatpush1.msra.mxu0 0.0
        %1445 = vmatprep.subr.mxu0 0.0
        %1446 = vmatpush1.msra.mxu0 0.0
        %1447 = vmatprep.subr.mxu0 0.0
        %1448 = vmatpush1.msra.mxu0 0.0
        %1449 = vmatprep.subr.mxu0 0.0
        %1450 = vmatpush1.msra.mxu0 0.0
        %1451 = vmatprep.subr.mxu0 0.0
        %1452 = vmatpush1.msra.mxu0 0.0
        %1453 = vmatprep.subr.mxu0 0.0
        %1454 = vmatpush1.msra.mxu0 0.0
        %1455 = vmatprep.subr.mxu0 0.0
        %1456 = vmatpush1.msra.mxu0 0.0
        %1457 = vmatprep.subr.mxu0 0.0
        %1458 = vmatpush1.msra.mxu0 0.0
        %1459 = vmatprep.subr.mxu0 0.0
        %1460 = vmatpush1.msra.mxu0 0.0
        %1461 = vmatprep.subr.mxu0 0.0
        %1462 = vmatpush1.msra.mxu0 0.0
        %1463 = vmatprep.subr.mxu0 0.0
        %1464 = vmatpush1.msra.mxu0 0.0
        %1465 = vmatprep.subr.mxu0 0.0
        %1466 = vmatpush1.msra.mxu0 0.0
        %1467 = vmatprep.subr.mxu0 0.0
        %1468 = vmatpush1.msra.mxu0 0.0
        %1469 = vmatprep.subr.mxu0 0.0
        %1470 = vmatpush1.msra.mxu0 0.0
        %1471 = vmatprep.subr.mxu0 0.0
        %1472 = vmatpush1.msra.mxu0 0.0
        %1473 = vmatprep.subr.mxu0 0.0
        %1474 = vmatpush1.msra.mxu0 0.0
        %1475 = vmatprep.subr.mxu0 0.0
        %1476 = vmatpush1.msra.mxu0 0.0
        %1477 = vmatprep.subr.mxu0 0.0
        %1478 = vmatpush1.msra.mxu0 0.0
        %1479 = vmatprep.mubr.f32.mxu0 0.0
        %1480 = vmatmul.mubr.f32.gmra.mrb[0].mxu0 %v1388
        %v1481 = vpop.f32.mrb[0].mxu0
        %v1482 = vadd.f32 %v1385, %v1481
        %v1483 = vpop.f32.mrb[0].mxu0
        %1484 = vmatprep.mubr.f32.mxu0 0.0
        %1485 = vmatmul.mubr.f32.gmra.mrb[0].mxu0 %v1391
        %v1486 = vpop.f32.mrb[0].mxu0
        %v1487 = vadd.f32 %v1385, %v1486
        %v1488 = vpop.f32.mrb[0].mxu0
        %1489 = vmatprep.mubr.f32.mxu0 0.0
        %1490 = vmatmul.mubr.f32.gmra.mrb[0].mxu0 %v1394
        %v1491 = vpop.f32.mrb[0].mxu0
        %v1492 = vadd.f32 %v1385, %v1491
        %v1493 = vpop.f32.mrb[0].mxu0
        %1494 = vmatprep.mubr.f32.mxu0 0.0
        %1495 = vmatmul.mubr.f32.gmra.mrb[0].mxu0 %v1397
        %v1496 = vpop.f32.mrb[0].mxu0
        %v1497 = vadd.f32 %v1385, %v1496
        %v1498 = vpop.f32.mrb[0].mxu0
        %1499 = vmatprep.mubr.f32.mxu0 0.0
        %1500 = vmatmul.mubr.f32.gmra.mrb[0].mxu0 %v1400
        %v1501 = vpop.f32.mrb[0].mxu0
        %v1502 = vadd.f32 %v1385, %v1501
        %v1503 = vpop.f32.mrb[0].mxu0
        %1504 = vmatprep.mubr.f32.mxu0 0.0
        %1505 = vmatmul.mubr.f32.gmra.mrb[0].mxu0 %v1403
        %v1506 = vpop.f32.mrb[0].mxu0
        %v1507 = vadd.f32 %v1385, %v1506
        %v1508 = vpop.f32.mrb[0].mxu0
        %1509 = vmatprep.mubr.f32.mxu0 0.0
        %1510 = vmatmul.mubr.f32.gmra.mrb[0].mxu0 %v1406
        %v1511 = vpop.f32.mrb[0].mxu0
        %v1512 = vadd.f32 %v1385, %v1511
        %v1513 = vpop.f32.mrb[0].mxu0
        %1514 = vmatprep.mubr.f32.mxu0 0.0
        %1515 = vmatmul.mubr.f32.gmra.mrb[0].mxu0 %v1409
        %v1516 = vpop.f32.mrb[0].mxu0
        %v1517 = vadd.f32 %v1385, %v1516
        %v1518 = vpop.f32.mrb[0].mxu0
        %1519 = vdwg.mxu0
        %v1520 = vld [vmem:[%s516] sm:$0xff]
        %v1521 = vld [vmem:[%s516 + $0x8] sm:$0xff]
        %v1522 = vld [vmem:[%s516 + $0x10] sm:$0xff]
        %v1523 = vld [vmem:[%s516 + $0x18] sm:$0xff]
        %v1524 = vld [vmem:[%s516 + $0x20] sm:$0xff]
        %v1525 = vld [vmem:[%s516 + $0x28] sm:$0xff]
        %v1526 = vld [vmem:[%s516 + $0x30] sm:$0xff]
        %v1527 = vld [vmem:[%s516 + $0x38] sm:$0xff]
        %v1528 = vld [vmem:[#allocation15] sm:$0xff]
        %vm1529 = vcmask 64512
        %v1531 = vsel %vm1529, %v1520, 0
        %v1534 = vsel %vm1529, %v1521, 0
        %v1537 = vsel %vm1529, %v1522, 0
        %v1540 = vsel %vm1529, %v1523, 0
        %v1543 = vsel %vm1529, %v1524, 0
        %v1546 = vsel %vm1529, %v1525, 0
        %v1549 = vsel %vm1529, %v1526, 0
        %v1552 = vsel %vm1529, %v1527, 0
        %1554 = vmatprep.subr.mxu0 0.0
        %1555 = vmatpush1.msra.mxu0 %v1528
        %1556 = vmatprep.subr.mxu0 0.0
        %1557 = vmatpush1.msra.mxu0 0.0
        %1558 = vmatprep.subr.mxu0 0.0
        %1559 = vmatpush1.msra.mxu0 0.0
        %1560 = vmatprep.subr.mxu0 0.0
        %1561 = vmatpush1.msra.mxu0 0.0
        %1562 = vmatprep.subr.mxu0 0.0
        %1563 = vmatpush1.msra.mxu0 0.0
        %1564 = vmatprep.subr.mxu0 0.0
        %1565 = vmatpush1.msra.mxu0 0.0
        %1566 = vmatprep.subr.mxu0 0.0
        %1567 = vmatpush1.msra.mxu0 0.0
        %1568 = vmatprep.subr.mxu0 0.0
        %1569 = vmatpush1.msra.mxu0 0.0
        %1570 = vmatprep.subr.mxu0 0.0
        %1571 = vmatpush1.msra.mxu0 0.0
        %1572 = vmatprep.subr.mxu0 0.0
        %1573 = vmatpush1.msra.mxu0 0.0
        %1574 = vmatprep.subr.mxu0 0.0
        %1575 = vmatpush1.msra.mxu0 0.0
        %1576 = vmatprep.subr.mxu0 0.0
        %1577 = vmatpush1.msra.mxu0 0.0
        %1578 = vmatprep.subr.mxu0 0.0
        %1579 = vmatpush1.msra.mxu0 0.0
        %1580 = vmatprep.subr.mxu0 0.0
        %1581 = vmatpush1.msra.mxu0 0.0
        %1582 = vmatprep.subr.mxu0 0.0
        %1583 = vmatpush1.msra.mxu0 0.0
        %1584 = vmatprep.subr.mxu0 0.0
        %1585 = vmatpush1.msra.mxu0 0.0
        %1586 = vmatprep.subr.mxu0 0.0
        %1587 = vmatpush1.msra.mxu0 0.0
        %1588 = vmatprep.subr.mxu0 0.0
        %1589 = vmatpush1.msra.mxu0 0.0
        %1590 = vmatprep.subr.mxu0 0.0
        %1591 = vmatpush1.msra.mxu0 0.0
        %1592 = vmatprep.subr.mxu0 0.0
        %1593 = vmatpush1.msra.mxu0 0.0
        %1594 = vmatprep.subr.mxu0 0.0
        %1595 = vmatpush1.msra.mxu0 0.0
        %1596 = vmatprep.subr.mxu0 0.0
        %1597 = vmatpush1.msra.mxu0 0.0
        %1598 = vmatprep.subr.mxu0 0.0
        %1599 = vmatpush1.msra.mxu0 0.0
        %1600 = vmatprep.subr.mxu0 0.0
        %1601 = vmatpush1.msra.mxu0 0.0
        %1602 = vmatprep.subr.mxu0 0.0
        %1603 = vmatpush1.msra.mxu0 0.0
        %1604 = vmatprep.subr.mxu0 0.0
        %1605 = vmatpush1.msra.mxu0 0.0
        %1606 = vmatprep.subr.mxu0 0.0
        %1607 = vmatpush1.msra.mxu0 0.0
        %1608 = vmatprep.subr.mxu0 0.0
        %1609 = vmatpush1.msra.mxu0 0.0
        %1610 = vmatprep.subr.mxu0 0.0
        %1611 = vmatpush1.msra.mxu0 0.0
        %1612 = vmatprep.subr.mxu0 0.0
        %1613 = vmatpush1.msra.mxu0 0.0
        %1614 = vmatprep.subr.mxu0 0.0
        %1615 = vmatpush1.msra.mxu0 0.0
        %1616 = vmatprep.subr.mxu0 0.0
        %1617 = vmatpush1.msra.mxu0 0.0
        %1618 = vmatprep.mubr.f32.mxu0 0.0
        %1619 = vmatmul.mubr.f32.gmra.mrb[0].mxu0 %v1531
        %v1620 = vpop.f32.mrb[0].mxu0
        %v1621 = vadd.f32 0.0, %v1620
        %v1622 = vpop.f32.mrb[0].mxu0
        %1623 = vmatprep.mubr.f32.mxu0 0.0
        %1624 = vmatmul.mubr.f32.gmra.mrb[0].mxu0 %v1534
        %v1625 = vpop.f32.mrb[0].mxu0
        %v1626 = vadd.f32 0.0, %v1625
        %v1627 = vpop.f32.mrb[0].mxu0
        %1628 = vmatprep.mubr.f32.mxu0 0.0
        %1629 = vmatmul.mubr.f32.gmra.mrb[0].mxu0 %v1537
        %v1630 = vpop.f32.mrb[0].mxu0
        %v1631 = vadd.f32 0.0, %v1630
        %v1632 = vpop.f32.mrb[0].mxu0
        %1633 = vmatprep.mubr.f32.mxu0 0.0
        %1634 = vmatmul.mubr.f32.gmra.mrb[0].mxu0 %v1540
        %v1635 = vpop.f32.mrb[0].mxu0
        %v1636 = vadd.f32 0.0, %v1635
        %v1637 = vpop.f32.mrb[0].mxu0
        %1638 = vmatprep.mubr.f32.mxu0 0.0
        %1639 = vmatmul.mubr.f32.gmra.mrb[0].mxu0 %v1543
        %v1640 = vpop.f32.mrb[0].mxu0
        %v1641 = vadd.f32 0.0, %v1640
        %v1642 = vpop.f32.mrb[0].mxu0
        %1643 = vmatprep.mubr.f32.mxu0 0.0
        %1644 = vmatmul.mubr.f32.gmra.mrb[0].mxu0 %v1546
        %v1645 = vpop.f32.mrb[0].mxu0
        %v1646 = vadd.f32 0.0, %v1645
        %v1647 = vpop.f32.mrb[0].mxu0
        %1648 = vmatprep.mubr.f32.mxu0 0.0
        %1649 = vmatmul.mubr.f32.gmra.mrb[0].mxu0 %v1549
        %v1650 = vpop.f32.mrb[0].mxu0
        %v1651 = vadd.f32 0.0, %v1650
        %v1652 = vpop.f32.mrb[0].mxu0
        %1653 = vmatprep.mubr.f32.mxu0 0.0
        %1654 = vmatmul.mubr.f32.gmra.mrb[0].mxu0 %v1552
        %v1655 = vpop.f32.mrb[0].mxu0
        %v1656 = vadd.f32 0.0, %v1655
        %v1657 = vpop.f32.mrb[0].mxu0
        %1658 = vdwg.mxu0
        %v1659 = vadd.f32 %v1520, %v1621
        %v1660 = vadd.f32 %v1521, %v1626
        %v1661 = vadd.f32 %v1522, %v1631
        %v1662 = vadd.f32 %v1523, %v1636
        %v1663 = vadd.f32 %v1524, %v1641
        %v1664 = vadd.f32 %v1525, %v1646
        %v1665 = vadd.f32 %v1526, %v1651
        %v1666 = vadd.f32 %v1527, %v1656
        %v1667 = vld [vmem:[#allocation16] sm:$0xff]
        %v1669 = vsel %vm1529, %v1482, 0
        %v1672 = vsel %vm1529, %v1487, 0
        %v1675 = vsel %vm1529, %v1492, 0
        %v1678 = vsel %vm1529, %v1497, 0
        %v1681 = vsel %vm1529, %v1502, 0
        %v1684 = vsel %vm1529, %v1507, 0
        %v1687 = vsel %vm1529, %v1512, 0
        %v1690 = vsel %vm1529, %v1517, 0
        %1692 = vmatprep.subr.mxu0 0.0
        %1693 = vmatpush1.msra.mxu0 %v1667
        %1694 = vmatprep.subr.mxu0 0.0
        %1695 = vmatpush1.msra.mxu0 0.0
        %1696 = vmatprep.subr.mxu0 0.0
        %1697 = vmatpush1.msra.mxu0 0.0
        %1698 = vmatprep.subr.mxu0 0.0
        %1699 = vmatpush1.msra.mxu0 0.0
        %1700 = vmatprep.subr.mxu0 0.0
        %1701 = vmatpush1.msra.mxu0 0.0
        %1702 = vmatprep.subr.mxu0 0.0
        %1703 = vmatpush1.msra.mxu0 0.0
        %1704 = vmatprep.subr.mxu0 0.0
        %1705 = vmatpush1.msra.mxu0 0.0
        %1706 = vmatprep.subr.mxu0 0.0
        %1707 = vmatpush1.msra.mxu0 0.0
        %1708 = vmatprep.subr.mxu0 0.0
        %1709 = vmatpush1.msra.mxu0 0.0
        %1710 = vmatprep.subr.mxu0 0.0
        %1711 = vmatpush1.msra.mxu0 0.0
        %1712 = vmatprep.subr.mxu0 0.0
        %1713 = vmatpush1.msra.mxu0 0.0
        %1714 = vmatprep.subr.mxu0 0.0
        %1715 = vmatpush1.msra.mxu0 0.0
        %1716 = vmatprep.subr.mxu0 0.0
        %1717 = vmatpush1.msra.mxu0 0.0
        %1718 = vmatprep.subr.mxu0 0.0
        %1719 = vmatpush1.msra.mxu0 0.0
        %1720 = vmatprep.subr.mxu0 0.0
        %1721 = vmatpush1.msra.mxu0 0.0
        %1722 = vmatprep.subr.mxu0 0.0
        %1723 = vmatpush1.msra.mxu0 0.0
        %1724 = vmatprep.subr.mxu0 0.0
        %1725 = vmatpush1.msra.mxu0 0.0
        %1726 = vmatprep.subr.mxu0 0.0
        %1727 = vmatpush1.msra.mxu0 0.0
        %1728 = vmatprep.subr.mxu0 0.0
        %1729 = vmatpush1.msra.mxu0 0.0
        %1730 = vmatprep.subr.mxu0 0.0
        %1731 = vmatpush1.msra.mxu0 0.0
        %1732 = vmatprep.subr.mxu0 0.0
        %1733 = vmatpush1.msra.mxu0 0.0
        %1734 = vmatprep.subr.mxu0 0.0
        %1735 = vmatpush1.msra.mxu0 0.0
        %1736 = vmatprep.subr.mxu0 0.0
        %1737 = vmatpush1.msra.mxu0 0.0
        %1738 = vmatprep.subr.mxu0 0.0
        %1739 = vmatpush1.msra.mxu0 0.0
        %1740 = vmatprep.subr.mxu0 0.0
        %1741 = vmatpush1.msra.mxu0 0.0
        %1742 = vmatprep.subr.mxu0 0.0
        %1743 = vmatpush1.msra.mxu0 0.0
        %1744 = vmatprep.subr.mxu0 0.0
        %1745 = vmatpush1.msra.mxu0 0.0
        %1746 = vmatprep.subr.mxu0 0.0
        %1747 = vmatpush1.msra.mxu0 0.0
        %1748 = vmatprep.subr.mxu0 0.0
        %1749 = vmatpush1.msra.mxu0 0.0
        %1750 = vmatprep.subr.mxu0 0.0
        %1751 = vmatpush1.msra.mxu0 0.0
        %1752 = vmatprep.subr.mxu0 0.0
        %1753 = vmatpush1.msra.mxu0 0.0
        %1754 = vmatprep.subr.mxu0 0.0
        %1755 = vmatpush1.msra.mxu0 0.0
        %1756 = vmatprep.mubr.f32.mxu0 0.0
        %1757 = vmatmul.mubr.f32.gmra.mrb[0].mxu0 %v1669
        %v1758 = vpop.f32.mrb[0].mxu0
        %v1759 = vadd.f32 0.0, %v1758
        %v1760 = vpop.f32.mrb[0].mxu0
        %1761 = vmatprep.mubr.f32.mxu0 0.0
        %1762 = vmatmul.mubr.f32.gmra.mrb[0].mxu0 %v1672
        %v1763 = vpop.f32.mrb[0].mxu0
        %v1764 = vadd.f32 0.0, %v1763
        %v1765 = vpop.f32.mrb[0].mxu0
        %1766 = vmatprep.mubr.f32.mxu0 0.0
        %1767 = vmatmul.mubr.f32.gmra.mrb[0].mxu0 %v1675
        %v1768 = vpop.f32.mrb[0].mxu0
        %v1769 = vadd.f32 0.0, %v1768
        %v1770 = vpop.f32.mrb[0].mxu0
        %1771 = vmatprep.mubr.f32.mxu0 0.0
        %1772 = vmatmul.mubr.f32.gmra.mrb[0].mxu0 %v1678
        %v1773 = vpop.f32.mrb[0].mxu0
        %v1774 = vadd.f32 0.0, %v1773
        %v1775 = vpop.f32.mrb[0].mxu0
        %1776 = vmatprep.mubr.f32.mxu0 0.0
        %1777 = vmatmul.mubr.f32.gmra.mrb[0].mxu0 %v1681
        %v1778 = vpop.f32.mrb[0].mxu0
        %v1779 = vadd.f32 0.0, %v1778
        %v1780 = vpop.f32.mrb[0].mxu0
        %1781 = vmatprep.mubr.f32.mxu0 0.0
        %1782 = vmatmul.mubr.f32.gmra.mrb[0].mxu0 %v1684
        %v1783 = vpop.f32.mrb[0].mxu0
        %v1784 = vadd.f32 0.0, %v1783
        %v1785 = vpop.f32.mrb[0].mxu0
        %1786 = vmatprep.mubr.f32.mxu0 0.0
        %1787 = vmatmul.mubr.f32.gmra.mrb[0].mxu0 %v1687
        %v1788 = vpop.f32.mrb[0].mxu0
        %v1789 = vadd.f32 0.0, %v1788
        %v1790 = vpop.f32.mrb[0].mxu0
        %1791 = vmatprep.mubr.f32.mxu0 0.0
        %1792 = vmatmul.mubr.f32.gmra.mrb[0].mxu0 %v1690
        %v1793 = vpop.f32.mrb[0].mxu0
        %v1794 = vadd.f32 0.0, %v1793
        %v1795 = vpop.f32.mrb[0].mxu0
        %1796 = vdwg.mxu0
        %v1797 = vadd.f32 %v1659, %v1759
        %v1798 = vadd.f32 %v1660, %v1764
        %v1799 = vadd.f32 %v1661, %v1769
        %v1800 = vadd.f32 %v1662, %v1774
        %v1801 = vadd.f32 %v1663, %v1779
        %v1802 = vadd.f32 %v1664, %v1784
        %v1803 = vadd.f32 %v1665, %v1789
        %v1804 = vadd.f32 %v1666, %v1794
        %v1805 = vld [vmem:[#allocation18] sm:$0x1]
        %v1807 = vlaneseq
        %v1808 = vshrl.u32 %v1807, 7
        %v1809 = vsub.s32 0, %v1808
        %v1810 = vrot.slane %v1805, %v1809
        %v1812 = vadd.f32 %v1797, %v1810
        %v1813 = vadd.f32 %v1798, %v1810
        %v1814 = vadd.f32 %v1799, %v1810
        %v1815 = vadd.f32 %v1800, %v1810
        %v1816 = vadd.f32 %v1801, %v1810
        %v1817 = vadd.f32 %v1802, %v1810
        %v1818 = vadd.f32 %v1803, %v1810
        %v1819 = vadd.f32 %v1804, %v1810
        %1820 = vst.msk [vmem:[%s585] sm:$0xff] %vm1529, %v1812
        %1821 = vst.msk [vmem:[%s585 + $0x8] sm:$0xff] %vm1529, %v1813
        %1822 = vst.msk [vmem:[%s585 + $0x10] sm:$0xff] %vm1529, %v1814
        %1823 = vst.msk [vmem:[%s585 + $0x18] sm:$0xff] %vm1529, %v1815
        %1824 = vst.msk [vmem:[%s585 + $0x20] sm:$0xff] %vm1529, %v1816
        %1825 = vst.msk [vmem:[%s585 + $0x28] sm:$0xff] %vm1529, %v1817
        %1826 = vst.msk [vmem:[%s585 + $0x30] sm:$0xff] %vm1529, %v1818
        %1827 = vst.msk [vmem:[%s585 + $0x38] sm:$0xff] %vm1529, %v1819
        %s1828 = sand.u32 %s295, 1
        %s1829 = scalar_lea.sflag [#allocation6], %s1828
        %s1830 = sand.u32 %s295, 1
        %s1831 = smul.addr %s1830, 64
        %s1832 = scalar_lea.vmem [#allocation19], %s1831
        // Predicated region
        $region93: #{_lambda_.5} parent=55 // pred_check
          %p1833 = pneg %p305
        $region94: #{_lambda_.5} parent=55 // pred_check_branch
          %1835 = sbr.rel (%p1833) target = $region96
        $region95: #{_lambda_.5} parent=55 // pred_region
          %s1836 = smul.u32 8, %s46
          %s1838 = ssub.s32 1024, 1024
          %1839 = vsyncadd %s1829, %s1838
          %s1840 = smul.addr %s45, 8
          %s1841 = sadd.s32 %s1836, %s1840
          %s1842 = smul.addr %s44, 16
          %s1843 = sadd.s32 %s1841, %s1842
          %s1844 = smul.addr %s1843, 128
          %s1845 = scalar_lea.hbm %s10, %s1844
          %s1846 = sshll.u32 %s1832, 4
          %s1847 = int_to_ptr.vmem [resolvable:$true] %s1846
          %1852 = dma.vmem_to_hbm [thread:$0]  %s1847, 1024, %s1845, %s1829, 128, 128, 8
        $region96: #{_lambda_.5} parent=55 // pred_fallthru
          _
      $region56: #{_lambda_.5} parent=5 // pred_fallthru
        _
      %p1853 = scmp.le.s32.totalorder 2, %s34
      // Predicated region
      $region97: #{_lambda_.5} parent=5 // pred_check
        %p1854 = pneg %p1853
      $region98: #{_lambda_.5} parent=5 // pred_check_branch
        %1856 = sbr.rel (%p1854) target = $region100
      $region99: #{_lambda_.5} parent=5 // pred_region
        %s1857 = ssub.s32 %s34, 2
        // Predicated region
        $region101: #{_lambda_.5} parent=99 // pred_check
          %p1858 = pneg %p311
        $region102: #{_lambda_.5} parent=99 // pred_check_branch
          %1860 = sbr.rel (%p1858) target = $region104
        $region103: #{_lambda_.5} parent=99 // pred_region
          %s1861 = sand.u32 %s296, 1
          %s1862 = scalar_lea.sflag [#allocation6], %s1861
          %s1863 = sand.u32 %s296, 1
          %s1864 = smul.addr %s1863, 64
          %s1865 = scalar_lea.vmem [#allocation19], %s1864
          %1866 = dma.done %s1862, 1024
        $region104: #{_lambda_.5} parent=99 // pred_fallthru
          _
      $region100: #{_lambda_.5} parent=5 // pred_fallthru
        _
    $region6: #{_lambda_.5} parent=1 // loop_footer
      %s38 = sadd.s32 1, %s34
    $region7: #{_lambda_.5} parent=1 // loop_footer_branch
      %33 = sbr.rel target = $region3
    $region8: #{_lambda_.5} parent=1 // loop_exit
      _
    %1867 = vsyncpa [#allocation5], 1
    %s1868 = scalar_lea.sflag [#allocation5], 1
    %1869 = vsyncpa %s1868, 1
    %1870 = vsyncpa [#allocation8], 1
    %s1871 = scalar_lea.sflag [#allocation8], 1
    %1872 = vsyncpa %s1871, 1
    %1873 = vsyncpa [#allocation11], 1
    %s1874 = scalar_lea.sflag [#allocation11], 1
    %1875 = vsyncpa %s1874, 1
    %1876 = vsyncpa [#allocation14], 1
    %1877 = vsyncpa [#allocation17], 1
    %1878 = vsyncpa [#allocation6], 1
    %s1879 = scalar_lea.sflag [#allocation6], 1
    %1880 = vsyncpa %s1879, 1

// kernel: _lambda_.4
$region0: #{_lambda_.4}
  #allocation0 [shape = 'u32[]', space=smem, size = 0x4, offset = 0x4, fixed_abs, tag = 'smem constant byte address 0x4 - core index']
  #allocation1 [shape = 'u32[144,128]{1,0:T(1,128)}', space=vmem, size = 0x12000, scoped, tag = 'internal scratch']
  #allocation2 [shape = 's32[1]{0}', space=sflag, size = 0x4, scoped, tag = 'scoped memory for _lambda_.4']
  #allocation3 [shape = 'u8[512]{0}', space=smem, size = 0x200, scoped, tag = 'prefetched SMEM operand 0']
  %s0 = inlined_call_operand.hbm [shape: s32[1,3], index: 0, kind: input, shape index: {}]
  %s1 = inlined_call_operand.hbm [shape: f32[2,3,64,4], index: 1, kind: input, shape index: {}, may-alias: {1,2}]
  %s2 = inlined_call_operand.hbm [shape: f32[2,3,64,4], index: 2, kind: input, shape index: {}, may-alias: {1,2}]
  %s3 = inlined_call_operand.hbm [shape: f32[2,3,64,4], index: 3, kind: input, shape index: {}]
  %s4 = inlined_call_operand.hbm [shape: f32[2,3,64,8], index: 4, kind: input, shape index: {}]
  %s5 = inlined_call_operand.hbm [shape: f32[4,8], index: 5, kind: input, shape index: {}]
  %s6 = inlined_call_operand.hbm [shape: f32[1,8], index: 6, kind: input, shape index: {}]
  %s7 = inlined_call_operand.hbm [shape: f32[8,8], index: 7, kind: input, shape index: {}]
  %s8 = inlined_call_operand.hbm [shape: f32[8,8], index: 8, kind: input, shape index: {}]
  %s9 = inlined_call_operand.hbm [shape: f32[1,8], index: 9, kind: input, shape index: {}]
  %s10 = inlined_call_operand.hbm [shape: f32[2,1,64,8], index: 10, kind: output, shape index: {0}]
  %s11 = inlined_call_operand.hbm [shape: f32[2,2,64,64], index: 11, kind: output, shape index: {1}]
  %12 = xla_tuple %s10, %s11
  %s13 = sld [smem:[#allocation0]]
  $region113: #{_lambda_.4} parent=0
    _
  %s15 = ssub.s32 1, %s13
  %s16 = scalar_select 0, %s15, %s13
  %18 = dma.hbm_to_smem %s0, 16, [#allocation3], [#allocation2]
  %19 = dma.done [#allocation2], 16
  %20 = sfence
  $region1: #{_lambda_.4} parent=0
    #allocation4 [shape = 'u8[65536]{0}', space=vmem, size = 0x10000, scoped, tag = 'input window, operand 1']
    #allocation5 [shape = 's32[2]{0}', space=sflag, size = 0x8, scoped, tag = 'scoped memory for _lambda_.4']
    #allocation6 [shape = 's32[2]{0}', space=sflag, size = 0x8, scoped, tag = 'scoped memory for _lambda_.4']
    #allocation7 [shape = 'u8[196608]{0}', space=vmem, size = 0x30000, scoped, tag = 'input window, operand 2']
    #allocation8 [shape = 's32[2]{0}', space=sflag, size = 0x8, scoped, tag = 'scoped memory for _lambda_.4']
    #allocation9 [shape = 'u8[196608]{0}', space=vmem, size = 0x30000, scoped, tag = 'input window, operand 3']
    #allocation10 [shape = 'u8[65536]{0}', space=vmem, size = 0x10000, scoped, tag = 'input window, operand 4']
    #allocation11 [shape = 's32[2]{0}', space=sflag, size = 0x8, scoped, tag = 'scoped memory for _lambda_.4']
    #allocation12 [shape = 'u8[2048]{0}', space=vmem, size = 0x800, scoped, tag = 'input window, operand 5, single buffered']
    #allocation13 [shape = 'u8[512]{0}', space=vmem, size = 0x400, scoped, tag = 'input window, operand 6, single buffered']
    #allocation14 [shape = 's32[1]{0}', space=sflag, size = 0x4, scoped, tag = 'scoped memory for _lambda_.4']
    #allocation15 [shape = 'u8[4096]{0}', space=vmem, size = 0x1000, scoped, tag = 'input window, operand 7, single buffered']
    #allocation16 [shape = 'u8[4096]{0}', space=vmem, size = 0x1000, scoped, tag = 'input window, operand 8, single buffered']
    #allocation17 [shape = 's32[1]{0}', space=sflag, size = 0x4, scoped, tag = 'scoped memory for _lambda_.4']
    #allocation18 [shape = 'u8[512]{0}', space=vmem, size = 0x400, scoped, tag = 'input window, operand 9, single buffered']
    #allocation19 [shape = 'u8[65536]{0}', space=vmem, size = 0x10000, scoped, tag = 'output window, operand 0']
    #allocation20 [shape = 'u8[131072]{0}', space=vmem, size = 0x20000, scoped, tag = 'output window, operand 1']
    #allocation21 [shape = 's32[2]{0}', space=sflag, size = 0x8, scoped, tag = 'scoped memory for _lambda_.4']
    %21 = vsyncpa [#allocation5], 0
    %s22 = scalar_lea.sflag [#allocation5], 1
    %23 = vsyncpa %s22, 0
    %24 = vsyncpa [#allocation8], 0
    %s25 = scalar_lea.sflag [#allocation8], 1
    %26 = vsyncpa %s25, 0
    %27 = vsyncpa [#allocation11], 0
    %s28 = scalar_lea.sflag [#allocation11], 1
    %29 = vsyncpa %s28, 0
    %30 = vsyncpa [#allocation14], 0
    %31 = vsyncpa [#allocation17], 0
    %32 = vsyncpa [#allocation6], 0
    %s33 = scalar_lea.sflag [#allocation6], 1
    %34 = vsyncpa %s33, 0
    %35 = vsyncpa [#allocation21], 0
    %s36 = scalar_lea.sflag [#allocation21], 1
    %37 = vsyncpa %s36, 0
    loop: start=0, step=1, limit=4
    $region2: #{_lambda_.4} parent=1 // loop_pre_header
      _
    $region3: #{_lambda_.4} parent=1 // loop_header
      %s39 = sphi 0, %s43
      %p40 = scmp.ge.s32.totalorder %s39, 4
      %s46 = sphi 0, %s65
      %s47 = sphi 0, %s61
      %s48 = sphi 0, %s57
      %s49 = sphi 0, %s46
      %s50 = sphi 0, %s47
      %s51 = sphi 0, %s48
      %s52 = sphi 0, %s49
      %s53 = sphi 0, %s50
      %s54 = sphi 0, %s51
      %s76 = sphi 0, %s78
      %s79 = sphi 0, %s76
      %s80 = sphi 0, %s79
      %s96 = sphi 0, %s80
      %s102 = sphi 0, %s104
      %s105 = sphi 0, %s102
      %s106 = sphi 0, %s105
      %s122 = sphi 0, %s106
      %s128 = sphi 0, %s130
      %s131 = sphi 0, %s128
      %s132 = sphi 0, %s131
      %s148 = sphi 0, %s132
      %s162 = sphi 0, %s164
      %s165 = sphi 0, %s162
      %s166 = sphi 0, %s165
      %s182 = sphi 0, %s166
      %s186 = sphi 0, %s186
      %s188 = sphi 0, %s186
      %s189 = sphi 0, %s188
      %s203 = sphi 0, %s189
      %s207 = sphi 0, %s207
      %s209 = sphi 0, %s207
      %s210 = sphi 0, %s209
      %s224 = sphi 0, %s210
      %s228 = sphi 0, %s228
      %s230 = sphi 0, %s228
      %s231 = sphi 0, %s230
      %s245 = sphi 0, %s231
      %s249 = sphi 0, %s249
      %s251 = sphi 0, %s249
      %s252 = sphi 0, %s251
      %s266 = sphi 0, %s252
      %s270 = sphi 0, %s270
      %s272 = sphi 0, %s270
      %s273 = sphi 0, %s272
      %s287 = sphi 0, %s273
      %s297 = sphi 0, %s299
      %s300 = sphi 0, %s297
      %s301 = sphi 0, %s300
      %s317 = sphi 0, %s301
      %s325 = sphi 0, %s327
      %s328 = sphi 0, %s325
      %s329 = sphi 0, %s328
      %s345 = sphi 0, %s329
    $region4: #{_lambda_.4} parent=1 // loop_header_branch
      %42 = sbr.rel (%p40) target = $region8
    $region5: #{_lambda_.4} parent=1 // loop_body
      %s44 = ssub.s32 %s39, 1
      %s45 = ssub.s32 %s39, 2
      %s55 = sadd.s32 1, %s48
      %p56 = scmp.ge.s32.totalorder %s55, 1
      %s57 = scalar_select %p56, 0, %s55
      %s58 = sadd.s32 1, %s47
      %s59 = scalar_select %p56, %s58, %s47
      %p60 = scmp.ge.s32.totalorder %s59, 1
      %s61 = scalar_select %p60, 0, %s59
      %s62 = sadd.s32 1, %s46
      %s63 = scalar_select %p60, %s62, %s46
      %p64 = scmp.ge.s32.totalorder %s63, 2
      %s65 = scalar_select %p64, 0, %s63
      %s66 = smul.u32 %s47, 128
      %s67 = sld [smem:[#allocation3 + %s66]]
      %s68 = smul.u32 %s61, 128
      %s69 = sld [smem:[#allocation3 + %s68]]
      %s70 = ssub.s32 %s46, %s65
      %s71 = ssub.s32 %s67, %s69
      %s72 = sor.u32 %s70, %s71
      %s73 = ssub.s32 %s48, %s57
      %s74 = sor.u32 %s72, %s73
      %p75 = scmp.eq.s32.totalorder %s74, 0
      %s77 = sadd.s32 %s76, 1
      %s78 = scalar_select %p75, %s76, %s77
      %p81 = pneg %p75
      %p82 = scmp.eq.s32.totalorder %s39, 1
      %p83 = por %p81, %p82
      %p84 = scmp.ne.s32.totalorder %s76, %s79
      %p85 = scmp.eq.s32.totalorder %s39, 0
      %p86 = por %p84, %p85
      %p87 = scmp.ne.s32.totalorder %s76, %s79
      %p88 = scmp.eq.s32.totalorder %s44, 1
      %p89 = por %p87, %p88
      %p90 = scmp.ne.s32.totalorder %s79, %s80
      %p91 = scmp.eq.s32.totalorder %s44, 0
      %p92 = por %p90, %p91
      %p93 = scmp.ne.s32.totalorder %s79, %s80
      %p94 = scmp.eq.s32.totalorder %s45, 1
      %p95 = por %p93, %p94
      %p97 = scmp.ne.s32.totalorder %s80, %s96
      %p98 = scmp.eq.s32.totalorder %s45, 0
      %p99 = por %p97, %p98
      %s100 = ssub.s32 %s46, %s65
      %p101 = scmp.eq.s32.totalorder %s100, 0
      %s103 = sadd.s32 %s102, 1
      %s104 = scalar_select %p101, %s102, %s103
      %p107 = pneg %p101
      %p108 = scmp.eq.s32.totalorder %s39, 1
      %p109 = por %p107, %p108
      %p110 = scmp.ne.s32.totalorder %s102, %s105
      %p111 = scmp.eq.s32.totalorder %s39, 0
      %p112 = por %p110, %p111
      %p113 = scmp.ne.s32.totalorder %s102, %s105
      %p114 = scmp.eq.s32.totalorder %s44, 1
      %p115 = por %p113, %p114
      %p116 = scmp.ne.s32.totalorder %s105, %s106
      %p117 = scmp.eq.s32.totalorder %s44, 0
      %p118 = por %p116, %p117
      %p119 = scmp.ne.s32.totalorder %s105, %s106
      %p120 = scmp.eq.s32.totalorder %s45, 1
      %p121 = por %p119, %p120
      %p123 = scmp.ne.s32.totalorder %s106, %s122
      %p124 = scmp.eq.s32.totalorder %s45, 0
      %p125 = por %p123, %p124
      %s126 = ssub.s32 %s46, %s65
      %p127 = scmp.eq.s32.totalorder %s126, 0
      %s129 = sadd.s32 %s128, 1
      %s130 = scalar_select %p127, %s128, %s129
      %p133 = pneg %p127
      %p134 = scmp.eq.s32.totalorder %s39, 1
      %p135 = por %p133, %p134
      %p136 = scmp.ne.s32.totalorder %s128, %s131
      %p137 = scmp.eq.s32.totalorder %s39, 0
      %p138 = por %p136, %p137
      %p139 = scmp.ne.s32.totalorder %s128, %s131
      %p140 = scmp.eq.s32.totalorder %s44, 1
      %p141 = por %p139, %p140
      %p142 = scmp.ne.s32.totalorder %s131, %s132
      %p143 = scmp.eq.s32.totalorder %s44, 0
      %p144 = por %p142, %p143
      %p145 = scmp.ne.s32.totalorder %s131, %s132
      %p146 = scmp.eq.s32.totalorder %s45, 1
      %p147 = por %p145, %p146
      %p149 = scmp.ne.s32.totalorder %s132, %s148
      %p150 = scmp.eq.s32.totalorder %s45, 0
      %p151 = por %p149, %p150
      %s152 = smul.u32 %s47, 128
      %s153 = sld [smem:[#allocation3 + %s152]]
      %s154 = smul.u32 %s61, 128
      %s155 = sld [smem:[#allocation3 + %s154]]
      %s156 = ssub.s32 %s46, %s65
      %s157 = ssub.s32 %s153, %s155
      %s158 = sor.u32 %s156, %s157
      %s159 = ssub.s32 %s48, %s57
      %s160 = sor.u32 %s158, %s159
      %p161 = scmp.eq.s32.totalorder %s160, 0
      %s163 = sadd.s32 %s162, 1
      %s164 = scalar_select %p161, %s162, %s163
      %p167 = pneg %p161
      %p168 = scmp.eq.s32.totalorder %s39, 1
      %p169 = por %p167, %p168
      %p170 = scmp.ne.s32.totalorder %s162, %s165
      %p171 = scmp.eq.s32.totalorder %s39, 0
      %p172 = por %p170, %p171
      %p173 = scmp.ne.s32.totalorder %s162, %s165
      %p174 = scmp.eq.s32.totalorder %s44, 1
      %p175 = por %p173, %p174
      %p176 = scmp.ne.s32.totalorder %s165, %s166
      %p177 = scmp.eq.s32.totalorder %s44, 0
      %p178 = por %p176, %p177
      %p179 = scmp.ne.s32.totalorder %s165, %s166
      %p180 = scmp.eq.s32.totalorder %s45, 1
      %p181 = por %p179, %p180
      %p183 = scmp.ne.s32.totalorder %s166, %s182
      %p184 = scmp.eq.s32.totalorder %s45, 0
      %p185 = por %p183, %p184
      %s187 = sadd.s32 %s186, 1
      %p190 = scmp.eq.s32.totalorder %s39, 1
      %p191 = scmp.ne.s32.totalorder %s186, %s188
      %p192 = scmp.eq.s32.totalorder %s39, 0
      %p193 = por %p191, %p192
      %p194 = scmp.ne.s32.totalorder %s186, %s188
      %p195 = scmp.eq.s32.totalorder %s44, 1
      %p196 = por %p194, %p195
      %p197 = scmp.ne.s32.totalorder %s188, %s189
      %p198 = scmp.eq.s32.totalorder %s44, 0
      %p199 = por %p197, %p198
      %p200 = scmp.ne.s32.totalorder %s188, %s189
      %p201 = scmp.eq.s32.totalorder %s45, 1
      %p202 = por %p200, %p201
      %p204 = scmp.ne.s32.totalorder %s189, %s203
      %p205 = scmp.eq.s32.totalorder %s45, 0
      %p206 = por %p204, %p205
      %s208 = sadd.s32 %s207, 1
      %p211 = scmp.eq.s32.totalorder %s39, 1
      %p212 = scmp.ne.s32.totalorder %s207, %s209
      %p213 = scmp.eq.s32.totalorder %s39, 0
      %p214 = por %p212, %p213
      %p215 = scmp.ne.s32.totalorder %s207, %s209
      %p216 = scmp.eq.s32.totalorder %s44, 1
      %p217 = por %p215, %p216
      %p218 = scmp.ne.s32.totalorder %s209, %s210
      %p219 = scmp.eq.s32.totalorder %s44, 0
      %p220 = por %p218, %p219
      %p221 = scmp.ne.s32.totalorder %s209, %s210
      %p222 = scmp.eq.s32.totalorder %s45, 1
      %p223 = por %p221, %p222
      %p225 = scmp.ne.s32.totalorder %s210, %s224
      %p226 = scmp.eq.s32.totalorder %s45, 0
      %p227 = por %p225, %p226
      %s229 = sadd.s32 %s228, 1
      %p232 = scmp.eq.s32.totalorder %s39, 1
      %p233 = scmp.ne.s32.totalorder %s228, %s230
      %p234 = scmp.eq.s32.totalorder %s39, 0
      %p235 = por %p233, %p234
      %p236 = scmp.ne.s32.totalorder %s228, %s230
      %p237 = scmp.eq.s32.totalorder %s44, 1
      %p238 = por %p236, %p237
      %p239 = scmp.ne.s32.totalorder %s230, %s231
      %p240 = scmp.eq.s32.totalorder %s44, 0
      %p241 = por %p239, %p240
      %p242 = scmp.ne.s32.totalorder %s230, %s231
      %p243 = scmp.eq.s32.totalorder %s45, 1
      %p244 = por %p242, %p243
      %p246 = scmp.ne.s32.totalorder %s231, %s245
      %p247 = scmp.eq.s32.totalorder %s45, 0
      %p248 = por %p246, %p247
      %s250 = sadd.s32 %s249, 1
      %p253 = scmp.eq.s32.totalorder %s39, 1
      %p254 = scmp.ne.s32.totalorder %s249, %s251
      %p255 = scmp.eq.s32.totalorder %s39, 0
      %p256 = por %p254, %p255
      %p257 = scmp.ne.s32.totalorder %s249, %s251
      %p258 = scmp.eq.s32.totalorder %s44, 1
      %p259 = por %p257, %p258
      %p260 = scmp.ne.s32.totalorder %s251, %s252
      %p261 = scmp.eq.s32.totalorder %s44, 0
      %p262 = por %p260, %p261
      %p263 = scmp.ne.s32.totalorder %s251, %s252
      %p264 = scmp.eq.s32.totalorder %s45, 1
      %p265 = por %p263, %p264
      %p267 = scmp.ne.s32.totalorder %s252, %s266
      %p268 = scmp.eq.s32.totalorder %s45, 0
      %p269 = por %p267, %p268
      %s271 = sadd.s32 %s270, 1
      %p274 = scmp.eq.s32.totalorder %s39, 1
      %p275 = scmp.ne.s32.totalorder %s270, %s272
      %p276 = scmp.eq.s32.totalorder %s39, 0
      %p277 = por %p275, %p276
      %p278 = scmp.ne.s32.totalorder %s270, %s272
      %p279 = scmp.eq.s32.totalorder %s44, 1
      %p280 = por %p278, %p279
      %p281 = scmp.ne.s32.totalorder %s272, %s273
      %p282 = scmp.eq.s32.totalorder %s44, 0
      %p283 = por %p281, %p282
      %p284 = scmp.ne.s32.totalorder %s272, %s273
      %p285 = scmp.eq.s32.totalorder %s45, 1
      %p286 = por %p284, %p285
      %p288 = scmp.ne.s32.totalorder %s273, %s287
      %p289 = scmp.eq.s32.totalorder %s45, 0
      %p290 = por %p288, %p289
      %s291 = ssub.s32 %s46, %s65
      %s292 = ssub.s32 %s47, %s61
      %s293 = sor.u32 %s291, %s292
      %s294 = ssub.s32 %s48, %s57
      %s295 = sor.u32 %s293, %s294
      %p296 = scmp.eq.s32.totalorder %s295, 0
      %s298 = sadd.s32 %s297, 1
      %s299 = scalar_select %p296, %s297, %s298
      %p302 = pneg %p296
      %p303 = scmp.eq.s32.totalorder %s39, 1
      %p304 = por %p302, %p303
      %p305 = scmp.ne.s32.totalorder %s297, %s300
      %p306 = scmp.eq.s32.totalorder %s39, 0
      %p307 = por %p305, %p306
      %p308 = scmp.ne.s32.totalorder %s297, %s300
      %p309 = scmp.eq.s32.totalorder %s44, 1
      %p310 = por %p308, %p309
      %p311 = scmp.ne.s32.totalorder %s300, %s301
      %p312 = scmp.eq.s32.totalorder %s44, 0
      %p313 = por %p311, %p312
      %p314 = scmp.ne.s32.totalorder %s300, %s301
      %p315 = scmp.eq.s32.totalorder %s45, 1
      %p316 = por %p314, %p315
      %p318 = scmp.ne.s32.totalorder %s301, %s317
      %p319 = scmp.eq.s32.totalorder %s45, 0
      %p320 = por %p318, %p319
      %s321 = ssub.s32 %s46, %s65
      %s322 = ssub.s32 %s48, %s57
      %s323 = sor.u32 %s321, %s322
      %p324 = scmp.eq.s32.totalorder %s323, 0
      %s326 = sadd.s32 %s325, 1
      %s327 = scalar_select %p324, %s325, %s326
      %p330 = pneg %p324
      %p331 = scmp.eq.s32.totalorder %s39, 1
      %p332 = por %p330, %p331
      %p333 = scmp.ne.s32.totalorder %s325, %s328
      %p334 = scmp.eq.s32.totalorder %s39, 0
      %p335 = por %p333, %p334
      %p336 = scmp.ne.s32.totalorder %s325, %s328
      %p337 = scmp.eq.s32.totalorder %s44, 1
      %p338 = por %p336, %p337
      %p339 = scmp.ne.s32.totalorder %s328, %s329
      %p340 = scmp.eq.s32.totalorder %s44, 0
      %p341 = por %p339, %p340
      %p342 = scmp.ne.s32.totalorder %s328, %s329
      %p343 = scmp.eq.s32.totalorder %s45, 1
      %p344 = por %p342, %p343
      %p346 = scmp.ne.s32.totalorder %s329, %s345
      %p347 = scmp.eq.s32.totalorder %s45, 0
      %p348 = por %p346, %p347
      %p349 = scmp.le.s32.totalorder 1, %s39
      %p350 = scmp.lt.s32.totalorder %s39, 3
      %p351 = pnand %p349, %p350
      %p352 = pneg %p351
      // Predicated region
      $region9: #{_lambda_.4} parent=5 // pred_check
        _
      $region10: #{_lambda_.4} parent=5 // pred_check_branch
        %354 = sbr.rel (%p351) target = $region12
      $region11: #{_lambda_.4} parent=5 // pred_region
        %s355 = ssub.s32 %s39, 1
        // Predicated region
        $region13: #{_lambda_.4} parent=11 // pred_check
          %p356 = pneg %p199
        $region14: #{_lambda_.4} parent=11 // pred_check_branch
          %358 = sbr.rel (%p356) target = $region16
        $region15: #{_lambda_.4} parent=11 // pred_region
          %s360 = ssub.s32 64, 64
          %361 = vsyncadd [#allocation11], %s360
          %s363 = sshll.u32 [#allocation12], 4
          %s364 = int_to_ptr.vmem [resolvable:$true] %s363
          %366 = dma.hbm_to_vmem [thread:$0]  %s5, 64, %s364, [#allocation11]
        $region16: #{_lambda_.4} parent=11 // pred_fallthru
          _
        // Predicated region
        $region17: #{_lambda_.4} parent=11 // pred_check
          %p367 = pneg %p220
        $region18: #{_lambda_.4} parent=11 // pred_check_branch
          %369 = sbr.rel (%p367) target = $region20
        $region19: #{_lambda_.4} parent=11 // pred_region
          %s371 = ssub.s32 16, 16
          %372 = vsyncadd [#allocation14], %s371
          %s374 = sshll.u32 [#allocation13], 4
          %s375 = int_to_ptr.vmem [resolvable:$true] %s374
          %377 = dma.hbm_to_vmem [thread:$0]  %s6, 16, %s375, [#allocation14]
        $region20: #{_lambda_.4} parent=11 // pred_fallthru
          _
        // Predicated region
        $region21: #{_lambda_.4} parent=11 // pred_check
          %p378 = pneg %p241
        $region22: #{_lambda_.4} parent=11 // pred_check_branch
          %380 = sbr.rel (%p378) target = $region24
        $region23: #{_lambda_.4} parent=11 // pred_region
          %s382 = ssub.s32 128, 128
          %383 = vsyncadd [#allocation14], %s382
          %s385 = sshll.u32 [#allocation15], 4
          %s386 = int_to_ptr.vmem [resolvable:$true] %s385
          %388 = dma.hbm_to_vmem [thread:$0]  %s7, 128, %s386, [#allocation14]
        $region24: #{_lambda_.4} parent=11 // pred_fallthru
          _
        // Predicated region
        $region25: #{_lambda_.4} parent=11 // pred_check
          %p389 = pneg %p262
        $region26: #{_lambda_.4} parent=11 // pred_check_branch
          %391 = sbr.rel (%p389) target = $region28
        $region27: #{_lambda_.4} parent=11 // pred_region
          %s393 = ssub.s32 128, 128
          %394 = vsyncadd [#allocation17], %s393
          %s396 = sshll.u32 [#allocation16], 4
          %s397 = int_to_ptr.vmem [resolvable:$true] %s396
          %399 = dma.hbm_to_vmem [thread:$0]  %s8, 128, %s397, [#allocation17]
        $region28: #{_lambda_.4} parent=11 // pred_fallthru
          _
        // Predicated region
        $region29: #{_lambda_.4} parent=11 // pred_check
          %p400 = pneg %p283
        $region30: #{_lambda_.4} parent=11 // pred_check_branch
          %402 = sbr.rel (%p400) target = $region32
        $region31: #{_lambda_.4} parent=11 // pred_region
          %s404 = ssub.s32 16, 16
          %405 = vsyncadd [#allocation17], %s404
          %s407 = sshll.u32 [#allocation18], 4
          %s408 = int_to_ptr.vmem [resolvable:$true] %s407
          %410 = dma.hbm_to_vmem [thread:$0]  %s9, 16, %s408, [#allocation17]
        $region32: #{_lambda_.4} parent=11 // pred_fallthru
          _
      $region12: #{_lambda_.4} parent=5 // pred_fallthru
        _
      %p411 = scmp.lt.s32.totalorder %s39, 2
      // Predicated region
      $region33: #{_lambda_.4} parent=5 // pred_check
        %p412 = pneg %p411
      $region34: #{_lambda_.4} parent=5 // pred_check_branch
        %414 = sbr.rel (%p412) target = $region36
      $region35: #{_lambda_.4} parent=5 // pred_region
        // Predicated region
        $region37: #{_lambda_.4} parent=35 // pred_check
          %p415 = pneg %p86
        $region38: #{_lambda_.4} parent=35 // pred_check_branch
          %417 = sbr.rel (%p415) target = $region40
        $region39: #{_lambda_.4} parent=35 // pred_region
          %s418 = sand.u32 %s76, 1
          %s419 = scalar_lea.sflag [#allocation5], %s418
          %s420 = sand.u32 %s76, 1
          %s421 = smul.addr %s420, 64
          %s422 = scalar_lea.vmem [#allocation4], %s421
          %s423 = smul.u32 %s47, 128
          %s424 = sld [smem:[#allocation3 + %s423]]
          %s425 = smul.u32 8, %s48
          %s427 = ssub.s32 1024, 1024
          %428 = vsyncadd %s419, %s427
          %s429 = smul.addr %s424, 8
          %s430 = sadd.s32 %s425, %s429
          %s431 = smul.addr %s46, 24
          %s432 = sadd.s32 %s430, %s431
          %s433 = smul.addr %s432, 128
          %s434 = scalar_lea.hbm %s1, %s433
          %s435 = sshll.u32 %s422, 4
          %s436 = int_to_ptr.vmem [resolvable:$true] %s435
          %441 = dma.hbm_to_vmem [thread:$0]  %s434, 1024, %s436, %s419, 128, 128, 8
        $region40: #{_lambda_.4} parent=35 // pred_fallthru
          _
        // Predicated region
        $region41: #{_lambda_.4} parent=35 // pred_check
          %p442 = pneg %p112
        $region42: #{_lambda_.4} parent=35 // pred_check_branch
          %444 = sbr.rel (%p442) target = $region44
        $region43: #{_lambda_.4} parent=35 // pred_region
          %s445 = sand.u32 %s39, 1
          %s446 = scalar_lea.sflag [#allocation8], %s445
          %s447 = sand.u32 %s102, 1
          %s448 = smul.addr %s447, 192
          %s449 = scalar_lea.vmem [#allocation7], %s448
          %s451 = ssub.s32 3072, 3072
          %452 = vsyncadd %s446, %s451
          %s453 = smul.addr %s46, 24
          %s454 = smul.addr %s453, 128
          %s455 = scalar_lea.hbm %s2, %s454
          %s456 = sshll.u32 %s449, 4
          %s457 = int_to_ptr.vmem [resolvable:$true] %s456
          %462 = dma.hbm_to_vmem [thread:$0]  %s455, 3072, %s457, %s446, 128, 128, 8
        $region44: #{_lambda_.4} parent=35 // pred_fallthru
          _
        // Predicated region
        $region45: #{_lambda_.4} parent=35 // pred_check
          %p463 = pneg %p138
        $region46: #{_lambda_.4} parent=35 // pred_check_branch
          %465 = sbr.rel (%p463) target = $region48
        $region47: #{_lambda_.4} parent=35 // pred_region
          %s466 = sand.u32 %s39, 1
          %s467 = scalar_lea.sflag [#allocation8], %s466
          %s468 = sand.u32 %s128, 1
          %s469 = smul.addr %s468, 192
          %s470 = scalar_lea.vmem [#allocation9], %s469
          %s472 = ssub.s32 3072, 3072
          %473 = vsyncadd %s467, %s472
          %s474 = smul.addr %s46, 24
          %s475 = smul.addr %s474, 128
          %s476 = scalar_lea.hbm %s3, %s475
          %s477 = sshll.u32 %s470, 4
          %s478 = int_to_ptr.vmem [resolvable:$true] %s477
          %483 = dma.hbm_to_vmem [thread:$0]  %s476, 3072, %s478, %s467, 128, 128, 8
        $region48: #{_lambda_.4} parent=35 // pred_fallthru
          _
        // Predicated region
        $region49: #{_lambda_.4} parent=35 // pred_check
          %p484 = pneg %p172
        $region50: #{_lambda_.4} parent=35 // pred_check_branch
          %486 = sbr.rel (%p484) target = $region52
        $region51: #{_lambda_.4} parent=35 // pred_region
          %s487 = sand.u32 %s39, 1
          %s488 = scalar_lea.sflag [#allocation11], %s487
          %s489 = sand.u32 %s162, 1
          %s490 = smul.addr %s489, 64
          %s491 = scalar_lea.vmem [#allocation10], %s490
          %s492 = smul.u32 %s47, 128
          %s493 = sld [smem:[#allocation3 + %s492]]
          %s494 = smul.u32 8, %s48
          %s496 = ssub.s32 1024, 1024
          %497 = vsyncadd %s488, %s496
          %s498 = smul.addr %s493, 8
          %s499 = sadd.s32 %s494, %s498
          %s500 = smul.addr %s46, 24
          %s501 = sadd.s32 %s499, %s500
          %s502 = smul.addr %s501, 128
          %s503 = scalar_lea.hbm %s4, %s502
          %s504 = sshll.u32 %s491, 4
          %s505 = int_to_ptr.vmem [resolvable:$true] %s504
          %510 = dma.hbm_to_vmem [thread:$0]  %s503, 1024, %s505, %s488, 128, 128, 8
        $region52: #{_lambda_.4} parent=35 // pred_fallthru
          _
      $region36: #{_lambda_.4} parent=5 // pred_fallthru
        _
      %p511 = scmp.le.s32.totalorder 1, %s39
      %p512 = scmp.lt.s32.totalorder %s39, 3
      %p513 = pnand %p511, %p512
      %p514 = pneg %p513
      // Predicated region
      $region53: #{_lambda_.4} parent=5 // pred_check
        _
      $region54: #{_lambda_.4} parent=5 // pred_check_branch
        %516 = sbr.rel (%p513) target = $region56
      $region55: #{_lambda_.4} parent=5 // pred_region
        %s517 = ssub.s32 %s39, 1
        %s518 = sand.u32 %s79, 1
        %s519 = scalar_lea.sflag [#allocation5], %s518
        %s520 = sand.u32 %s79, 1
        %s521 = smul.addr %s520, 64
        %s522 = scalar_lea.vmem [#allocation4], %s521
        // Predicated region
        $region57: #{_lambda_.4} parent=55 // pred_check
          %p523 = pneg %p92
        $region58: #{_lambda_.4} parent=55 // pred_check_branch
          %525 = sbr.rel (%p523) target = $region60
        $region59: #{_lambda_.4} parent=55 // pred_region
          %526 = dma.done %s519, 1024
        $region60: #{_lambda_.4} parent=55 // pred_fallthru
          _
        %s527 = sand.u32 %s44, 1
        %s528 = scalar_lea.sflag [#allocation8], %s527
        %s529 = sand.u32 %s105, 1
        %s530 = smul.addr %s529, 192
        %s531 = scalar_lea.vmem [#allocation7], %s530
        // Predicated region
        $region61: #{_lambda_.4} parent=55 // pred_check
          %p532 = pneg %p118
        $region62: #{_lambda_.4} parent=55 // pred_check_branch
          %534 = sbr.rel (%p532) target = $region64
        $region63: #{_lambda_.4} parent=55 // pred_region
          %535 = dma.done %s528, 3072
        $region64: #{_lambda_.4} parent=55 // pred_fallthru
          _
        %s536 = sand.u32 %s44, 1
        %s537 = scalar_lea.sflag [#allocation8], %s536
        %s538 = sand.u32 %s131, 1
        %s539 = smul.addr %s538, 192
        %s540 = scalar_lea.vmem [#allocation9], %s539
        // Predicated region
        $region65: #{_lambda_.4} parent=55 // pred_check
          %p541 = pneg %p144
        $region66: #{_lambda_.4} parent=55 // pred_check_branch
          %543 = sbr.rel (%p541) target = $region68
        $region67: #{_lambda_.4} parent=55 // pred_region
          %544 = dma.done %s537, 3072
        $region68: #{_lambda_.4} parent=55 // pred_fallthru
          _
        %s545 = sand.u32 %s44, 1
        %s546 = scalar_lea.sflag [#allocation11], %s545
        %s547 = sand.u32 %s165, 1
        %s548 = smul.addr %s547, 64
        %s549 = scalar_lea.vmem [#allocation10], %s548
        // Predicated region
        $region69: #{_lambda_.4} parent=55 // pred_check
          %p550 = pneg %p178
        $region70: #{_lambda_.4} parent=55 // pred_check_branch
          %552 = sbr.rel (%p550) target = $region72
        $region71: #{_lambda_.4} parent=55 // pred_region
          %553 = dma.done %s546, 1024
        $region72: #{_lambda_.4} parent=55 // pred_fallthru
          _
        // Predicated region
        $region73: #{_lambda_.4} parent=55 // pred_check
          %p554 = pneg %p199
        $region74: #{_lambda_.4} parent=55 // pred_check_branch
          %556 = sbr.rel (%p554) target = $region76
        $region75: #{_lambda_.4} parent=55 // pred_region
          %557 = dma.done [#allocation11], 64
        $region76: #{_lambda_.4} parent=55 // pred_fallthru
          _
        // Predicated region
        $region77: #{_lambda_.4} parent=55 // pred_check
          %p558 = pneg %p220
        $region78: #{_lambda_.4} parent=55 // pred_check_branch
          %560 = sbr.rel (%p558) target = $region80
        $region79: #{_lambda_.4} parent=55 // pred_region
          %561 = dma.done [#allocation14], 16
        $region80: #{_lambda_.4} parent=55 // pred_fallthru
          _
        // Predicated region
        $region81: #{_lambda_.4} parent=55 // pred_check
          %p562 = pneg %p241
        $region82: #{_lambda_.4} parent=55 // pred_check_branch
          %564 = sbr.rel (%p562) target = $region84
        $region83: #{_lambda_.4} parent=55 // pred_region
          %565 = dma.done [#allocation14], 128
        $region84: #{_lambda_.4} parent=55 // pred_fallthru
          _
        // Predicated region
        $region85: #{_lambda_.4} parent=55 // pred_check
          %p566 = pneg %p262
        $region86: #{_lambda_.4} parent=55 // pred_check_branch
          %568 = sbr.rel (%p566) target = $region88
        $region87: #{_lambda_.4} parent=55 // pred_region
          %569 = dma.done [#allocation17], 128
        $region88: #{_lambda_.4} parent=55 // pred_fallthru
          _
        // Predicated region
        $region89: #{_lambda_.4} parent=55 // pred_check
          %p570 = pneg %p283
        $region90: #{_lambda_.4} parent=55 // pred_check_branch
          %572 = sbr.rel (%p570) target = $region92
        $region91: #{_lambda_.4} parent=55 // pred_region
          %573 = dma.done [#allocation17], 16
        $region92: #{_lambda_.4} parent=55 // pred_fallthru
          _
        %s574 = sand.u32 %s79, 1
        %s575 = scalar_lea.sflag [#allocation5], %s574
        %s576 = sand.u32 %s79, 1
        %s577 = smul.addr %s576, 64
        %s578 = scalar_lea.vmem [#allocation4], %s577
        %p579 = pneg %p92
        %p580 = pneg %p89
        %s581 = sand.u32 %s44, 1
        %s582 = scalar_lea.sflag [#allocation8], %s581
        %s583 = sand.u32 %s105, 1
        %s584 = smul.addr %s583, 192
        %s585 = scalar_lea.vmem [#allocation7], %s584
        %p586 = pneg %p118
        %p587 = pneg %p115
        %s588 = sand.u32 %s44, 1
        %s589 = scalar_lea.sflag [#allocation8], %s588
        %s590 = sand.u32 %s131, 1
        %s591 = smul.addr %s590, 192
        %s592 = scalar_lea.vmem [#allocation9], %s591
        %p593 = pneg %p144
        %p594 = pneg %p141
        %s595 = sand.u32 %s44, 1
        %s596 = scalar_lea.sflag [#allocation11], %s595
        %s597 = sand.u32 %s165, 1
        %s598 = smul.addr %s597, 64
        %s599 = scalar_lea.vmem [#allocation10], %s598
        %p600 = pneg %p178
        %p601 = pneg %p175
        %p602 = pneg %p199
        %p603 = pneg %p196
        %p604 = pneg %p220
        %p605 = pneg %p217
        %p606 = pneg %p241
        %p607 = pneg %p238
        %p608 = pneg %p262
        %p609 = pneg %p259
        %p610 = pneg %p283
        %p611 = pneg %p280
        %p612 = pneg %p313
        %p613 = pneg %p310
        %s614 = sand.u32 %s300, 1
        %s615 = scalar_lea.sflag [#allocation6], %s614
        %s616 = sand.u32 %s300, 1
        %s617 = smul.addr %s616, 64
        %s618 = scalar_lea.vmem [#allocation19], %s617
        %p619 = pneg %p341
        %p620 = pneg %p338
        %s621 = sand.u32 %s328, 1
        %s622 = scalar_lea.sflag [#allocation21], %s621
        %s623 = sand.u32 %s328, 1
        %s624 = smul.addr %s623, 128
        %s625 = scalar_lea.vmem [#allocation20], %s624
        %s626 = smul.u32 %s50, 128
        %s627 = sld [smem:[#allocation3 + %s626]]
        %s628 = smul.u32 8, %s51
        %s629 = smul.u32 %s50, 128
        %s630 = sld [smem:[#allocation3 + %s629]]
        %s631 = smul.u32 8, %s51
        %s632 = smul.u32 8, %s51
        %s633 = smul.u32 8, %s51
        %v634 = vld [vmem:[%s522] sm:$0xff]
        %v635 = vld [vmem:[%s522 + $0x8] sm:$0xff]
        %v636 = vld [vmem:[%s522 + $0x10] sm:$0xff]
        %v637 = vld [vmem:[%s522 + $0x18] sm:$0xff]
        %v638 = vld [vmem:[%s522 + $0x20] sm:$0xff]
        %v639 = vld [vmem:[%s522 + $0x28] sm:$0xff]
        %v640 = vld [vmem:[%s522 + $0x30] sm:$0xff]
        %v641 = vld [vmem:[%s522 + $0x38] sm:$0xff]
        %s642 = smul.u32 %s50, 128
        %s643 = sadd.s32 %s642, 1
        %s644 = sld [smem:[#allocation3 + %s643]]
        %s645 = smul.u32 %s644, 64
        %s646 = scalar_lea.vmem %s531, %s645 [#allocation7]
        %v647 = vld [vmem:[%s646] sm:$0xff]
        %v648 = vld [vmem:[%s646 + $0x8] sm:$0xff]
        %v649 = vld [vmem:[%s646 + $0x10] sm:$0xff]
        %v650 = vld [vmem:[%s646 + $0x18] sm:$0xff]
        %v651 = vld [vmem:[%s646 + $0x20] sm:$0xff]
        %v652 = vld [vmem:[%s646 + $0x28] sm:$0xff]
        %v653 = vld [vmem:[%s646 + $0x30] sm:$0xff]
        %v654 = vld [vmem:[%s646 + $0x38] sm:$0xff]
        %s655 = scalar_lea.vmem %s540, %s645 [#allocation9]
        %v656 = vld [vmem:[%s655] sm:$0xff]
        %v657 = vld [vmem:[%s655 + $0x8] sm:$0xff]
        %v658 = vld [vmem:[%s655 + $0x10] sm:$0xff]
        %v659 = vld [vmem:[%s655 + $0x18] sm:$0xff]
        %v660 = vld [vmem:[%s655 + $0x20] sm:$0xff]
        %v661 = vld [vmem:[%s655 + $0x28] sm:$0xff]
        %v662 = vld [vmem:[%s655 + $0x30] sm:$0xff]
        %v663 = vld [vmem:[%s655 + $0x38] sm:$0xff]
        %vm664 = vcmask 31744
        %v666 = vsel %vm664, %v634, 0
        %v669 = vsel %vm664, %v635, 0
        %v672 = vsel %vm664, %v636, 0
        %v675 = vsel %vm664, %v637, 0
        %v678 = vsel %vm664, %v638, 0
        %v681 = vsel %vm664, %v639, 0
        %v684 = vsel %vm664, %v640, 0
        %v687 = vsel %vm664, %v641, 0
        %v690 = vsel %vm664, %v647, 0
        %v693 = vsel %vm664, %v648, 0
        %v696 = vsel %vm664, %v649, 0
        %v699 = vsel %vm664, %v650, 0
        %v702 = vsel %vm664, %v651, 0
        %v705 = vsel %vm664, %v652, 0
        %v708 = vsel %vm664, %v653, 0
        %v711 = vsel %vm664, %v654, 0
        %713 = vmatprep.subr.mxu0 0.0
        %714 = vmatpush1.xpose.msra.mxu0 %v690
        %715 = vmatprep.subr.mxu0 0.0
        %716 = vmatpush1.xpose.msra.mxu0 %v693
        %717 = vmatprep.subr.mxu0 0.0
        %718 = vmatpush1.xpose.msra.mxu0 %v696
        %719 = vmatprep.subr.mxu0 0.0
        %720 = vmatpush1.xpose.msra.mxu0 %v699
        %721 = vmatprep.subr.mxu0 0.0
        %722 = vmatpush1.xpose.msra.mxu0 %v702
        %723 = vmatprep.subr.mxu0 0.0
        %724 = vmatpush1.xpose.msra.mxu0 %v705
        %725 = vmatprep.subr.mxu0 0.0
        %726 = vmatpush1.xpose.msra.mxu0 %v708
        %727 = vmatprep.subr.mxu0 0.0
        %728 = vmatpush1.xpose.msra.mxu0 %v711
        %729 = vmatprep.subr.mxu0 0.0
        %730 = vmatpush1.xpose.msra.mxu0 0.0
        %731 = vmatprep.subr.mxu0 0.0
        %732 = vmatpush1.xpose.msra.mxu0 0.0
        %733 = vmatprep.subr.mxu0 0.0
        %734 = vmatpush1.xpose.msra.mxu0 0.0
        %735 = vmatprep.subr.mxu0 0.0
        %736 = vmatpush1.xpose.msra.mxu0 0.0
        %737 = vmatprep.subr.mxu0 0.0
        %738 = vmatpush1.xpose.msra.mxu0 0.0
        %739 = vmatprep.subr.mxu0 0.0
        %740 = vmatpush1.xpose.msra.mxu0 0.0
        %741 = vmatprep.subr.mxu0 0.0
        %742 = vmatpush1.xpose.msra.mxu0 0.0
        %743 = vmatprep.subr.mxu0 0.0
        %744 = vmatpush1.xpose.msra.mxu0 0.0
        %745 = vmatprep.subr.mxu0 0.0
        %746 = vmatpush1.xpose.msra.mxu0 0.0
        %747 = vmatprep.subr.mxu0 0.0
        %748 = vmatpush1.xpose.msra.mxu0 0.0
        %749 = vmatprep.subr.mxu0 0.0
        %750 = vmatpush1.xpose.msra.mxu0 0.0
        %751 = vmatprep.subr.mxu0 0.0
        %752 = vmatpush1.xpose.msra.mxu0 0.0
        %753 = vmatprep.subr.mxu0 0.0
        %754 = vmatpush1.xpose.msra.mxu0 0.0
        %755 = vmatprep.subr.mxu0 0.0
        %756 = vmatpush1.xpose.msra.mxu0 0.0
        %757 = vmatprep.subr.mxu0 0.0
        %758 = vmatpush1.xpose.msra.mxu0 0.0
        %759 = vmatprep.subr.mxu0 0.0
        %760 = vmatpush1.xpose.msra.mxu0 0.0
        %761 = vmatprep.subr.mxu0 0.0
        %762 = vmatpush1.xpose.msra.mxu0 0.0
        %763 = vmatprep.subr.mxu0 0.0
        %764 = vmatpush1.xpose.msra.mxu0 0.0
        %765 = vmatprep.subr.mxu0 0.0
        %766 = vmatpush1.xpose.msra.mxu0 0.0
        %767 = vmatprep.subr.mxu0 0.0
        %768 = vmatpush1.xpose.msra.mxu0 0.0
        %769 = vmatprep.subr.mxu0 0.0
        %770 = vmatpush1.xpose.msra.mxu0 0.0
        %771 = vmatprep.subr.mxu0 0.0
        %772 = vmatpush1.xpose.msra.mxu0 0.0
        %773 = vmatprep.subr.mxu0 0.0
        %774 = vmatpush1.xpose.msra.mxu0 0.0
        %775 = vmatprep.subr.mxu0 0.0
        %776 = vmatpush1.xpose.msra.mxu0 0.0
        %777 = vmatprep.mubr.f32.mxu0 0.0
        %778 = vmatmul.mubr.f32.gmra.mrb[0].mxu0 %v666
        %v779 = vpop.f32.mrb[0].mxu0
        %v780 = vadd.f32 0.0, %v779
        %v781 = vpop.f32.mrb[0].mxu0
        %782 = vmatprep.mubr.f32.mxu0 0.0
        %783 = vmatmul.mubr.f32.gmra.mrb[0].mxu0 %v669
        %v784 = vpop.f32.mrb[0].mxu0
        %v785 = vadd.f32 0.0, %v784
        %v786 = vpop.f32.mrb[0].mxu0
        %787 = vmatprep.mubr.f32.mxu0 0.0
        %788 = vmatmul.mubr.f32.gmra.mrb[0].mxu0 %v672
        %v789 = vpop.f32.mrb[0].mxu0
        %v790 = vadd.f32 0.0, %v789
        %v791 = vpop.f32.mrb[0].mxu0
        %792 = vmatprep.mubr.f32.mxu0 0.0
        %793 = vmatmul.mubr.f32.gmra.mrb[0].mxu0 %v675
        %v794 = vpop.f32.mrb[0].mxu0
        %v795 = vadd.f32 0.0, %v794
        %v796 = vpop.f32.mrb[0].mxu0
        %797 = vmatprep.mubr.f32.mxu0 0.0
        %798 = vmatmul.mubr.f32.gmra.mrb[0].mxu0 %v678
        %v799 = vpop.f32.mrb[0].mxu0
        %v800 = vadd.f32 0.0, %v799
        %v801 = vpop.f32.mrb[0].mxu0
        %802 = vmatprep.mubr.f32.mxu0 0.0
        %803 = vmatmul.mubr.f32.gmra.mrb[0].mxu0 %v681
        %v804 = vpop.f32.mrb[0].mxu0
        %v805 = vadd.f32 0.0, %v804
        %v806 = vpop.f32.mrb[0].mxu0
        %807 = vmatprep.mubr.f32.mxu0 0.0
        %808 = vmatmul.mubr.f32.gmra.mrb[0].mxu0 %v684
        %v809 = vpop.f32.mrb[0].mxu0
        %v810 = vadd.f32 0.0, %v809
        %v811 = vpop.f32.mrb[0].mxu0
        %812 = vmatprep.mubr.f32.mxu0 0.0
        %813 = vmatmul.mubr.f32.gmra.mrb[0].mxu0 %v687
        %v814 = vpop.f32.mrb[0].mxu0
        %v815 = vadd.f32 0.0, %v814
        %v816 = vpop.f32.mrb[0].mxu0
        %817 = vdwg.mxu0
        %v818 = vmul.f32 %v780, 0.5
        %v819 = vmul.f32 %v785, 0.5
        %v820 = vmul.f32 %v790, 0.5
        %v821 = vmul.f32 %v795, 0.5
        %v822 = vmul.f32 %v800, 0.5
        %v823 = vmul.f32 %v805, 0.5
        %v824 = vmul.f32 %v810, 0.5
        %v825 = vmul.f32 %v815, 0.5
        %vm826 = vcmask 523264
        %v827 = vsel %vm826, %v818, -inf
        %828 = vmax.xlane.f32.xlu0 %v827
        %v829 = vpop.xlane.xlu0 %828
        %v830 = vsel %vm826, %v819, -inf
        %831 = vmax.xlane.f32.xlu0 %v830
        %v832 = vpop.xlane.xlu0 %831
        %v833 = vsel %vm826, %v820, -inf
        %834 = vmax.xlane.f32.xlu0 %v833
        %v835 = vpop.xlane.xlu0 %834
        %v836 = vsel %vm826, %v821, -inf
        %837 = vmax.xlane.f32.xlu0 %v836
        %v838 = vpop.xlane.xlu0 %837
        %v839 = vsel %vm826, %v822, -inf
        %840 = vmax.xlane.f32.xlu0 %v839
        %v841 = vpop.xlane.xlu0 %840
        %v842 = vsel %vm826, %v823, -inf
        %843 = vmax.xlane.f32.xlu0 %v842
        %v844 = vpop.xlane.xlu0 %843
        %v845 = vsel %vm826, %v824, -inf
        %846 = vmax.xlane.f32.xlu0 %v845
        %v847 = vpop.xlane.xlu0 %846
        %v848 = vsel %vm826, %v825, -inf
        %849 = vmax.xlane.f32.xlu0 %v848
        %v850 = vpop.xlane.xlu0 %849
        %v851 = vsub.f32 %v818, %v829
        %v852 = vsub.f32 %v819, %v832
        %v853 = vsub.f32 %v820, %v835
        %v854 = vsub.f32 %v821, %v838
        %v855 = vsub.f32 %v822, %v841
        %v856 = vsub.f32 %v823, %v844
        %v857 = vsub.f32 %v824, %v847
        %v858 = vsub.f32 %v825, %v850
        %v859 = vmul.f32 %v851, 1.442695
        %v860 = vpow.pop %v859
        %v861 = vmul.f32 %v852, 1.442695
        %v862 = vpow.pop %v861
        %v863 = vmul.f32 %v853, 1.442695
        %v864 = vpow.pop %v863
        %v865 = vmul.f32 %v854, 1.442695
        %v866 = vpow.pop %v865
        %v867 = vmul.f32 %v855, 1.442695
        %v868 = vpow.pop %v867
        %v869 = vmul.f32 %v856, 1.442695
        %v870 = vpow.pop %v869
        %v871 = vmul.f32 %v857, 1.442695
        %v872 = vpow.pop %v871
        %v873 = vmul.f32 %v858, 1.442695
        %v874 = vpow.pop %v873
        %v875 = vsel %vm826, %v860, 0.0
        %876 = vadd.xlane.f32.xlu0 %v875
        %v877 = vpop.xlane.xlu0 %876
        %v878 = vsel %vm826, %v862, 0.0
        %879 = vadd.xlane.f32.xlu0 %v878
        %v880 = vpop.xlane.xlu0 %879
        %v881 = vsel %vm826, %v864, 0.0
        %882 = vadd.xlane.f32.xlu0 %v881
        %v883 = vpop.xlane.xlu0 %882
        %v884 = vsel %vm826, %v866, 0.0
        %885 = vadd.xlane.f32.xlu0 %v884
        %v886 = vpop.xlane.xlu0 %885
        %v887 = vsel %vm826, %v868, 0.0
        %888 = vadd.xlane.f32.xlu0 %v887
        %v889 = vpop.xlane.xlu0 %888
        %v890 = vsel %vm826, %v870, 0.0
        %891 = vadd.xlane.f32.xlu0 %v890
        %v892 = vpop.xlane.xlu0 %891
        %v893 = vsel %vm826, %v872, 0.0
        %894 = vadd.xlane.f32.xlu0 %v893
        %v895 = vpop.xlane.xlu0 %894
        %v896 = vsel %vm826, %v874, 0.0
        %897 = vadd.xlane.f32.xlu0 %v896
        %v898 = vpop.xlane.xlu0 %897
        %v899 = vrcp.pop %v877
        %v900 = vrcp.pop %v880
        %v901 = vrcp.pop %v883
        %v902 = vrcp.pop %v886
        %v903 = vrcp.pop %v889
        %v904 = vrcp.pop %v892
        %v905 = vrcp.pop %v895
        %v906 = vrcp.pop %v898
        %v907 = vmul.f32 %v860, %v899
        %v908 = vmul.f32 %v862, %v900
        %v909 = vmul.f32 %v864, %v901
        %v910 = vmul.f32 %v866, %v902
        %v911 = vmul.f32 %v868, %v903
        %v912 = vmul.f32 %v870, %v904
        %v913 = vmul.f32 %v872, %v905
        %v914 = vmul.f32 %v874, %v906
        %915 = vst.msk [vmem:[%s625] sm:$0xff] %vm826, %v907
        %916 = vst.msk [vmem:[%s625 + $0x8] sm:$0xff] %vm826, %v908
        %917 = vst.msk [vmem:[%s625 + $0x10] sm:$0xff] %vm826, %v909
        %918 = vst.msk [vmem:[%s625 + $0x18] sm:$0xff] %vm826, %v910
        %919 = vst.msk [vmem:[%s625 + $0x20] sm:$0xff] %vm826, %v911
        %920 = vst.msk [vmem:[%s625 + $0x28] sm:$0xff] %vm826, %v912
        %921 = vst.msk [vmem:[%s625 + $0x30] sm:$0xff] %vm826, %v913
        %922 = vst.msk [vmem:[%s625 + $0x38] sm:$0xff] %vm826, %v914
        %s923 = sadd.s32 %s642, 2
        %s924 = sld [smem:[#allocation3 + %s923]]
        %s925 = smul.u32 %s924, 64
        %s926 = scalar_lea.vmem %s531, %s925 [#allocation7]
        %v927 = vld [vmem:[%s926] sm:$0xff]
        %v928 = vld [vmem:[%s926 + $0x8] sm:$0xff]
        %v929 = vld [vmem:[%s926 + $0x10] sm:$0xff]
        %v930 = vld [vmem:[%s926 + $0x18] sm:$0xff]
        %v931 = vld [vmem:[%s926 + $0x20] sm:$0xff]
        %v932 = vld [vmem:[%s926 + $0x28] sm:$0xff]
        %v933 = vld [vmem:[%s926 + $0x30] sm:$0xff]
        %v934 = vld [vmem:[%s926 + $0x38] sm:$0xff]
        %s935 = scalar_lea.vmem %s540, %s925 [#allocation9]
        %v936 = vld [vmem:[%s935] sm:$0xff]
        %v937 = vld [vmem:[%s935 + $0x8] sm:$0xff]
        %v938 = vld [vmem:[%s935 + $0x10] sm:$0xff]
        %v939 = vld [vmem:[%s935 + $0x18] sm:$0xff]
        %v940 = vld [vmem:[%s935 + $0x20] sm:$0xff]
        %v941 = vld [vmem:[%s935 + $0x28] sm:$0xff]
        %v942 = vld [vmem:[%s935 + $0x30] sm:$0xff]
        %v943 = vld [vmem:[%s935 + $0x38] sm:$0xff]
        %v945 = vsel %vm664, %v927, 0
        %v948 = vsel %vm664, %v928, 0
        %v951 = vsel %vm664, %v929, 0
        %v954 = vsel %vm664, %v930, 0
        %v957 = vsel %vm664, %v931, 0
        %v960 = vsel %vm664, %v932, 0
        %v963 = vsel %vm664, %v933, 0
        %v966 = vsel %vm664, %v934, 0
        %968 = vmatprep.subr.mxu0 0.0
        %969 = vmatpush1.xpose.msra.mxu0 %v945
        %970 = vmatprep.subr.mxu0 0.0
        %971 = vmatpush1.xpose.msra.mxu0 %v948
        %972 = vmatprep.subr.mxu0 0.0
        %973 = vmatpush1.xpose.msra.mxu0 %v951
        %974 = vmatprep.subr.mxu0 0.0
        %975 = vmatpush1.xpose.msra.mxu0 %v954
        %976 = vmatprep.subr.mxu0 0.0
        %977 = vmatpush1.xpose.msra.mxu0 %v957
        %978 = vmatprep.subr.mxu0 0.0
        %979 = vmatpush1.xpose.msra.mxu0 %v960
        %980 = vmatprep.subr.mxu0 0.0
        %981 = vmatpush1.xpose.msra.mxu0 %v963
        %982 = vmatprep.subr.mxu0 0.0
        %983 = vmatpush1.xpose.msra.mxu0 %v966
        %984 = vmatprep.subr.mxu0 0.0
        %985 = vmatpush1.xpose.msra.mxu0 0.0
        %986 = vmatprep.subr.mxu0 0.0
        %987 = vmatpush1.xpose.msra.mxu0 0.0
        %988 = vmatprep.subr.mxu0 0.0
        %989 = vmatpush1.xpose.msra.mxu0 0.0
        %990 = vmatprep.subr.mxu0 0.0
        %991 = vmatpush1.xpose.msra.mxu0 0.0
        %992 = vmatprep.subr.mxu0 0.0
        %993 = vmatpush1.xpose.msra.mxu0 0.0
        %994 = vmatprep.subr.mxu0 0.0
        %995 = vmatpush1.xpose.msra.mxu0 0.0
        %996 = vmatprep.subr.mxu0 0.0
        %997 = vmatpush1.xpose.msra.mxu0 0.0
        %998 = vmatprep.subr.mxu0 0.0
        %999 = vmatpush1.xpose.msra.mxu0 0.0
        %1000 = vmatprep.subr.mxu0 0.0
        %1001 = vmatpush1.xpose.msra.mxu0 0.0
        %1002 = vmatprep.subr.mxu0 0.0
        %1003 = vmatpush1.xpose.msra.mxu0 0.0
        %1004 = vmatprep.subr.mxu0 0.0
        %1005 = vmatpush1.xpose.msra.mxu0 0.0
        %1006 = vmatprep.subr.mxu0 0.0
        %1007 = vmatpush1.xpose.msra.mxu0 0.0
        %1008 = vmatprep.subr.mxu0 0.0
        %1009 = vmatpush1.xpose.msra.mxu0 0.0
        %1010 = vmatprep.subr.mxu0 0.0
        %1011 = vmatpush1.xpose.msra.mxu0 0.0
        %1012 = vmatprep.subr.mxu0 0.0
        %1013 = vmatpush1.xpose.msra.mxu0 0.0
        %1014 = vmatprep.subr.mxu0 0.0
        %1015 = vmatpush1.xpose.msra.mxu0 0.0
        %1016 = vmatprep.subr.mxu0 0.0
        %1017 = vmatpush1.xpose.msra.mxu0 0.0
        %1018 = vmatprep.subr.mxu0 0.0
        %1019 = vmatpush1.xpose.msra.mxu0 0.0
        %1020 = vmatprep.subr.mxu0 0.0
        %1021 = vmatpush1.xpose.msra.mxu0 0.0
        %1022 = vmatprep.subr.mxu0 0.0
        %1023 = vmatpush1.xpose.msra.mxu0 0.0
        %1024 = vmatprep.subr.mxu0 0.0
        %1025 = vmatpush1.xpose.msra.mxu0 0.0
        %1026 = vmatprep.subr.mxu0 0.0
        %1027 = vmatpush1.xpose.msra.mxu0 0.0
        %1028 = vmatprep.subr.mxu0 0.0
        %1029 = vmatpush1.xpose.msra.mxu0 0.0
        %1030 = vmatprep.subr.mxu0 0.0
        %1031 = vmatpush1.xpose.msra.mxu0 0.0
        %1032 = vmatprep.mubr.f32.mxu0 0.0
        %1033 = vmatmul.mubr.f32.gmra.mrb[0].mxu0 %v666
        %v1034 = vpop.f32.mrb[0].mxu0
        %v1035 = vadd.f32 0.0, %v1034
        %v1036 = vpop.f32.mrb[0].mxu0
        %1037 = vmatprep.mubr.f32.mxu0 0.0
        %1038 = vmatmul.mubr.f32.gmra.mrb[0].mxu0 %v669
        %v1039 = vpop.f32.mrb[0].mxu0
        %v1040 = vadd.f32 0.0, %v1039
        %v1041 = vpop.f32.mrb[0].mxu0
        %1042 = vmatprep.mubr.f32.mxu0 0.0
        %1043 = vmatmul.mubr.f32.gmra.mrb[0].mxu0 %v672
        %v1044 = vpop.f32.mrb[0].mxu0
        %v1045 = vadd.f32 0.0, %v1044
        %v1046 = vpop.f32.mrb[0].mxu0
        %1047 = vmatprep.mubr.f32.mxu0 0.0
        %1048 = vmatmul.mubr.f32.gmra.mrb[0].mxu0 %v675
        %v1049 = vpop.f32.mrb[0].mxu0
        %v1050 = vadd.f32 0.0, %v1049
        %v1051 = vpop.f32.mrb[0].mxu0
        %1052 = vmatprep.mubr.f32.mxu0 0.0
        %1053 = vmatmul.mubr.f32.gmra.mrb[0].mxu0 %v678
        %v1054 = vpop.f32.mrb[0].mxu0
        %v1055 = vadd.f32 0.0, %v1054
        %v1056 = vpop.f32.mrb[0].mxu0
        %1057 = vmatprep.mubr.f32.mxu0 0.0
        %1058 = vmatmul.mubr.f32.gmra.mrb[0].mxu0 %v681
        %v1059 = vpop.f32.mrb[0].mxu0
        %v1060 = vadd.f32 0.0, %v1059
        %v1061 = vpop.f32.mrb[0].mxu0
        %1062 = vmatprep.mubr.f32.mxu0 0.0
        %1063 = vmatmul.mubr.f32.gmra.mrb[0].mxu0 %v684
        %v1064 = vpop.f32.mrb[0].mxu0
        %v1065 = vadd.f32 0.0, %v1064
        %v1066 = vpop.f32.mrb[0].mxu0
        %1067 = vmatprep.mubr.f32.mxu0 0.0
        %1068 = vmatmul.mubr.f32.gmra.mrb[0].mxu0 %v687
        %v1069 = vpop.f32.mrb[0].mxu0
        %v1070 = vadd.f32 0.0, %v1069
        %v1071 = vpop.f32.mrb[0].mxu0
        %1072 = vdwg.mxu0
        %v1073 = vmul.f32 %v1035, 0.5
        %v1074 = vmul.f32 %v1040, 0.5
        %v1075 = vmul.f32 %v1045, 0.5
        %v1076 = vmul.f32 %v1050, 0.5
        %v1077 = vmul.f32 %v1055, 0.5
        %v1078 = vmul.f32 %v1060, 0.5
        %v1079 = vmul.f32 %v1065, 0.5
        %v1080 = vmul.f32 %v1070, 0.5
        %v1081 = vsel %vm826, %v1073, -inf
        %1082 = vmax.xlane.f32.xlu0 %v1081
        %v1083 = vpop.xlane.xlu0 %1082
        %v1084 = vsel %vm826, %v1074, -inf
        %1085 = vmax.xlane.f32.xlu0 %v1084
        %v1086 = vpop.xlane.xlu0 %1085
        %v1087 = vsel %vm826, %v1075, -inf
        %1088 = vmax.xlane.f32.xlu0 %v1087
        %v1089 = vpop.xlane.xlu0 %1088
        %v1090 = vsel %vm826, %v1076, -inf
        %1091 = vmax.xlane.f32.xlu0 %v1090
        %v1092 = vpop.xlane.xlu0 %1091
        %v1093 = vsel %vm826, %v1077, -inf
        %1094 = vmax.xlane.f32.xlu0 %v1093
        %v1095 = vpop.xlane.xlu0 %1094
        %v1096 = vsel %vm826, %v1078, -inf
        %1097 = vmax.xlane.f32.xlu0 %v1096
        %v1098 = vpop.xlane.xlu0 %1097
        %v1099 = vsel %vm826, %v1079, -inf
        %1100 = vmax.xlane.f32.xlu0 %v1099
        %v1101 = vpop.xlane.xlu0 %1100
        %v1102 = vsel %vm826, %v1080, -inf
        %1103 = vmax.xlane.f32.xlu0 %v1102
        %v1104 = vpop.xlane.xlu0 %1103
        %v1105 = vsub.f32 %v1073, %v1083
        %v1106 = vsub.f32 %v1074, %v1086
        %v1107 = vsub.f32 %v1075, %v1089
        %v1108 = vsub.f32 %v1076, %v1092
        %v1109 = vsub.f32 %v1077, %v1095
        %v1110 = vsub.f32 %v1078, %v1098
        %v1111 = vsub.f32 %v1079, %v1101
        %v1112 = vsub.f32 %v1080, %v1104
        %v1113 = vmul.f32 %v1105, 1.442695
        %v1114 = vpow.pop %v1113
        %v1115 = vmul.f32 %v1106, 1.442695
        %v1116 = vpow.pop %v1115
        %v1117 = vmul.f32 %v1107, 1.442695
        %v1118 = vpow.pop %v1117
        %v1119 = vmul.f32 %v1108, 1.442695
        %v1120 = vpow.pop %v1119
        %v1121 = vmul.f32 %v1109, 1.442695
        %v1122 = vpow.pop %v1121
        %v1123 = vmul.f32 %v1110, 1.442695
        %v1124 = vpow.pop %v1123
        %v1125 = vmul.f32 %v1111, 1.442695
        %v1126 = vpow.pop %v1125
        %v1127 = vmul.f32 %v1112, 1.442695
        %v1128 = vpow.pop %v1127
        %v1129 = vsel %vm826, %v1114, 0.0
        %1130 = vadd.xlane.f32.xlu0 %v1129
        %v1131 = vpop.xlane.xlu0 %1130
        %v1132 = vsel %vm826, %v1116, 0.0
        %1133 = vadd.xlane.f32.xlu0 %v1132
        %v1134 = vpop.xlane.xlu0 %1133
        %v1135 = vsel %vm826, %v1118, 0.0
        %1136 = vadd.xlane.f32.xlu0 %v1135
        %v1137 = vpop.xlane.xlu0 %1136
        %v1138 = vsel %vm826, %v1120, 0.0
        %1139 = vadd.xlane.f32.xlu0 %v1138
        %v1140 = vpop.xlane.xlu0 %1139
        %v1141 = vsel %vm826, %v1122, 0.0
        %1142 = vadd.xlane.f32.xlu0 %v1141
        %v1143 = vpop.xlane.xlu0 %1142
        %v1144 = vsel %vm826, %v1124, 0.0
        %1145 = vadd.xlane.f32.xlu0 %v1144
        %v1146 = vpop.xlane.xlu0 %1145
        %v1147 = vsel %vm826, %v1126, 0.0
        %1148 = vadd.xlane.f32.xlu0 %v1147
        %v1149 = vpop.xlane.xlu0 %1148
        %v1150 = vsel %vm826, %v1128, 0.0
        %1151 = vadd.xlane.f32.xlu0 %v1150
        %v1152 = vpop.xlane.xlu0 %1151
        %v1153 = vrcp.pop %v1131
        %v1154 = vrcp.pop %v1134
        %v1155 = vrcp.pop %v1137
        %v1156 = vrcp.pop %v1140
        %v1157 = vrcp.pop %v1143
        %v1158 = vrcp.pop %v1146
        %v1159 = vrcp.pop %v1149
        %v1160 = vrcp.pop %v1152
        %v1161 = vmul.f32 %v1114, %v1153
        %v1162 = vmul.f32 %v1116, %v1154
        %v1163 = vmul.f32 %v1118, %v1155
        %v1164 = vmul.f32 %v1120, %v1156
        %v1165 = vmul.f32 %v1122, %v1157
        %v1166 = vmul.f32 %v1124, %v1158
        %v1167 = vmul.f32 %v1126, %v1159
        %v1168 = vmul.f32 %v1128, %v1160
        %s1169 = scalar_lea.vmem %s625, 64 [#allocation20]
        %1170 = vst.msk [vmem:[%s1169] sm:$0xff] %vm826, %v1161
        %1171 = vst.msk [vmem:[%s1169 + $0x8] sm:$0xff] %vm826, %v1162
        %1172 = vst.msk [vmem:[%s1169 + $0x10] sm:$0xff] %vm826, %v1163
        %1173 = vst.msk [vmem:[%s1169 + $0x18] sm:$0xff] %vm826, %v1164
        %1174 = vst.msk [vmem:[%s1169 + $0x20] sm:$0xff] %vm826, %v1165
        %1175 = vst.msk [vmem:[%s1169 + $0x28] sm:$0xff] %vm826, %v1166
        %1176 = vst.msk [vmem:[%s1169 + $0x30] sm:$0xff] %vm826, %v1167
        %1177 = vst.msk [vmem:[%s1169 + $0x38] sm:$0xff] %vm826, %v1168
        %v1179 = vsel %vm826, %v1161, 0
        %v1182 = vsel %vm826, %v1162, 0
        %v1185 = vsel %vm826, %v1163, 0
        %v1188 = vsel %vm826, %v1164, 0
        %v1191 = vsel %vm826, %v1165, 0
        %v1194 = vsel %vm826, %v1166, 0
        %v1197 = vsel %vm826, %v1167, 0
        %v1200 = vsel %vm826, %v1168, 0
        %1202 = vmatprep.subr.mxu0 0.0
        %1203 = vmatpush1.msra.mxu0 %v936
        %1204 = vmatprep.subr.mxu0 0.0
        %1205 = vmatpush1.msra.mxu0 %v937
        %1206 = vmatprep.subr.mxu0 0.0
        %1207 = vmatpush1.msra.mxu0 %v938
        %1208 = vmatprep.subr.mxu0 0.0
        %1209 = vmatpush1.msra.mxu0 %v939
        %1210 = vmatprep.subr.mxu0 0.0
        %1211 = vmatpush1.msra.mxu0 %v940
        %1212 = vmatprep.subr.mxu0 0.0
        %1213 = vmatpush1.msra.mxu0 %v941
        %1214 = vmatprep.subr.mxu0 0.0
        %1215 = vmatpush1.msra.mxu0 %v942
        %1216 = vmatprep.subr.mxu0 0.0
        %1217 = vmatpush1.msra.mxu0 %v943
        %1218 = vmatprep.subr.mxu0 0.0
        %1219 = vmatpush1.msra.mxu0 0.0
        %1220 = vmatprep.subr.mxu0 0.0
        %1221 = vmatpush1.msra.mxu0 0.0
        %1222 = vmatprep.subr.mxu0 0.0
        %1223 = vmatpush1.msra.mxu0 0.0
        %1224 = vmatprep.subr.mxu0 0.0
        %1225 = vmatpush1.msra.mxu0 0.0
        %1226 = vmatprep.subr.mxu0 0.0
        %1227 = vmatpush1.msra.mxu0 0.0
        %1228 = vmatprep.subr.mxu0 0.0
        %1229 = vmatpush1.msra.mxu0 0.0
        %1230 = vmatprep.subr.mxu0 0.0
        %1231 = vmatpush1.msra.mxu0 0.0
        %1232 = vmatprep.subr.mxu0 0.0
        %1233 = vmatpush1.msra.mxu0 0.0
        %1234 = vmatprep.subr.mxu0 0.0
        %1235 = vmatpush1.msra.mxu0 0.0
        %1236 = vmatprep.subr.mxu0 0.0
        %1237 = vmatpush1.msra.mxu0 0.0
        %1238 = vmatprep.subr.mxu0 0.0
        %1239 = vmatpush1.msra.mxu0 0.0
        %1240 = vmatprep.subr.mxu0 0.0
        %1241 = vmatpush1.msra.mxu0 0.0
        %1242 = vmatprep.subr.mxu0 0.0
        %1243 = vmatpush1.msra.mxu0 0.0
        %1244 = vmatprep.subr.mxu0 0.0
        %1245 = vmatpush1.msra.mxu0 0.0
        %1246 = vmatprep.subr.mxu0 0.0
        %1247 = vmatpush1.msra.mxu0 0.0
        %1248 = vmatprep.subr.mxu0 0.0
        %1249 = vmatpush1.msra.mxu0 0.0
        %1250 = vmatprep.subr.mxu0 0.0
        %1251 = vmatpush1.msra.mxu0 0.0
        %1252 = vmatprep.subr.mxu0 0.0
        %1253 = vmatpush1.msra.mxu0 0.0
        %1254 = vmatprep.subr.mxu0 0.0
        %1255 = vmatpush1.msra.mxu0 0.0
        %1256 = vmatprep.subr.mxu0 0.0
        %1257 = vmatpush1.msra.mxu0 0.0
        %1258 = vmatprep.subr.mxu0 0.0
        %1259 = vmatpush1.msra.mxu0 0.0
        %1260 = vmatprep.subr.mxu0 0.0
        %1261 = vmatpush1.msra.mxu0 0.0
        %1262 = vmatprep.subr.mxu0 0.0
        %1263 = vmatpush1.msra.mxu0 0.0
        %1264 = vmatprep.subr.mxu0 0.0
        %1265 = vmatpush1.msra.mxu0 0.0
        %1266 = vmatprep.mubr.f32.mxu0 0.0
        %1267 = vmatmul.mubr.f32.gmra.mrb[0].mxu0 %v1179
        %v1268 = vpop.f32.mrb[0].mxu0
        %v1269 = vadd.f32 0.0, %v1268
        %v1270 = vpop.f32.mrb[0].mxu0
        %1271 = vmatprep.mubr.f32.mxu0 0.0
        %1272 = vmatmul.mubr.f32.gmra.mrb[0].mxu0 %v1182
        %v1273 = vpop.f32.mrb[0].mxu0
        %v1274 = vadd.f32 0.0, %v1273
        %v1275 = vpop.f32.mrb[0].mxu0
        %1276 = vmatprep.mubr.f32.mxu0 0.0
        %1277 = vmatmul.mubr.f32.gmra.mrb[0].mxu0 %v1185
        %v1278 = vpop.f32.mrb[0].mxu0
        %v1279 = vadd.f32 0.0, %v1278
        %v1280 = vpop.f32.mrb[0].mxu0
        %1281 = vmatprep.mubr.f32.mxu0 0.0
        %1282 = vmatmul.mubr.f32.gmra.mrb[0].mxu0 %v1188
        %v1283 = vpop.f32.mrb[0].mxu0
        %v1284 = vadd.f32 0.0, %v1283
        %v1285 = vpop.f32.mrb[0].mxu0
        %1286 = vmatprep.mubr.f32.mxu0 0.0
        %1287 = vmatmul.mubr.f32.gmra.mrb[0].mxu0 %v1191
        %v1288 = vpop.f32.mrb[0].mxu0
        %v1289 = vadd.f32 0.0, %v1288
        %v1290 = vpop.f32.mrb[0].mxu0
        %1291 = vmatprep.mubr.f32.mxu0 0.0
        %1292 = vmatmul.mubr.f32.gmra.mrb[0].mxu0 %v1194
        %v1293 = vpop.f32.mrb[0].mxu0
        %v1294 = vadd.f32 0.0, %v1293
        %v1295 = vpop.f32.mrb[0].mxu0
        %1296 = vmatprep.mubr.f32.mxu0 0.0
        %1297 = vmatmul.mubr.f32.gmra.mrb[0].mxu0 %v1197
        %v1298 = vpop.f32.mrb[0].mxu0
        %v1299 = vadd.f32 0.0, %v1298
        %v1300 = vpop.f32.mrb[0].mxu0
        %1301 = vmatprep.mubr.f32.mxu0 0.0
        %1302 = vmatmul.mubr.f32.gmra.mrb[0].mxu0 %v1200
        %v1303 = vpop.f32.mrb[0].mxu0
        %v1304 = vadd.f32 0.0, %v1303
        %v1305 = vpop.f32.mrb[0].mxu0
        %1306 = vdwg.mxu0
        %v1308 = vsel %vm826, %v907, 0
        %v1311 = vsel %vm826, %v908, 0
        %v1314 = vsel %vm826, %v909, 0
        %v1317 = vsel %vm826, %v910, 0
        %v1320 = vsel %vm826, %v911, 0
        %v1323 = vsel %vm826, %v912, 0
        %v1326 = vsel %vm826, %v913, 0
        %v1329 = vsel %vm826, %v914, 0
        %1331 = vmatprep.subr.mxu0 0.0
        %1332 = vmatpush1.msra.mxu0 %v656
        %1333 = vmatprep.subr.mxu0 0.0
        %1334 = vmatpush1.msra.mxu0 %v657
        %1335 = vmatprep.subr.mxu0 0.0
        %1336 = vmatpush1.msra.mxu0 %v658
        %1337 = vmatprep.subr.mxu0 0.0
        %1338 = vmatpush1.msra.mxu0 %v659
        %1339 = vmatprep.subr.mxu0 0.0
        %1340 = vmatpush1.msra.mxu0 %v660
        %1341 = vmatprep.subr.mxu0 0.0
        %1342 = vmatpush1.msra.mxu0 %v661
        %1343 = vmatprep.subr.mxu0 0.0
        %1344 = vmatpush1.msra.mxu0 %v662
        %1345 = vmatprep.subr.mxu0 0.0
        %1346 = vmatpush1.msra.mxu0 %v663
        %1347 = vmatprep.subr.mxu0 0.0
        %1348 = vmatpush1.msra.mxu0 0.0
        %1349 = vmatprep.subr.mxu0 0.0
        %1350 = vmatpush1.msra.mxu0 0.0
        %1351 = vmatprep.subr.mxu0 0.0
        %1352 = vmatpush1.msra.mxu0 0.0
        %1353 = vmatprep.subr.mxu0 0.0
        %1354 = vmatpush1.msra.mxu0 0.0
        %1355 = vmatprep.subr.mxu0 0.0
        %1356 = vmatpush1.msra.mxu0 0.0
        %1357 = vmatprep.subr.mxu0 0.0
        %1358 = vmatpush1.msra.mxu0 0.0
        %1359 = vmatprep.subr.mxu0 0.0
        %1360 = vmatpush1.msra.mxu0 0.0
        %1361 = vmatprep.subr.mxu0 0.0
        %1362 = vmatpush1.msra.mxu0 0.0
        %1363 = vmatprep.subr.mxu0 0.0
        %1364 = vmatpush1.msra.mxu0 0.0
        %1365 = vmatprep.subr.mxu0 0.0
        %1366 = vmatpush1.msra.mxu0 0.0
        %1367 = vmatprep.subr.mxu0 0.0
        %1368 = vmatpush1.msra.mxu0 0.0
        %1369 = vmatprep.subr.mxu0 0.0
        %1370 = vmatpush1.msra.mxu0 0.0
        %1371 = vmatprep.subr.mxu0 0.0
        %1372 = vmatpush1.msra.mxu0 0.0
        %1373 = vmatprep.subr.mxu0 0.0
        %1374 = vmatpush1.msra.mxu0 0.0
        %1375 = vmatprep.subr.mxu0 0.0
        %1376 = vmatpush1.msra.mxu0 0.0
        %1377 = vmatprep.subr.mxu0 0.0
        %1378 = vmatpush1.msra.mxu0 0.0
        %1379 = vmatprep.subr.mxu0 0.0
        %1380 = vmatpush1.msra.mxu0 0.0
        %1381 = vmatprep.subr.mxu0 0.0
        %1382 = vmatpush1.msra.mxu0 0.0
        %1383 = vmatprep.subr.mxu0 0.0
        %1384 = vmatpush1.msra.mxu0 0.0
        %1385 = vmatprep.subr.mxu0 0.0
        %1386 = vmatpush1.msra.mxu0 0.0
        %1387 = vmatprep.subr.mxu0 0.0
        %1388 = vmatpush1.msra.mxu0 0.0
        %1389 = vmatprep.subr.mxu0 0.0
        %1390 = vmatpush1.msra.mxu0 0.0
        %1391 = vmatprep.subr.mxu0 0.0
        %1392 = vmatpush1.msra.mxu0 0.0
        %1393 = vmatprep.subr.mxu0 0.0
        %1394 = vmatpush1.msra.mxu0 0.0
        %1395 = vmatprep.mubr.f32.mxu0 0.0
        %1396 = vmatmul.mubr.f32.gmra.mrb[0].mxu0 %v1308
        %v1397 = vpop.f32.mrb[0].mxu0
        %v1398 = vadd.f32 %v1269, %v1397
        %v1399 = vpop.f32.mrb[0].mxu0
        %1400 = vmatprep.mubr.f32.mxu0 0.0
        %1401 = vmatmul.mubr.f32.gmra.mrb[0].mxu0 %v1311
        %v1402 = vpop.f32.mrb[0].mxu0
        %v1403 = vadd.f32 %v1274, %v1402
        %v1404 = vpop.f32.mrb[0].mxu0
        %1405 = vmatprep.mubr.f32.mxu0 0.0
        %1406 = vmatmul.mubr.f32.gmra.mrb[0].mxu0 %v1314
        %v1407 = vpop.f32.mrb[0].mxu0
        %v1408 = vadd.f32 %v1279, %v1407
        %v1409 = vpop.f32.mrb[0].mxu0
        %1410 = vmatprep.mubr.f32.mxu0 0.0
        %1411 = vmatmul.mubr.f32.gmra.mrb[0].mxu0 %v1317
        %v1412 = vpop.f32.mrb[0].mxu0
        %v1413 = vadd.f32 %v1284, %v1412
        %v1414 = vpop.f32.mrb[0].mxu0
        %1415 = vmatprep.mubr.f32.mxu0 0.0
        %1416 = vmatmul.mubr.f32.gmra.mrb[0].mxu0 %v1320
        %v1417 = vpop.f32.mrb[0].mxu0
        %v1418 = vadd.f32 %v1289, %v1417
        %v1419 = vpop.f32.mrb[0].mxu0
        %1420 = vmatprep.mubr.f32.mxu0 0.0
        %1421 = vmatmul.mubr.f32.gmra.mrb[0].mxu0 %v1323
        %v1422 = vpop.f32.mrb[0].mxu0
        %v1423 = vadd.f32 %v1294, %v1422
        %v1424 = vpop.f32.mrb[0].mxu0
        %1425 = vmatprep.mubr.f32.mxu0 0.0
        %1426 = vmatmul.mubr.f32.gmra.mrb[0].mxu0 %v1326
        %v1427 = vpop.f32.mrb[0].mxu0
        %v1428 = vadd.f32 %v1299, %v1427
        %v1429 = vpop.f32.mrb[0].mxu0
        %1430 = vmatprep.mubr.f32.mxu0 0.0
        %1431 = vmatmul.mubr.f32.gmra.mrb[0].mxu0 %v1329
        %v1432 = vpop.f32.mrb[0].mxu0
        %v1433 = vadd.f32 %v1304, %v1432
        %v1434 = vpop.f32.mrb[0].mxu0
        %1435 = vdwg.mxu0
        %v1436 = vld [vmem:[#allocation12] sm:$0xf]
        %v1437 = vld [vmem:[#allocation13] sm:$0x1]
        %v1438 = vmul.f32 %v1437, 2.0
        %v1440 = vlaneseq
        %v1441 = vshrl.u32 %v1440, 7
        %v1442 = vsub.s32 0, %v1441
        %v1443 = vrot.slane %v1438, %v1442
        %v1446 = vsel %vm664, %v1398, 0
        %v1449 = vsel %vm664, %v1403, 0
        %v1452 = vsel %vm664, %v1408, 0
        %v1455 = vsel %vm664, %v1413, 0
        %v1458 = vsel %vm664, %v1418, 0
        %v1461 = vsel %vm664, %v1423, 0
        %v1464 = vsel %vm664, %v1428, 0
        %v1467 = vsel %vm664, %v1433, 0
        %vm1469 = vcmask 1043456
        %v1471 = vsel %vm1469, %v1436, 0
        %1473 = vmatprep.subr.mxu0 0.0
        %1474 = vmatpush1.msra.mxu0 %v1471
        %1475 = vmatprep.subr.mxu0 0.0
        %1476 = vmatpush1.msra.mxu0 0.0
        %1477 = vmatprep.subr.mxu0 0.0
        %1478 = vmatpush1.msra.mxu0 0.0
        %1479 = vmatprep.subr.mxu0 0.0
        %1480 = vmatpush1.msra.mxu0 0.0
        %1481 = vmatprep.subr.mxu0 0.0
        %1482 = vmatpush1.msra.mxu0 0.0
        %1483 = vmatprep.subr.mxu0 0.0
        %1484 = vmatpush1.msra.mxu0 0.0
        %1485 = vmatprep.subr.mxu0 0.0
        %1486 = vmatpush1.msra.mxu0 0.0
        %1487 = vmatprep.subr.mxu0 0.0
        %1488 = vmatpush1.msra.mxu0 0.0
        %1489 = vmatprep.subr.mxu0 0.0
        %1490 = vmatpush1.msra.mxu0 0.0
        %1491 = vmatprep.subr.mxu0 0.0
        %1492 = vmatpush1.msra.mxu0 0.0
        %1493 = vmatprep.subr.mxu0 0.0
        %1494 = vmatpush1.msra.mxu0 0.0
        %1495 = vmatprep.subr.mxu0 0.0
        %1496 = vmatpush1.msra.mxu0 0.0
        %1497 = vmatprep.subr.mxu0 0.0
        %1498 = vmatpush1.msra.mxu0 0.0
        %1499 = vmatprep.subr.mxu0 0.0
        %1500 = vmatpush1.msra.mxu0 0.0
        %1501 = vmatprep.subr.mxu0 0.0
        %1502 = vmatpush1.msra.mxu0 0.0
        %1503 = vmatprep.subr.mxu0 0.0
        %1504 = vmatpush1.msra.mxu0 0.0
        %1505 = vmatprep.subr.mxu0 0.0
        %1506 = vmatpush1.msra.mxu0 0.0
        %1507 = vmatprep.subr.mxu0 0.0
        %1508 = vmatpush1.msra.mxu0 0.0
        %1509 = vmatprep.subr.mxu0 0.0
        %1510 = vmatpush1.msra.mxu0 0.0
        %1511 = vmatprep.subr.mxu0 0.0
        %1512 = vmatpush1.msra.mxu0 0.0
        %1513 = vmatprep.subr.mxu0 0.0
        %1514 = vmatpush1.msra.mxu0 0.0
        %1515 = vmatprep.subr.mxu0 0.0
        %1516 = vmatpush1.msra.mxu0 0.0
        %1517 = vmatprep.subr.mxu0 0.0
        %1518 = vmatpush1.msra.mxu0 0.0
        %1519 = vmatprep.subr.mxu0 0.0
        %1520 = vmatpush1.msra.mxu0 0.0
        %1521 = vmatprep.subr.mxu0 0.0
        %1522 = vmatpush1.msra.mxu0 0.0
        %1523 = vmatprep.subr.mxu0 0.0
        %1524 = vmatpush1.msra.mxu0 0.0
        %1525 = vmatprep.subr.mxu0 0.0
        %1526 = vmatpush1.msra.mxu0 0.0
        %1527 = vmatprep.subr.mxu0 0.0
        %1528 = vmatpush1.msra.mxu0 0.0
        %1529 = vmatprep.subr.mxu0 0.0
        %1530 = vmatpush1.msra.mxu0 0.0
        %1531 = vmatprep.subr.mxu0 0.0
        %1532 = vmatpush1.msra.mxu0 0.0
        %1533 = vmatprep.subr.mxu0 0.0
        %1534 = vmatpush1.msra.mxu0 0.0
        %1535 = vmatprep.subr.mxu0 0.0
        %1536 = vmatpush1.msra.mxu0 0.0
        %1537 = vmatprep.mubr.f32.mxu0 0.0
        %1538 = vmatmul.mubr.f32.gmra.mrb[0].mxu0 %v1446
        %v1539 = vpop.f32.mrb[0].mxu0
        %v1540 = vadd.f32 %v1443, %v1539
        %v1541 = vpop.f32.mrb[0].mxu0
        %1542 = vmatprep.mubr.f32.mxu0 0.0
        %1543 = vmatmul.mubr.f32.gmra.mrb[0].mxu0 %v1449
        %v1544 = vpop.f32.mrb[0].mxu0
        %v1545 = vadd.f32 %v1443, %v1544
        %v1546 = vpop.f32.mrb[0].mxu0
        %1547 = vmatprep.mubr.f32.mxu0 0.0
        %1548 = vmatmul.mubr.f32.gmra.mrb[0].mxu0 %v1452
        %v1549 = vpop.f32.mrb[0].mxu0
        %v1550 = vadd.f32 %v1443, %v1549
        %v1551 = vpop.f32.mrb[0].mxu0
        %1552 = vmatprep.mubr.f32.mxu0 0.0
        %1553 = vmatmul.mubr.f32.gmra.mrb[0].mxu0 %v1455
        %v1554 = vpop.f32.mrb[0].mxu0
        %v1555 = vadd.f32 %v1443, %v1554
        %v1556 = vpop.f32.mrb[0].mxu0
        %1557 = vmatprep.mubr.f32.mxu0 0.0
        %1558 = vmatmul.mubr.f32.gmra.mrb[0].mxu0 %v1458
        %v1559 = vpop.f32.mrb[0].mxu0
        %v1560 = vadd.f32 %v1443, %v1559
        %v1561 = vpop.f32.mrb[0].mxu0
        %1562 = vmatprep.mubr.f32.mxu0 0.0
        %1563 = vmatmul.mubr.f32.gmra.mrb[0].mxu0 %v1461
        %v1564 = vpop.f32.mrb[0].mxu0
        %v1565 = vadd.f32 %v1443, %v1564
        %v1566 = vpop.f32.mrb[0].mxu0
        %1567 = vmatprep.mubr.f32.mxu0 0.0
        %1568 = vmatmul.mubr.f32.gmra.mrb[0].mxu0 %v1464
        %v1569 = vpop.f32.mrb[0].mxu0
        %v1570 = vadd.f32 %v1443, %v1569
        %v1571 = vpop.f32.mrb[0].mxu0
        %1572 = vmatprep.mubr.f32.mxu0 0.0
        %1573 = vmatmul.mubr.f32.gmra.mrb[0].mxu0 %v1467
        %v1574 = vpop.f32.mrb[0].mxu0
        %v1575 = vadd.f32 %v1443, %v1574
        %v1576 = vpop.f32.mrb[0].mxu0
        %1577 = vdwg.mxu0
        %v1578 = vld [vmem:[%s549] sm:$0xff]
        %v1579 = vld [vmem:[%s549 + $0x8] sm:$0xff]
        %v1580 = vld [vmem:[%s549 + $0x10] sm:$0xff]
        %v1581 = vld [vmem:[%s549 + $0x18] sm:$0xff]
        %v1582 = vld [vmem:[%s549 + $0x20] sm:$0xff]
        %v1583 = vld [vmem:[%s549 + $0x28] sm:$0xff]
        %v1584 = vld [vmem:[%s549 + $0x30] sm:$0xff]
        %v1585 = vld [vmem:[%s549 + $0x38] sm:$0xff]
        %v1586 = vld [vmem:[#allocation15] sm:$0xff]
        %vm1587 = vcmask 64512
        %v1589 = vsel %vm1587, %v1578, 0
        %v1592 = vsel %vm1587, %v1579, 0
        %v1595 = vsel %vm1587, %v1580, 0
        %v1598 = vsel %vm1587, %v1581, 0
        %v1601 = vsel %vm1587, %v1582, 0
        %v1604 = vsel %vm1587, %v1583, 0
        %v1607 = vsel %vm1587, %v1584, 0
        %v1610 = vsel %vm1587, %v1585, 0
        %1612 = vmatprep.subr.mxu0 0.0
        %1613 = vmatpush1.msra.mxu0 %v1586
        %1614 = vmatprep.subr.mxu0 0.0
        %1615 = vmatpush1.msra.mxu0 0.0
        %1616 = vmatprep.subr.mxu0 0.0
        %1617 = vmatpush1.msra.mxu0 0.0
        %1618 = vmatprep.subr.mxu0 0.0
        %1619 = vmatpush1.msra.mxu0 0.0
        %1620 = vmatprep.subr.mxu0 0.0
        %1621 = vmatpush1.msra.mxu0 0.0
        %1622 = vmatprep.subr.mxu0 0.0
        %1623 = vmatpush1.msra.mxu0 0.0
        %1624 = vmatprep.subr.mxu0 0.0
        %1625 = vmatpush1.msra.mxu0 0.0
        %1626 = vmatprep.subr.mxu0 0.0
        %1627 = vmatpush1.msra.mxu0 0.0
        %1628 = vmatprep.subr.mxu0 0.0
        %1629 = vmatpush1.msra.mxu0 0.0
        %1630 = vmatprep.subr.mxu0 0.0
        %1631 = vmatpush1.msra.mxu0 0.0
        %1632 = vmatprep.subr.mxu0 0.0
        %1633 = vmatpush1.msra.mxu0 0.0
        %1634 = vmatprep.subr.mxu0 0.0
        %1635 = vmatpush1.msra.mxu0 0.0
        %1636 = vmatprep.subr.mxu0 0.0
        %1637 = vmatpush1.msra.mxu0 0.0
        %1638 = vmatprep.subr.mxu0 0.0
        %1639 = vmatpush1.msra.mxu0 0.0
        %1640 = vmatprep.subr.mxu0 0.0
        %1641 = vmatpush1.msra.mxu0 0.0
        %1642 = vmatprep.subr.mxu0 0.0
        %1643 = vmatpush1.msra.mxu0 0.0
        %1644 = vmatprep.subr.mxu0 0.0
        %1645 = vmatpush1.msra.mxu0 0.0
        %1646 = vmatprep.subr.mxu0 0.0
        %1647 = vmatpush1.msra.mxu0 0.0
        %1648 = vmatprep.subr.mxu0 0.0
        %1649 = vmatpush1.msra.mxu0 0.0
        %1650 = vmatprep.subr.mxu0 0.0
        %1651 = vmatpush1.msra.mxu0 0.0
        %1652 = vmatprep.subr.mxu0 0.0
        %1653 = vmatpush1.msra.mxu0 0.0
        %1654 = vmatprep.subr.mxu0 0.0
        %1655 = vmatpush1.msra.mxu0 0.0
        %1656 = vmatprep.subr.mxu0 0.0
        %1657 = vmatpush1.msra.mxu0 0.0
        %1658 = vmatprep.subr.mxu0 0.0
        %1659 = vmatpush1.msra.mxu0 0.0
        %1660 = vmatprep.subr.mxu0 0.0
        %1661 = vmatpush1.msra.mxu0 0.0
        %1662 = vmatprep.subr.mxu0 0.0
        %1663 = vmatpush1.msra.mxu0 0.0
        %1664 = vmatprep.subr.mxu0 0.0
        %1665 = vmatpush1.msra.mxu0 0.0
        %1666 = vmatprep.subr.mxu0 0.0
        %1667 = vmatpush1.msra.mxu0 0.0
        %1668 = vmatprep.subr.mxu0 0.0
        %1669 = vmatpush1.msra.mxu0 0.0
        %1670 = vmatprep.subr.mxu0 0.0
        %1671 = vmatpush1.msra.mxu0 0.0
        %1672 = vmatprep.subr.mxu0 0.0
        %1673 = vmatpush1.msra.mxu0 0.0
        %1674 = vmatprep.subr.mxu0 0.0
        %1675 = vmatpush1.msra.mxu0 0.0
        %1676 = vmatprep.mubr.f32.mxu0 0.0
        %1677 = vmatmul.mubr.f32.gmra.mrb[0].mxu0 %v1589
        %v1678 = vpop.f32.mrb[0].mxu0
        %v1679 = vadd.f32 0.0, %v1678
        %v1680 = vpop.f32.mrb[0].mxu0
        %1681 = vmatprep.mubr.f32.mxu0 0.0
        %1682 = vmatmul.mubr.f32.gmra.mrb[0].mxu0 %v1592
        %v1683 = vpop.f32.mrb[0].mxu0
        %v1684 = vadd.f32 0.0, %v1683
        %v1685 = vpop.f32.mrb[0].mxu0
        %1686 = vmatprep.mubr.f32.mxu0 0.0
        %1687 = vmatmul.mubr.f32.gmra.mrb[0].mxu0 %v1595
        %v1688 = vpop.f32.mrb[0].mxu0
        %v1689 = vadd.f32 0.0, %v1688
        %v1690 = vpop.f32.mrb[0].mxu0
        %1691 = vmatprep.mubr.f32.mxu0 0.0
        %1692 = vmatmul.mubr.f32.gmra.mrb[0].mxu0 %v1598
        %v1693 = vpop.f32.mrb[0].mxu0
        %v1694 = vadd.f32 0.0, %v1693
        %v1695 = vpop.f32.mrb[0].mxu0
        %1696 = vmatprep.mubr.f32.mxu0 0.0
        %1697 = vmatmul.mubr.f32.gmra.mrb[0].mxu0 %v1601
        %v1698 = vpop.f32.mrb[0].mxu0
        %v1699 = vadd.f32 0.0, %v1698
        %v1700 = vpop.f32.mrb[0].mxu0
        %1701 = vmatprep.mubr.f32.mxu0 0.0
        %1702 = vmatmul.mubr.f32.gmra.mrb[0].mxu0 %v1604
        %v1703 = vpop.f32.mrb[0].mxu0
        %v1704 = vadd.f32 0.0, %v1703
        %v1705 = vpop.f32.mrb[0].mxu0
        %1706 = vmatprep.mubr.f32.mxu0 0.0
        %1707 = vmatmul.mubr.f32.gmra.mrb[0].mxu0 %v1607
        %v1708 = vpop.f32.mrb[0].mxu0
        %v1709 = vadd.f32 0.0, %v1708
        %v1710 = vpop.f32.mrb[0].mxu0
        %1711 = vmatprep.mubr.f32.mxu0 0.0
        %1712 = vmatmul.mubr.f32.gmra.mrb[0].mxu0 %v1610
        %v1713 = vpop.f32.mrb[0].mxu0
        %v1714 = vadd.f32 0.0, %v1713
        %v1715 = vpop.f32.mrb[0].mxu0
        %1716 = vdwg.mxu0
        %v1717 = vadd.f32 %v1578, %v1679
        %v1718 = vadd.f32 %v1579, %v1684
        %v1719 = vadd.f32 %v1580, %v1689
        %v1720 = vadd.f32 %v1581, %v1694
        %v1721 = vadd.f32 %v1582, %v1699
        %v1722 = vadd.f32 %v1583, %v1704
        %v1723 = vadd.f32 %v1584, %v1709
        %v1724 = vadd.f32 %v1585, %v1714
        %v1725 = vld [vmem:[#allocation16] sm:$0xff]
        %v1727 = vsel %vm1587, %v1540, 0
        %v1730 = vsel %vm1587, %v1545, 0
        %v1733 = vsel %vm1587, %v1550, 0
        %v1736 = vsel %vm1587, %v1555, 0
        %v1739 = vsel %vm1587, %v1560, 0
        %v1742 = vsel %vm1587, %v1565, 0
        %v1745 = vsel %vm1587, %v1570, 0
        %v1748 = vsel %vm1587, %v1575, 0
        %1750 = vmatprep.subr.mxu0 0.0
        %1751 = vmatpush1.msra.mxu0 %v1725
        %1752 = vmatprep.subr.mxu0 0.0
        %1753 = vmatpush1.msra.mxu0 0.0
        %1754 = vmatprep.subr.mxu0 0.0
        %1755 = vmatpush1.msra.mxu0 0.0
        %1756 = vmatprep.subr.mxu0 0.0
        %1757 = vmatpush1.msra.mxu0 0.0
        %1758 = vmatprep.subr.mxu0 0.0
        %1759 = vmatpush1.msra.mxu0 0.0
        %1760 = vmatprep.subr.mxu0 0.0
        %1761 = vmatpush1.msra.mxu0 0.0
        %1762 = vmatprep.subr.mxu0 0.0
        %1763 = vmatpush1.msra.mxu0 0.0
        %1764 = vmatprep.subr.mxu0 0.0
        %1765 = vmatpush1.msra.mxu0 0.0
        %1766 = vmatprep.subr.mxu0 0.0
        %1767 = vmatpush1.msra.mxu0 0.0
        %1768 = vmatprep.subr.mxu0 0.0
        %1769 = vmatpush1.msra.mxu0 0.0
        %1770 = vmatprep.subr.mxu0 0.0
        %1771 = vmatpush1.msra.mxu0 0.0
        %1772 = vmatprep.subr.mxu0 0.0
        %1773 = vmatpush1.msra.mxu0 0.0
        %1774 = vmatprep.subr.mxu0 0.0
        %1775 = vmatpush1.msra.mxu0 0.0
        %1776 = vmatprep.subr.mxu0 0.0
        %1777 = vmatpush1.msra.mxu0 0.0
        %1778 = vmatprep.subr.mxu0 0.0
        %1779 = vmatpush1.msra.mxu0 0.0
        %1780 = vmatprep.subr.mxu0 0.0
        %1781 = vmatpush1.msra.mxu0 0.0
        %1782 = vmatprep.subr.mxu0 0.0
        %1783 = vmatpush1.msra.mxu0 0.0
        %1784 = vmatprep.subr.mxu0 0.0
        %1785 = vmatpush1.msra.mxu0 0.0
        %1786 = vmatprep.subr.mxu0 0.0
        %1787 = vmatpush1.msra.mxu0 0.0
        %1788 = vmatprep.subr.mxu0 0.0
        %1789 = vmatpush1.msra.mxu0 0.0
        %1790 = vmatprep.subr.mxu0 0.0
        %1791 = vmatpush1.msra.mxu0 0.0
        %1792 = vmatprep.subr.mxu0 0.0
        %1793 = vmatpush1.msra.mxu0 0.0
        %1794 = vmatprep.subr.mxu0 0.0
        %1795 = vmatpush1.msra.mxu0 0.0
        %1796 = vmatprep.subr.mxu0 0.0
        %1797 = vmatpush1.msra.mxu0 0.0
        %1798 = vmatprep.subr.mxu0 0.0
        %1799 = vmatpush1.msra.mxu0 0.0
        %1800 = vmatprep.subr.mxu0 0.0
        %1801 = vmatpush1.msra.mxu0 0.0
        %1802 = vmatprep.subr.mxu0 0.0
        %1803 = vmatpush1.msra.mxu0 0.0
        %1804 = vmatprep.subr.mxu0 0.0
        %1805 = vmatpush1.msra.mxu0 0.0
        %1806 = vmatprep.subr.mxu0 0.0
        %1807 = vmatpush1.msra.mxu0 0.0
        %1808 = vmatprep.subr.mxu0 0.0
        %1809 = vmatpush1.msra.mxu0 0.0
        %1810 = vmatprep.subr.mxu0 0.0
        %1811 = vmatpush1.msra.mxu0 0.0
        %1812 = vmatprep.subr.mxu0 0.0
        %1813 = vmatpush1.msra.mxu0 0.0
        %1814 = vmatprep.mubr.f32.mxu0 0.0
        %1815 = vmatmul.mubr.f32.gmra.mrb[0].mxu0 %v1727
        %v1816 = vpop.f32.mrb[0].mxu0
        %v1817 = vadd.f32 0.0, %v1816
        %v1818 = vpop.f32.mrb[0].mxu0
        %1819 = vmatprep.mubr.f32.mxu0 0.0
        %1820 = vmatmul.mubr.f32.gmra.mrb[0].mxu0 %v1730
        %v1821 = vpop.f32.mrb[0].mxu0
        %v1822 = vadd.f32 0.0, %v1821
        %v1823 = vpop.f32.mrb[0].mxu0
        %1824 = vmatprep.mubr.f32.mxu0 0.0
        %1825 = vmatmul.mubr.f32.gmra.mrb[0].mxu0 %v1733
        %v1826 = vpop.f32.mrb[0].mxu0
        %v1827 = vadd.f32 0.0, %v1826
        %v1828 = vpop.f32.mrb[0].mxu0
        %1829 = vmatprep.mubr.f32.mxu0 0.0
        %1830 = vmatmul.mubr.f32.gmra.mrb[0].mxu0 %v1736
        %v1831 = vpop.f32.mrb[0].mxu0
        %v1832 = vadd.f32 0.0, %v1831
        %v1833 = vpop.f32.mrb[0].mxu0
        %1834 = vmatprep.mubr.f32.mxu0 0.0
        %1835 = vmatmul.mubr.f32.gmra.mrb[0].mxu0 %v1739
        %v1836 = vpop.f32.mrb[0].mxu0
        %v1837 = vadd.f32 0.0, %v1836
        %v1838 = vpop.f32.mrb[0].mxu0
        %1839 = vmatprep.mubr.f32.mxu0 0.0
        %1840 = vmatmul.mubr.f32.gmra.mrb[0].mxu0 %v1742
        %v1841 = vpop.f32.mrb[0].mxu0
        %v1842 = vadd.f32 0.0, %v1841
        %v1843 = vpop.f32.mrb[0].mxu0
        %1844 = vmatprep.mubr.f32.mxu0 0.0
        %1845 = vmatmul.mubr.f32.gmra.mrb[0].mxu0 %v1745
        %v1846 = vpop.f32.mrb[0].mxu0
        %v1847 = vadd.f32 0.0, %v1846
        %v1848 = vpop.f32.mrb[0].mxu0
        %1849 = vmatprep.mubr.f32.mxu0 0.0
        %1850 = vmatmul.mubr.f32.gmra.mrb[0].mxu0 %v1748
        %v1851 = vpop.f32.mrb[0].mxu0
        %v1852 = vadd.f32 0.0, %v1851
        %v1853 = vpop.f32.mrb[0].mxu0
        %1854 = vdwg.mxu0
        %v1855 = vadd.f32 %v1717, %v1817
        %v1856 = vadd.f32 %v1718, %v1822
        %v1857 = vadd.f32 %v1719, %v1827
        %v1858 = vadd.f32 %v1720, %v1832
        %v1859 = vadd.f32 %v1721, %v1837
        %v1860 = vadd.f32 %v1722, %v1842
        %v1861 = vadd.f32 %v1723, %v1847
        %v1862 = vadd.f32 %v1724, %v1852
        %v1863 = vld [vmem:[#allocation18] sm:$0x1]
        %v1865 = vlaneseq
        %v1866 = vshrl.u32 %v1865, 7
        %v1867 = vsub.s32 0, %v1866
        %v1868 = vrot.slane %v1863, %v1867
        %v1870 = vadd.f32 %v1855, %v1868
        %v1871 = vadd.f32 %v1856, %v1868
        %v1872 = vadd.f32 %v1857, %v1868
        %v1873 = vadd.f32 %v1858, %v1868
        %v1874 = vadd.f32 %v1859, %v1868
        %v1875 = vadd.f32 %v1860, %v1868
        %v1876 = vadd.f32 %v1861, %v1868
        %v1877 = vadd.f32 %v1862, %v1868
        %1878 = vst.msk [vmem:[%s618] sm:$0xff] %vm1587, %v1870
        %1879 = vst.msk [vmem:[%s618 + $0x8] sm:$0xff] %vm1587, %v1871
        %1880 = vst.msk [vmem:[%s618 + $0x10] sm:$0xff] %vm1587, %v1872
        %1881 = vst.msk [vmem:[%s618 + $0x18] sm:$0xff] %vm1587, %v1873
        %1882 = vst.msk [vmem:[%s618 + $0x20] sm:$0xff] %vm1587, %v1874
        %1883 = vst.msk [vmem:[%s618 + $0x28] sm:$0xff] %vm1587, %v1875
        %1884 = vst.msk [vmem:[%s618 + $0x30] sm:$0xff] %vm1587, %v1876
        %1885 = vst.msk [vmem:[%s618 + $0x38] sm:$0xff] %vm1587, %v1877
        %s1886 = sand.u32 %s300, 1
        %s1887 = scalar_lea.sflag [#allocation6], %s1886
        %s1888 = sand.u32 %s300, 1
        %s1889 = smul.addr %s1888, 64
        %s1890 = scalar_lea.vmem [#allocation19], %s1889
        %s1891 = sand.u32 %s328, 1
        %s1892 = scalar_lea.sflag [#allocation21], %s1891
        %s1893 = sand.u32 %s328, 1
        %s1894 = smul.addr %s1893, 128
        %s1895 = scalar_lea.vmem [#allocation20], %s1894
        // Predicated region
        $region93: #{_lambda_.4} parent=55 // pred_check
          %p1896 = pneg %p310
        $region94: #{_lambda_.4} parent=55 // pred_check_branch
          %1898 = sbr.rel (%p1896) target = $region96
        $region95: #{_lambda_.4} parent=55 // pred_region
          %s1899 = smul.u32 8, %s51
          %s1901 = ssub.s32 1024, 1024
          %1902 = vsyncadd %s1887, %s1901
          %s1903 = smul.addr %s50, 8
          %s1904 = sadd.s32 %s1899, %s1903
          %s1905 = smul.addr %s49, 8
          %s1906 = sadd.s32 %s1904, %s1905
          %s1907 = smul.addr %s1906, 128
          %s1908 = scalar_lea.hbm %s10, %s1907
          %s1909 = sshll.u32 %s1890, 4
          %s1910 = int_to_ptr.vmem [resolvable:$true] %s1909
          %1915 = dma.vmem_to_hbm [thread:$0]  %s1910, 1024, %s1908, %s1887, 128, 128, 8
        $region96: #{_lambda_.4} parent=55 // pred_fallthru
          _
        // Predicated region
        $region97: #{_lambda_.4} parent=55 // pred_check
          %p1916 = pneg %p338
        $region98: #{_lambda_.4} parent=55 // pred_check_branch
          %1918 = sbr.rel (%p1916) target = $region100
        $region99: #{_lambda_.4} parent=55 // pred_region
          %s1919 = smul.u32 8, %s51
          %s1921 = ssub.s32 2048, 2048
          %1922 = vsyncadd %s1892, %s1921
          %s1923 = smul.addr %s49, 16
          %s1924 = sadd.s32 %s1919, %s1923
          %s1925 = smul.addr %s1924, 128
          %s1926 = scalar_lea.hbm %s11, %s1925
          %s1927 = sshll.u32 %s1895, 4
          %s1928 = int_to_ptr.vmem [resolvable:$true] %s1927
          %1933 = dma.vmem_to_hbm [thread:$0]  %s1928, 2048, %s1926, %s1892, 128, 128, 8
        $region100: #{_lambda_.4} parent=55 // pred_fallthru
          _
      $region56: #{_lambda_.4} parent=5 // pred_fallthru
        _
      %p1934 = scmp.le.s32.totalorder 2, %s39
      // Predicated region
      $region101: #{_lambda_.4} parent=5 // pred_check
        %p1935 = pneg %p1934
      $region102: #{_lambda_.4} parent=5 // pred_check_branch
        %1937 = sbr.rel (%p1935) target = $region104
      $region103: #{_lambda_.4} parent=5 // pred_region
        %s1938 = ssub.s32 %s39, 2
        // Predicated region
        $region105: #{_lambda_.4} parent=103 // pred_check
          %p1939 = pneg %p316
        $region106: #{_lambda_.4} parent=103 // pred_check_branch
          %1941 = sbr.rel (%p1939) target = $region108
        $region107: #{_lambda_.4} parent=103 // pred_region
          %s1942 = sand.u32 %s301, 1
          %s1943 = scalar_lea.sflag [#allocation6], %s1942
          %s1944 = sand.u32 %s301, 1
          %s1945 = smul.addr %s1944, 64
          %s1946 = scalar_lea.vmem [#allocation19], %s1945
          %1947 = dma.done %s1943, 1024
        $region108: #{_lambda_.4} parent=103 // pred_fallthru
          _
        // Predicated region
        $region109: #{_lambda_.4} parent=103 // pred_check
          %p1948 = pneg %p344
        $region110: #{_lambda_.4} parent=103 // pred_check_branch
          %1950 = sbr.rel (%p1948) target = $region112
        $region111: #{_lambda_.4} parent=103 // pred_region
          %s1951 = sand.u32 %s329, 1
          %s1952 = scalar_lea.sflag [#allocation21], %s1951
          %s1953 = sand.u32 %s329, 1
          %s1954 = smul.addr %s1953, 128
          %s1955 = scalar_lea.vmem [#allocation20], %s1954
          %1956 = dma.done %s1952, 2048
        $region112: #{_lambda_.4} parent=103 // pred_fallthru
          _
      $region104: #{_lambda_.4} parent=5 // pred_fallthru
        _
    $region6: #{_lambda_.4} parent=1 // loop_footer
      %s43 = sadd.s32 1, %s39
    $region7: #{_lambda_.4} parent=1 // loop_footer_branch
      %38 = sbr.rel target = $region3
    $region8: #{_lambda_.4} parent=1 // loop_exit
      _
    %1957 = vsyncpa [#allocation5], 1
    %s1958 = scalar_lea.sflag [#allocation5], 1
    %1959 = vsyncpa %s1958, 1
    %1960 = vsyncpa [#allocation8], 1
    %s1961 = scalar_lea.sflag [#allocation8], 1
    %1962 = vsyncpa %s1961, 1
    %1963 = vsyncpa [#allocation11], 1
    %s1964 = scalar_lea.sflag [#allocation11], 1
    %1965 = vsyncpa %s1964, 1
    %1966 = vsyncpa [#allocation14], 1
    %1967 = vsyncpa [#allocation17], 1
    %1968 = vsyncpa [#allocation6], 1
    %s1969 = scalar_lea.sflag [#allocation6], 1
    %1970 = vsyncpa %s1969, 1
    %1971 = vsyncpa [#allocation21], 1
    %s1972 = scalar_lea.sflag [#allocation21], 1
    %1973 = vsyncpa %s1972, 1

</llo_original>
